<compile_context>
chip_gen: v7x
topology: tpu7x:2x2x1
jax: 0.10.0
libtpu: 0.0.40
codegen_flags: <defaults>
</compile_context>

<pallas_src>
import jax
import jax.numpy as jnp
import numpy as np
from jax.experimental import pallas as pl
from jax.experimental.pallas import tpu as pltpu

# ----- small, module-consistent sizes -----
OUTPUT_DIM = 32      # vocab size V
EMBED_DIM = 32       # E
HIDDEN_DIM = 32      # H
MAX_LENGTH = 16      # L (attention span)
ENC_LEN = 8          # encoder outputs length before padding
DECODE_STEPS = 8     # T decode timesteps fused into one kernel invocation

PACK_DIM = 128       # lane-dense packed output row: [logp(V) | h(H) | c(H) | attn_w(L) | pad]


def fused_attn_decoder_kernel(
    emb_ref,                             # (T, E)  embedded decoder inputs (gathered in wrapper)
    h0_ref, c0_ref,                      # (1, H)  initial LSTM state
    enc_ref,                             # (L, H)  padded encoder outputs
    w_attn_ref, b_attn_ref,              # (E+H, L), (1, L)
    w_comb_ref, b_comb_ref,              # (E+H, H), (1, H)
    w_lstm_ref, b_lstm_ref,              # (2H, 4H), (1, 4H)   gates packed [i, f, g, o]
    w_out_ref, b_out_ref,                # (H, V), (1, V)
    out_ref,                             # (T, PACK_DIM) packed output slab (VMEM)
):
    H = HIDDEN_DIM
    V = OUTPUT_DIM
    L = MAX_LENGTH
    T = out_ref.shape[0]

    # Zero the packed slab once (covers the pad lanes); single full-tile store.
    out_ref[...] = jnp.zeros_like(out_ref)

    # Weights / encoder outputs are loaded once and stay in vregs for the whole decode.
    enc = enc_ref[...]
    w_attn = w_attn_ref[...]
    b_attn = b_attn_ref[...]
    w_comb = w_comb_ref[...]
    b_comb = b_comb_ref[...]
    w_lstm = w_lstm_ref[...]
    b_lstm = b_lstm_ref[...]

    h = h0_ref[...]                      # (1, H) recurrent state carried in vregs
    c = c0_ref[...]

    # TODO(synk): training-mode dropout (p=0.1) on the embedding is not modeled;
    #             eval-mode identity only.
    for t in range(T):                   # fully unrolled decode loop (T is small & static)
        emb = emb_ref[t:t + 1, :]                                   # (1, E), static row

        # --- attention weights: softmax(attn([embedded, hidden])) -- single concat-matmul
        eh = jnp.concatenate([emb, h], axis=-1)                     # (1, E+H)
        a_logits = (
            jnp.dot(eh, w_attn, preferred_element_type=jnp.float32) + b_attn
        )                                                           # (1, L)
        a_m = jnp.max(a_logits, axis=-1, keepdims=True)
        a_e = jnp.exp(a_logits - a_m)
        attn_w = a_e / jnp.sum(a_e, axis=-1, keepdims=True)         # exact divide

        # --- attn_applied = attn_w @ encoder_outputs ---
        attn_applied = jnp.dot(attn_w, enc, preferred_element_type=jnp.float32)  # (1, H)

        # --- attn_combine + relu -- single concat-matmul ---
        ea = jnp.concatenate([emb, attn_applied], axis=-1)          # (1, E+H)
        x = jnp.maximum(
            jnp.dot(ea, w_comb, preferred_element_type=jnp.float32) + b_comb, 0.0
        )                                                           # (1, H)

        # --- single-step LSTM (PyTorch gate order i, f, g, o) -- single concat-matmul ---
        xh = jnp.concatenate([x, h], axis=-1)                       # (1, 2H)
        gates = (
            jnp.dot(xh, w_lstm, preferred_element_type=jnp.float32) + b_lstm
        )                                                           # (1, 4H) = (1, 128)
        sig = jax.nn.sigmoid(gates)      # one full-vreg EUP pass (i, f, o taken from it)
        th = jnp.tanh(gates)             # one full-vreg EUP pass (g taken from it)
        i_g = sig[:, 0 * H:1 * H]
        f_g = sig[:, 1 * H:2 * H]
        g_g = th[:, 2 * H:3 * H]
        o_g = sig[:, 3 * H:4 * H]
        c = f_g * c + i_g * g_g
        h = o_g * jnp.tanh(c)

        # Stash per-step state & attention into row t of the packed slab.
        out_ref[t:t + 1, V:V + H] = h
        out_ref[t:t + 1, V + H:V + 2 * H] = c
        out_ref[t:t + 1, V + 2 * H:V + 2 * H + L] = attn_w

    # --- batched output projection + log_softmax over all T steps at once ---
    h_all = out_ref[:, V:V + H]                                     # (T, H)
    logits = (
        jnp.dot(h_all, w_out_ref[...], preferred_element_type=jnp.float32) + b_out_ref[...]
    )                                                               # (T, V)
    lm = jnp.max(logits, axis=-1, keepdims=True)
    sh = logits - lm
    logp = sh - jnp.log(jnp.sum(jnp.exp(sh), axis=-1, keepdims=True))
    out_ref[:, 0:V] = logp


def attn_decoder_decode(token_ids, h0, c0, encoder_outputs, params):
    """Runs the entire decode (all timesteps) in one single-invocation pallas_call.

    token_ids: (T,) int32 decoder input tokens; h0, c0: (1, H);
    encoder_outputs: (enc_len, H).
    Returns (log_probs (T, V), (h_T, c_T), attn_weights (T, L)).
    """
    T = token_ids.shape[0]
    V, E, H, L = OUTPUT_DIM, EMBED_DIM, HIDDEN_DIM, MAX_LENGTH

    # Pad encoder outputs once; constant across the whole decode.
    enc_pad = jnp.pad(encoder_outputs, ((0, L - encoder_outputs.shape[0]), (0, 0)))
    # Embedding gather in the wrapper (trivial T-row XLA gather); dropout = identity (eval).
    emb = params["embedding"][token_ids]                            # (T, E)

    vmem = pl.BlockSpec(memory_space=pltpu.MemorySpace.VMEM)

    packed = pl.pallas_call(
        fused_attn_decoder_kernel,
        out_shape=jax.ShapeDtypeStruct((T, PACK_DIM), jnp.float32),
        in_specs=[vmem] * 12,
        out_specs=vmem,
    )(
        emb, h0, c0, enc_pad,
        params["w_attn"], params["b_attn"],
        params["w_comb"], params["b_comb"],
        params["w_lstm"], params["b_lstm"],
        params["w_out"], params["b_out"],
    )

    logp = packed[:, :V]
    h_T = packed[-1:, V:V + H]
    c_T = packed[-1:, V + H:V + 2 * H]
    attn_w = packed[:, V + 2 * H:V + 2 * H + L]
    return logp, (h_T, c_T), attn_w


attn_decoder_decode_jit = jax.jit(attn_decoder_decode)


def reference_decode(token_ids, h0, c0, encoder_outputs, params):
    """Pure-JAX reference of the same decode loop (for correctness checking)."""
    H, L = HIDDEN_DIM, MAX_LENGTH
    enc_pad = jnp.pad(encoder_outputs, ((0, L - encoder_outputs.shape[0]), (0, 0)))
    h, c = h0, c0
    logps, attns = [], []
    for tok in np.asarray(token_ids):
        emb = params["embedding"][int(tok)][None, :]
        eh = jnp.concatenate([emb, h], axis=-1)
        attn_w = jax.nn.softmax(eh @ params["w_attn"] + params["b_attn"], axis=-1)
        attn_applied = attn_w @ enc_pad
        x = jax.nn.relu(
            jnp.concatenate([emb, attn_applied], axis=-1) @ params["w_comb"] + params["b_comb"])
        gates = jnp.concatenate([x, h], axis=-1) @ params["w_lstm"] + params["b_lstm"]
        i_g = jax.nn.sigmoid(gates[:, :H])
        f_g = jax.nn.sigmoid(gates[:, H:2 * H])
        g_g = jnp.tanh(gates[:, 2 * H:3 * H])
        o_g = jax.nn.sigmoid(gates[:, 3 * H:])
        c = f_g * c + i_g * g_g
        h = o_g * jnp.tanh(c)
        logits = h @ params["w_out"] + params["b_out"]
        logps.append(jax.nn.log_softmax(logits, axis=-1))
        attns.append(attn_w)
    return jnp.concatenate(logps, axis=0), (h, c), jnp.concatenate(attns, axis=0)


def init_params(key):
    """Weights stored pre-concatenated / bias-folded (mathematically identical to the
    split nn.Linear / nn.LSTM parameters of the PyTorch module)."""
    ks = jax.random.split(key, 9)
    V, E, H, L = OUTPUT_DIM, EMBED_DIM, HIDDEN_DIM, MAX_LENGTH
    s_lin = float(1.0 / np.sqrt(H + E))
    s_lstm = float(1.0 / np.sqrt(H))
    s_out = float(1.0 / np.sqrt(H))
    u = lambda k, shape, s: jax.random.uniform(k, shape, jnp.float32, -s, s)
    return {
        # nn.Embedding(V, E): N(0, 1)
        "embedding": jax.random.normal(ks[0], (V, E), jnp.float32),
        # attn: Linear(E+H -> L); rows ordered [embedded | hidden] (torch.cat order)
        "w_attn": u(ks[1], (E + H, L), s_lin),
        "b_attn": u(ks[2], (1, L), s_lin),
        # attn_combine: Linear(E+H -> H); rows ordered [embedded | attn_applied]
        "w_comb": u(ks[3], (E + H, H), s_lin),
        "b_comb": u(ks[4], (1, H), s_lin),
        # LSTM: [W_ih ; W_hh] stacked (2H, 4H), gates packed [i, f, g, o]; b = b_ih + b_hh
        "w_lstm": u(ks[5], (2 * H, 4 * H), s_lstm),
        "b_lstm": u(ks[6], (1, 4 * H), s_lstm),
        # out: Linear(H -> V)
        "w_out": u(ks[7], (H, V), s_out),
        "b_out": u(ks[8], (1, V), s_out),
    }


if __name__ == "__main__":
    key = jax.random.PRNGKey(0)
    k_par, k_h, k_c, k_enc, k_tok = jax.random.split(key, 5)
    params = init_params(k_par)

    token_ids = jax.random.randint(k_tok, (DECODE_STEPS,), 0, OUTPUT_DIM, dtype=jnp.int32)
    h0 = jax.random.normal(k_h, (1, HIDDEN_DIM), jnp.float32) * 0.1
    c0 = jax.random.normal(k_c, (1, HIDDEN_DIM), jnp.float32) * 0.1
    encoder_outputs = jax.random.normal(k_enc, (ENC_LEN, HIDDEN_DIM), jnp.float32)

    logp, (h_T, c_T), attn_w = attn_decoder_decode_jit(
        token_ids, h0, c0, encoder_outputs, params)
    jax.block_until_ready((logp, h_T, c_T, attn_w))

    # correctness check against the pure-JAX reference (exact softmax divide in-kernel)
    r_logp, (r_h, r_c), r_aw = reference_decode(token_ids, h0, c0, encoder_outputs, params)
    assert np.allclose(np.asarray(logp), np.asarray(r_logp), atol=1e-4, rtol=1e-4)
    assert np.allclose(np.asarray(h_T), np.asarray(r_h), atol=1e-4, rtol=1e-4)
    assert np.allclose(np.asarray(c_T), np.asarray(r_c), atol=1e-4, rtol=1e-4)
    assert np.allclose(np.asarray(attn_w), np.asarray(r_aw), atol=1e-4, rtol=1e-4)

    print("KERNEL_OK")
</pallas_src>

<mosaic_0001>
module attributes {stable_mosaic.version = 11 : i64} {
  func.func @fused_attn_decoder_kernel(%arg0: memref<8x32xf32, #tpu.memory_space<vmem>>, %arg1: memref<1x32xf32, #tpu.memory_space<vmem>>, %arg2: memref<1x32xf32, #tpu.memory_space<vmem>>, %arg3: memref<16x32xf32, #tpu.memory_space<vmem>>, %arg4: memref<64x16xf32, #tpu.memory_space<vmem>>, %arg5: memref<1x16xf32, #tpu.memory_space<vmem>>, %arg6: memref<64x32xf32, #tpu.memory_space<vmem>>, %arg7: memref<1x32xf32, #tpu.memory_space<vmem>>, %arg8: memref<64x128xf32, #tpu.memory_space<vmem>>, %arg9: memref<1x128xf32, #tpu.memory_space<vmem>>, %arg10: memref<32x32xf32, #tpu.memory_space<vmem>>, %arg11: memref<1x32xf32, #tpu.memory_space<vmem>>, %arg12: memref<8x128xf32, #tpu.memory_space<vmem>>) attributes {dimension_semantics = [], scalar_prefetch = 0 : i64, scratch_operands = 0 : i64, tpu.core_type = #tpu.core_type<tc>} {
    %cst = arith.constant 0.000000e+00 : f32
    %0 = vector.broadcast %cst : f32 to vector<8x128xf32>
    %c0 = arith.constant 0 : index
    %c0_0 = arith.constant 0 : index
    %1 = vector.load %arg12[%c0, %c0_0] : memref<8x128xf32, #tpu.memory_space<vmem>>, vector<8x128xf32>
    tpu.vector_store %arg12[%c0, %c0_0], %0 {strides = array<i32>} : memref<8x128xf32, #tpu.memory_space<vmem>>, vector<8x128xf32>,
    %c0_1 = arith.constant 0 : index
    %c0_2 = arith.constant 0 : index
    %2 = vector.load %arg3[%c0_1, %c0_2] : memref<16x32xf32, #tpu.memory_space<vmem>>, vector<16x32xf32>
    %c0_3 = arith.constant 0 : index
    %c0_4 = arith.constant 0 : index
    %3 = vector.load %arg4[%c0_3, %c0_4] : memref<64x16xf32, #tpu.memory_space<vmem>>, vector<64x16xf32>
    %c0_5 = arith.constant 0 : index
    %c0_6 = arith.constant 0 : index
    %4 = vector.load %arg5[%c0_5, %c0_6] : memref<1x16xf32, #tpu.memory_space<vmem>>, vector<1x16xf32>
    %c0_7 = arith.constant 0 : index
    %c0_8 = arith.constant 0 : index
    %5 = vector.load %arg6[%c0_7, %c0_8] : memref<64x32xf32, #tpu.memory_space<vmem>>, vector<64x32xf32>
    %c0_9 = arith.constant 0 : index
    %c0_10 = arith.constant 0 : index
    %6 = vector.load %arg7[%c0_9, %c0_10] : memref<1x32xf32, #tpu.memory_space<vmem>>, vector<1x32xf32>
    %c0_11 = arith.constant 0 : index
    %c0_12 = arith.constant 0 : index
    %7 = vector.load %arg8[%c0_11, %c0_12] : memref<64x128xf32, #tpu.memory_space<vmem>>, vector<64x128xf32>
    %c0_13 = arith.constant 0 : index
    %c0_14 = arith.constant 0 : index
    %8 = vector.load %arg9[%c0_13, %c0_14] : memref<1x128xf32, #tpu.memory_space<vmem>>, vector<1x128xf32>
    %c0_15 = arith.constant 0 : index
    %c0_16 = arith.constant 0 : index
    %9 = vector.load %arg1[%c0_15, %c0_16] : memref<1x32xf32, #tpu.memory_space<vmem>>, vector<1x32xf32>
    %c0_17 = arith.constant 0 : index
    %c0_18 = arith.constant 0 : index
    %10 = vector.load %arg2[%c0_17, %c0_18] : memref<1x32xf32, #tpu.memory_space<vmem>>, vector<1x32xf32>
    %c0_19 = arith.constant 0 : index
    %c0_20 = arith.constant 0 : index
    %11 = vector.load %arg0[%c0_19, %c0_20] : memref<8x32xf32, #tpu.memory_space<vmem>>, vector<1x32xf32>
    %12 = tpu.concatenate %11, %9 in 1 : vector<1x32xf32>, vector<1x32xf32> -> vector<1x64xf32>
    %cst_21 = arith.constant dense<0.000000e+00> : vector<1x16xf32>
    %13 = tpu.matmul %12, %3, %cst_21 {dimension_numbers = #tpu.dot_dimension_numbers<[1], [0], [0], [1], [0, 0, 1, 1], [], []>} : vector<1x64xf32>, vector<64x16xf32>, vector<1x16xf32> -> vector<1x16xf32>
    %14 = arith.addf %13, %4 : vector<1x16xf32>
    %cst_22 = arith.constant dense<0xFF800000> : vector<1xf32>
    %15 = vector.multi_reduction <maximumf>, %14, %cst_22 [1] : vector<1x16xf32> to vector<1xf32>
    %16 = vector.shape_cast %15 : vector<1xf32> to vector<1x1xf32>
    %17 = vector.broadcast %16 : vector<1x1xf32> to vector<1x16xf32>
    %18 = arith.subf %14, %17 : vector<1x16xf32>
    %19 = math.exp %18 : vector<1x16xf32>
    %cst_23 = arith.constant dense<0.000000e+00> : vector<1xf32>
    %20 = vector.multi_reduction <add>, %19, %cst_23 [1] : vector<1x16xf32> to vector<1xf32>
    %21 = vector.shape_cast %20 : vector<1xf32> to vector<1x1xf32>
    %22 = vector.broadcast %21 : vector<1x1xf32> to vector<1x16xf32>
    %23 = arith.divf %19, %22 : vector<1x16xf32>
    %cst_24 = arith.constant dense<0.000000e+00> : vector<1x32xf32>
    %24 = tpu.matmul %23, %2, %cst_24 {dimension_numbers = #tpu.dot_dimension_numbers<[1], [0], [0], [1], [0, 0, 1, 1], [], []>} : vector<1x16xf32>, vector<16x32xf32>, vector<1x32xf32> -> vector<1x32xf32>
    %25 = tpu.concatenate %11, %24 in 1 : vector<1x32xf32>, vector<1x32xf32> -> vector<1x64xf32>
    %cst_25 = arith.constant dense<0.000000e+00> : vector<1x32xf32>
    %26 = tpu.matmul %25, %5, %cst_25 {dimension_numbers = #tpu.dot_dimension_numbers<[1], [0], [0], [1], [0, 0, 1, 1], [], []>} : vector<1x64xf32>, vector<64x32xf32>, vector<1x32xf32> -> vector<1x32xf32>
    %27 = arith.addf %26, %6 : vector<1x32xf32>
    %cst_26 = arith.constant 0.000000e+00 : f32
    %28 = vector.broadcast %cst_26 : f32 to vector<1x32xf32>
    %29 = arith.maximumf %27, %28 : vector<1x32xf32>
    %30 = tpu.concatenate %29, %9 in 1 : vector<1x32xf32>, vector<1x32xf32> -> vector<1x64xf32>
    %cst_27 = arith.constant dense<0.000000e+00> : vector<1x128xf32>
    %31 = tpu.matmul %30, %7, %cst_27 {dimension_numbers = #tpu.dot_dimension_numbers<[1], [0], [0], [1], [0, 0, 1, 1], [], []>} : vector<1x64xf32>, vector<64x128xf32>, vector<1x128xf32> -> vector<1x128xf32>
    %32 = arith.addf %31, %8 : vector<1x128xf32>
    %33 = arith.negf %32 : vector<1x128xf32>
    %34 = math.exp %33 : vector<1x128xf32>
    %cst_28 = arith.constant 1.000000e+00 : f32
    %35 = vector.broadcast %cst_28 : f32 to vector<1x128xf32>
    %36 = arith.addf %35, %34 : vector<1x128xf32>
    %37 = arith.divf %35, %36 : vector<1x128xf32>
    %38 = math.tanh %32 : vector<1x128xf32>
    %39 = vector.extract_strided_slice %37 {offsets = [0, 0], sizes = [1, 32], strides = [1, 1]} : vector<1x128xf32> to vector<1x32xf32>
    %40 = vector.extract_strided_slice %37 {offsets = [0, 32], sizes = [1, 32], strides = [1, 1]} : vector<1x128xf32> to vector<1x32xf32>
    %41 = vector.extract_strided_slice %38 {offsets = [0, 64], sizes = [1, 32], strides = [1, 1]} : vector<1x128xf32> to vector<1x32xf32>
    %42 = vector.extract_strided_slice %37 {offsets = [0, 96], sizes = [1, 32], strides = [1, 1]} : vector<1x128xf32> to vector<1x32xf32>
    %43 = arith.mulf %40, %10 : vector<1x32xf32>
    %44 = arith.mulf %39, %41 : vector<1x32xf32>
    %45 = arith.addf %43, %44 : vector<1x32xf32>
    %46 = math.tanh %45 : vector<1x32xf32>
    %47 = arith.mulf %42, %46 : vector<1x32xf32>
    %c0_29 = arith.constant 0 : index
    %c32 = arith.constant 32 : index
    %48 = vector.load %arg12[%c0_29, %c32] : memref<8x128xf32, #tpu.memory_space<vmem>>, vector<1x32xf32>
    tpu.vector_store %arg12[%c0_29, %c32], %47 {strides = array<i32>} : memref<8x128xf32, #tpu.memory_space<vmem>>, vector<1x32xf32>,
    %c0_30 = arith.constant 0 : index
    %c64 = arith.constant 64 : index
    %49 = vector.load %arg12[%c0_30, %c64] : memref<8x128xf32, #tpu.memory_space<vmem>>, vector<1x32xf32>
    tpu.vector_store %arg12[%c0_30, %c64], %45 {strides = array<i32>} : memref<8x128xf32, #tpu.memory_space<vmem>>, vector<1x32xf32>,
    %c0_31 = arith.constant 0 : index
    %c96 = arith.constant 96 : index
    %50 = vector.load %arg12[%c0_31, %c96] : memref<8x128xf32, #tpu.memory_space<vmem>>, vector<1x16xf32>
    tpu.vector_store %arg12[%c0_31, %c96], %23 {strides = array<i32>} : memref<8x128xf32, #tpu.memory_space<vmem>>, vector<1x16xf32>,
    %c1 = arith.constant 1 : index
    %c0_32 = arith.constant 0 : index
    %51 = vector.load %arg0[%c1, %c0_32] : memref<8x32xf32, #tpu.memory_space<vmem>>, vector<1x32xf32>
    %52 = tpu.concatenate %51, %47 in 1 : vector<1x32xf32>, vector<1x32xf32> -> vector<1x64xf32>
    %cst_33 = arith.constant dense<0.000000e+00> : vector<1x16xf32>
    %53 = tpu.matmul %52, %3, %cst_33 {dimension_numbers = #tpu.dot_dimension_numbers<[1], [0], [0], [1], [0, 0, 1, 1], [], []>} : vector<1x64xf32>, vector<64x16xf32>, vector<1x16xf32> -> vector<1x16xf32>
    %54 = arith.addf %53, %4 : vector<1x16xf32>
    %cst_34 = arith.constant dense<0xFF800000> : vector<1xf32>
    %55 = vector.multi_reduction <maximumf>, %54, %cst_34 [1] : vector<1x16xf32> to vector<1xf32>
    %56 = vector.shape_cast %55 : vector<1xf32> to vector<1x1xf32>
    %57 = vector.broadcast %56 : vector<1x1xf32> to vector<1x16xf32>
    %58 = arith.subf %54, %57 : vector<1x16xf32>
    %59 = math.exp %58 : vector<1x16xf32>
    %cst_35 = arith.constant dense<0.000000e+00> : vector<1xf32>
    %60 = vector.multi_reduction <add>, %59, %cst_35 [1] : vector<1x16xf32> to vector<1xf32>
    %61 = vector.shape_cast %60 : vector<1xf32> to vector<1x1xf32>
    %62 = vector.broadcast %61 : vector<1x1xf32> to vector<1x16xf32>
    %63 = arith.divf %59, %62 : vector<1x16xf32>
    %cst_36 = arith.constant dense<0.000000e+00> : vector<1x32xf32>
    %64 = tpu.matmul %63, %2, %cst_36 {dimension_numbers = #tpu.dot_dimension_numbers<[1], [0], [0], [1], [0, 0, 1, 1], [], []>} : vector<1x16xf32>, vector<16x32xf32>, vector<1x32xf32> -> vector<1x32xf32>
    %65 = tpu.concatenate %51, %64 in 1 : vector<1x32xf32>, vector<1x32xf32> -> vector<1x64xf32>
    %cst_37 = arith.constant dense<0.000000e+00> : vector<1x32xf32>
    %66 = tpu.matmul %65, %5, %cst_37 {dimension_numbers = #tpu.dot_dimension_numbers<[1], [0], [0], [1], [0, 0, 1, 1], [], []>} : vector<1x64xf32>, vector<64x32xf32>, vector<1x32xf32> -> vector<1x32xf32>
    %67 = arith.addf %66, %6 : vector<1x32xf32>
    %cst_38 = arith.constant 0.000000e+00 : f32
    %68 = vector.broadcast %cst_38 : f32 to vector<1x32xf32>
    %69 = arith.maximumf %67, %68 : vector<1x32xf32>
    %70 = tpu.concatenate %69, %47 in 1 : vector<1x32xf32>, vector<1x32xf32> -> vector<1x64xf32>
    %cst_39 = arith.constant dense<0.000000e+00> : vector<1x128xf32>
    %71 = tpu.matmul %70, %7, %cst_39 {dimension_numbers = #tpu.dot_dimension_numbers<[1], [0], [0], [1], [0, 0, 1, 1], [], []>} : vector<1x64xf32>, vector<64x128xf32>, vector<1x128xf32> -> vector<1x128xf32>
    %72 = arith.addf %71, %8 : vector<1x128xf32>
    %73 = arith.negf %72 : vector<1x128xf32>
    %74 = math.exp %73 : vector<1x128xf32>
    %cst_40 = arith.constant 1.000000e+00 : f32
    %75 = vector.broadcast %cst_40 : f32 to vector<1x128xf32>
    %76 = arith.addf %75, %74 : vector<1x128xf32>
    %77 = arith.divf %75, %76 : vector<1x128xf32>
    %78 = math.tanh %72 : vector<1x128xf32>
    %79 = vector.extract_strided_slice %77 {offsets = [0, 0], sizes = [1, 32], strides = [1, 1]} : vector<1x128xf32> to vector<1x32xf32>
    %80 = vector.extract_strided_slice %77 {offsets = [0, 32], sizes = [1, 32], strides = [1, 1]} : vector<1x128xf32> to vector<1x32xf32>
    %81 = vector.extract_strided_slice %78 {offsets = [0, 64], sizes = [1, 32], strides = [1, 1]} : vector<1x128xf32> to vector<1x32xf32>
    %82 = vector.extract_strided_slice %77 {offsets = [0, 96], sizes = [1, 32], strides = [1, 1]} : vector<1x128xf32> to vector<1x32xf32>
    %83 = arith.mulf %80, %45 : vector<1x32xf32>
    %84 = arith.mulf %79, %81 : vector<1x32xf32>
    %85 = arith.addf %83, %84 : vector<1x32xf32>
    %86 = math.tanh %85 : vector<1x32xf32>
    %87 = arith.mulf %82, %86 : vector<1x32xf32>
    %c1_41 = arith.constant 1 : index
    %c32_42 = arith.constant 32 : index
    %88 = vector.load %arg12[%c1_41, %c32_42] : memref<8x128xf32, #tpu.memory_space<vmem>>, vector<1x32xf32>
    tpu.vector_store %arg12[%c1_41, %c32_42], %87 {strides = array<i32>} : memref<8x128xf32, #tpu.memory_space<vmem>>, vector<1x32xf32>,
    %c1_43 = arith.constant 1 : index
    %c64_44 = arith.constant 64 : index
    %89 = vector.load %arg12[%c1_43, %c64_44] : memref<8x128xf32, #tpu.memory_space<vmem>>, vector<1x32xf32>
    tpu.vector_store %arg12[%c1_43, %c64_44], %85 {strides = array<i32>} : memref<8x128xf32, #tpu.memory_space<vmem>>, vector<1x32xf32>,
    %c1_45 = arith.constant 1 : index
    %c96_46 = arith.constant 96 : index
    %90 = vector.load %arg12[%c1_45, %c96_46] : memref<8x128xf32, #tpu.memory_space<vmem>>, vector<1x16xf32>
    tpu.vector_store %arg12[%c1_45, %c96_46], %63 {strides = array<i32>} : memref<8x128xf32, #tpu.memory_space<vmem>>, vector<1x16xf32>,
    %c2 = arith.constant 2 : index
    %c0_47 = arith.constant 0 : index
    %91 = vector.load %arg0[%c2, %c0_47] : memref<8x32xf32, #tpu.memory_space<vmem>>, vector<1x32xf32>
    %92 = tpu.concatenate %91, %87 in 1 : vector<1x32xf32>, vector<1x32xf32> -> vector<1x64xf32>
    %cst_48 = arith.constant dense<0.000000e+00> : vector<1x16xf32>
    %93 = tpu.matmul %92, %3, %cst_48 {dimension_numbers = #tpu.dot_dimension_numbers<[1], [0], [0], [1], [0, 0, 1, 1], [], []>} : vector<1x64xf32>, vector<64x16xf32>, vector<1x16xf32> -> vector<1x16xf32>
    %94 = arith.addf %93, %4 : vector<1x16xf32>
    %cst_49 = arith.constant dense<0xFF800000> : vector<1xf32>
    %95 = vector.multi_reduction <maximumf>, %94, %cst_49 [1] : vector<1x16xf32> to vector<1xf32>
    %96 = vector.shape_cast %95 : vector<1xf32> to vector<1x1xf32>
    %97 = vector.broadcast %96 : vector<1x1xf32> to vector<1x16xf32>
    %98 = arith.subf %94, %97 : vector<1x16xf32>
    %99 = math.exp %98 : vector<1x16xf32>
    %cst_50 = arith.constant dense<0.000000e+00> : vector<1xf32>
    %100 = vector.multi_reduction <add>, %99, %cst_50 [1] : vector<1x16xf32> to vector<1xf32>
    %101 = vector.shape_cast %100 : vector<1xf32> to vector<1x1xf32>
    %102 = vector.broadcast %101 : vector<1x1xf32> to vector<1x16xf32>
    %103 = arith.divf %99, %102 : vector<1x16xf32>
    %cst_51 = arith.constant dense<0.000000e+00> : vector<1x32xf32>
    %104 = tpu.matmul %103, %2, %cst_51 {dimension_numbers = #tpu.dot_dimension_numbers<[1], [0], [0], [1], [0, 0, 1, 1], [], []>} : vector<1x16xf32>, vector<16x32xf32>, vector<1x32xf32> -> vector<1x32xf32>
    %105 = tpu.concatenate %91, %104 in 1 : vector<1x32xf32>, vector<1x32xf32> -> vector<1x64xf32>
    %cst_52 = arith.constant dense<0.000000e+00> : vector<1x32xf32>
    %106 = tpu.matmul %105, %5, %cst_52 {dimension_numbers = #tpu.dot_dimension_numbers<[1], [0], [0], [1], [0, 0, 1, 1], [], []>} : vector<1x64xf32>, vector<64x32xf32>, vector<1x32xf32> -> vector<1x32xf32>
    %107 = arith.addf %106, %6 : vector<1x32xf32>
    %cst_53 = arith.constant 0.000000e+00 : f32
    %108 = vector.broadcast %cst_53 : f32 to vector<1x32xf32>
    %109 = arith.maximumf %107, %108 : vector<1x32xf32>
    %110 = tpu.concatenate %109, %87 in 1 : vector<1x32xf32>, vector<1x32xf32> -> vector<1x64xf32>
    %cst_54 = arith.constant dense<0.000000e+00> : vector<1x128xf32>
    %111 = tpu.matmul %110, %7, %cst_54 {dimension_numbers = #tpu.dot_dimension_numbers<[1], [0], [0], [1], [0, 0, 1, 1], [], []>} : vector<1x64xf32>, vector<64x128xf32>, vector<1x128xf32> -> vector<1x128xf32>
    %112 = arith.addf %111, %8 : vector<1x128xf32>
    %113 = arith.negf %112 : vector<1x128xf32>
    %114 = math.exp %113 : vector<1x128xf32>
    %cst_55 = arith.constant 1.000000e+00 : f32
    %115 = vector.broadcast %cst_55 : f32 to vector<1x128xf32>
    %116 = arith.addf %115, %114 : vector<1x128xf32>
    %117 = arith.divf %115, %116 : vector<1x128xf32>
    %118 = math.tanh %112 : vector<1x128xf32>
    %119 = vector.extract_strided_slice %117 {offsets = [0, 0], sizes = [1, 32], strides = [1, 1]} : vector<1x128xf32> to vector<1x32xf32>
    %120 = vector.extract_strided_slice %117 {offsets = [0, 32], sizes = [1, 32], strides = [1, 1]} : vector<1x128xf32> to vector<1x32xf32>
    %121 = vector.extract_strided_slice %118 {offsets = [0, 64], sizes = [1, 32], strides = [1, 1]} : vector<1x128xf32> to vector<1x32xf32>
    %122 = vector.extract_strided_slice %117 {offsets = [0, 96], sizes = [1, 32], strides = [1, 1]} : vector<1x128xf32> to vector<1x32xf32>
    %123 = arith.mulf %120, %85 : vector<1x32xf32>
    %124 = arith.mulf %119, %121 : vector<1x32xf32>
    %125 = arith.addf %123, %124 : vector<1x32xf32>
    %126 = math.tanh %125 : vector<1x32xf32>
    %127 = arith.mulf %122, %126 : vector<1x32xf32>
    %c2_56 = arith.constant 2 : index
    %c32_57 = arith.constant 32 : index
    %128 = vector.load %arg12[%c2_56, %c32_57] : memref<8x128xf32, #tpu.memory_space<vmem>>, vector<1x32xf32>
    tpu.vector_store %arg12[%c2_56, %c32_57], %127 {strides = array<i32>} : memref<8x128xf32, #tpu.memory_space<vmem>>, vector<1x32xf32>,
    %c2_58 = arith.constant 2 : index
    %c64_59 = arith.constant 64 : index
    %129 = vector.load %arg12[%c2_58, %c64_59] : memref<8x128xf32, #tpu.memory_space<vmem>>, vector<1x32xf32>
    tpu.vector_store %arg12[%c2_58, %c64_59], %125 {strides = array<i32>} : memref<8x128xf32, #tpu.memory_space<vmem>>, vector<1x32xf32>,
    %c2_60 = arith.constant 2 : index
    %c96_61 = arith.constant 96 : index
    %130 = vector.load %arg12[%c2_60, %c96_61] : memref<8x128xf32, #tpu.memory_space<vmem>>, vector<1x16xf32>
    tpu.vector_store %arg12[%c2_60, %c96_61], %103 {strides = array<i32>} : memref<8x128xf32, #tpu.memory_space<vmem>>, vector<1x16xf32>,
    %c3 = arith.constant 3 : index
    %c0_62 = arith.constant 0 : index
    %131 = vector.load %arg0[%c3, %c0_62] : memref<8x32xf32, #tpu.memory_space<vmem>>, vector<1x32xf32>
    %132 = tpu.concatenate %131, %127 in 1 : vector<1x32xf32>, vector<1x32xf32> -> vector<1x64xf32>
    %cst_63 = arith.constant dense<0.000000e+00> : vector<1x16xf32>
    %133 = tpu.matmul %132, %3, %cst_63 {dimension_numbers = #tpu.dot_dimension_numbers<[1], [0], [0], [1], [0, 0, 1, 1], [], []>} : vector<1x64xf32>, vector<64x16xf32>, vector<1x16xf32> -> vector<1x16xf32>
    %134 = arith.addf %133, %4 : vector<1x16xf32>
    %cst_64 = arith.constant dense<0xFF800000> : vector<1xf32>
    %135 = vector.multi_reduction <maximumf>, %134, %cst_64 [1] : vector<1x16xf32> to vector<1xf32>
    %136 = vector.shape_cast %135 : vector<1xf32> to vector<1x1xf32>
    %137 = vector.broadcast %136 : vector<1x1xf32> to vector<1x16xf32>
    %138 = arith.subf %134, %137 : vector<1x16xf32>
    %139 = math.exp %138 : vector<1x16xf32>
    %cst_65 = arith.constant dense<0.000000e+00> : vector<1xf32>
    %140 = vector.multi_reduction <add>, %139, %cst_65 [1] : vector<1x16xf32> to vector<1xf32>
    %141 = vector.shape_cast %140 : vector<1xf32> to vector<1x1xf32>
    %142 = vector.broadcast %141 : vector<1x1xf32> to vector<1x16xf32>
    %143 = arith.divf %139, %142 : vector<1x16xf32>
    %cst_66 = arith.constant dense<0.000000e+00> : vector<1x32xf32>
    %144 = tpu.matmul %143, %2, %cst_66 {dimension_numbers = #tpu.dot_dimension_numbers<[1], [0], [0], [1], [0, 0, 1, 1], [], []>} : vector<1x16xf32>, vector<16x32xf32>, vector<1x32xf32> -> vector<1x32xf32>
    %145 = tpu.concatenate %131, %144 in 1 : vector<1x32xf32>, vector<1x32xf32> -> vector<1x64xf32>
    %cst_67 = arith.constant dense<0.000000e+00> : vector<1x32xf32>
    %146 = tpu.matmul %145, %5, %cst_67 {dimension_numbers = #tpu.dot_dimension_numbers<[1], [0], [0], [1], [0, 0, 1, 1], [], []>} : vector<1x64xf32>, vector<64x32xf32>, vector<1x32xf32> -> vector<1x32xf32>
    %147 = arith.addf %146, %6 : vector<1x32xf32>
    %cst_68 = arith.constant 0.000000e+00 : f32
    %148 = vector.broadcast %cst_68 : f32 to vector<1x32xf32>
    %149 = arith.maximumf %147, %148 : vector<1x32xf32>
    %150 = tpu.concatenate %149, %127 in 1 : vector<1x32xf32>, vector<1x32xf32> -> vector<1x64xf32>
    %cst_69 = arith.constant dense<0.000000e+00> : vector<1x128xf32>
    %151 = tpu.matmul %150, %7, %cst_69 {dimension_numbers = #tpu.dot_dimension_numbers<[1], [0], [0], [1], [0, 0, 1, 1], [], []>} : vector<1x64xf32>, vector<64x128xf32>, vector<1x128xf32> -> vector<1x128xf32>
    %152 = arith.addf %151, %8 : vector<1x128xf32>
    %153 = arith.negf %152 : vector<1x128xf32>
    %154 = math.exp %153 : vector<1x128xf32>
    %cst_70 = arith.constant 1.000000e+00 : f32
    %155 = vector.broadcast %cst_70 : f32 to vector<1x128xf32>
    %156 = arith.addf %155, %154 : vector<1x128xf32>
    %157 = arith.divf %155, %156 : vector<1x128xf32>
    %158 = math.tanh %152 : vector<1x128xf32>
    %159 = vector.extract_strided_slice %157 {offsets = [0, 0], sizes = [1, 32], strides = [1, 1]} : vector<1x128xf32> to vector<1x32xf32>
    %160 = vector.extract_strided_slice %157 {offsets = [0, 32], sizes = [1, 32], strides = [1, 1]} : vector<1x128xf32> to vector<1x32xf32>
    %161 = vector.extract_strided_slice %158 {offsets = [0, 64], sizes = [1, 32], strides = [1, 1]} : vector<1x128xf32> to vector<1x32xf32>
    %162 = vector.extract_strided_slice %157 {offsets = [0, 96], sizes = [1, 32], strides = [1, 1]} : vector<1x128xf32> to vector<1x32xf32>
    %163 = arith.mulf %160, %125 : vector<1x32xf32>
    %164 = arith.mulf %159, %161 : vector<1x32xf32>
    %165 = arith.addf %163, %164 : vector<1x32xf32>
    %166 = math.tanh %165 : vector<1x32xf32>
    %167 = arith.mulf %162, %166 : vector<1x32xf32>
    %c3_71 = arith.constant 3 : index
    %c32_72 = arith.constant 32 : index
    %168 = vector.load %arg12[%c3_71, %c32_72] : memref<8x128xf32, #tpu.memory_space<vmem>>, vector<1x32xf32>
    tpu.vector_store %arg12[%c3_71, %c32_72], %167 {strides = array<i32>} : memref<8x128xf32, #tpu.memory_space<vmem>>, vector<1x32xf32>,
    %c3_73 = arith.constant 3 : index
    %c64_74 = arith.constant 64 : index
    %169 = vector.load %arg12[%c3_73, %c64_74] : memref<8x128xf32, #tpu.memory_space<vmem>>, vector<1x32xf32>
    tpu.vector_store %arg12[%c3_73, %c64_74], %165 {strides = array<i32>} : memref<8x128xf32, #tpu.memory_space<vmem>>, vector<1x32xf32>,
    %c3_75 = arith.constant 3 : index
    %c96_76 = arith.constant 96 : index
    %170 = vector.load %arg12[%c3_75, %c96_76] : memref<8x128xf32, #tpu.memory_space<vmem>>, vector<1x16xf32>
    tpu.vector_store %arg12[%c3_75, %c96_76], %143 {strides = array<i32>} : memref<8x128xf32, #tpu.memory_space<vmem>>, vector<1x16xf32>,
    %c4 = arith.constant 4 : index
    %c0_77 = arith.constant 0 : index
    %171 = vector.load %arg0[%c4, %c0_77] : memref<8x32xf32, #tpu.memory_space<vmem>>, vector<1x32xf32>
    %172 = tpu.concatenate %171, %167 in 1 : vector<1x32xf32>, vector<1x32xf32> -> vector<1x64xf32>
    %cst_78 = arith.constant dense<0.000000e+00> : vector<1x16xf32>
    %173 = tpu.matmul %172, %3, %cst_78 {dimension_numbers = #tpu.dot_dimension_numbers<[1], [0], [0], [1], [0, 0, 1, 1], [], []>} : vector<1x64xf32>, vector<64x16xf32>, vector<1x16xf32> -> vector<1x16xf32>
    %174 = arith.addf %173, %4 : vector<1x16xf32>
    %cst_79 = arith.constant dense<0xFF800000> : vector<1xf32>
    %175 = vector.multi_reduction <maximumf>, %174, %cst_79 [1] : vector<1x16xf32> to vector<1xf32>
    %176 = vector.shape_cast %175 : vector<1xf32> to vector<1x1xf32>
    %177 = vector.broadcast %176 : vector<1x1xf32> to vector<1x16xf32>
    %178 = arith.subf %174, %177 : vector<1x16xf32>
    %179 = math.exp %178 : vector<1x16xf32>
    %cst_80 = arith.constant dense<0.000000e+00> : vector<1xf32>
    %180 = vector.multi_reduction <add>, %179, %cst_80 [1] : vector<1x16xf32> to vector<1xf32>
    %181 = vector.shape_cast %180 : vector<1xf32> to vector<1x1xf32>
    %182 = vector.broadcast %181 : vector<1x1xf32> to vector<1x16xf32>
    %183 = arith.divf %179, %182 : vector<1x16xf32>
    %cst_81 = arith.constant dense<0.000000e+00> : vector<1x32xf32>
    %184 = tpu.matmul %183, %2, %cst_81 {dimension_numbers = #tpu.dot_dimension_numbers<[1], [0], [0], [1], [0, 0, 1, 1], [], []>} : vector<1x16xf32>, vector<16x32xf32>, vector<1x32xf32> -> vector<1x32xf32>
    %185 = tpu.concatenate %171, %184 in 1 : vector<1x32xf32>, vector<1x32xf32> -> vector<1x64xf32>
    %cst_82 = arith.constant dense<0.000000e+00> : vector<1x32xf32>
    %186 = tpu.matmul %185, %5, %cst_82 {dimension_numbers = #tpu.dot_dimension_numbers<[1], [0], [0], [1], [0, 0, 1, 1], [], []>} : vector<1x64xf32>, vector<64x32xf32>, vector<1x32xf32> -> vector<1x32xf32>
    %187 = arith.addf %186, %6 : vector<1x32xf32>
    %cst_83 = arith.constant 0.000000e+00 : f32
    %188 = vector.broadcast %cst_83 : f32 to vector<1x32xf32>
    %189 = arith.maximumf %187, %188 : vector<1x32xf32>
    %190 = tpu.concatenate %189, %167 in 1 : vector<1x32xf32>, vector<1x32xf32> -> vector<1x64xf32>
    %cst_84 = arith.constant dense<0.000000e+00> : vector<1x128xf32>
    %191 = tpu.matmul %190, %7, %cst_84 {dimension_numbers = #tpu.dot_dimension_numbers<[1], [0], [0], [1], [0, 0, 1, 1], [], []>} : vector<1x64xf32>, vector<64x128xf32>, vector<1x128xf32> -> vector<1x128xf32>
    %192 = arith.addf %191, %8 : vector<1x128xf32>
    %193 = arith.negf %192 : vector<1x128xf32>
    %194 = math.exp %193 : vector<1x128xf32>
    %cst_85 = arith.constant 1.000000e+00 : f32
    %195 = vector.broadcast %cst_85 : f32 to vector<1x128xf32>
    %196 = arith.addf %195, %194 : vector<1x128xf32>
    %197 = arith.divf %195, %196 : vector<1x128xf32>
    %198 = math.tanh %192 : vector<1x128xf32>
    %199 = vector.extract_strided_slice %197 {offsets = [0, 0], sizes = [1, 32], strides = [1, 1]} : vector<1x128xf32> to vector<1x32xf32>
    %200 = vector.extract_strided_slice %197 {offsets = [0, 32], sizes = [1, 32], strides = [1, 1]} : vector<1x128xf32> to vector<1x32xf32>
    %201 = vector.extract_strided_slice %198 {offsets = [0, 64], sizes = [1, 32], strides = [1, 1]} : vector<1x128xf32> to vector<1x32xf32>
    %202 = vector.extract_strided_slice %197 {offsets = [0, 96], sizes = [1, 32], strides = [1, 1]} : vector<1x128xf32> to vector<1x32xf32>
    %203 = arith.mulf %200, %165 : vector<1x32xf32>
    %204 = arith.mulf %199, %201 : vector<1x32xf32>
    %205 = arith.addf %203, %204 : vector<1x32xf32>
    %206 = math.tanh %205 : vector<1x32xf32>
    %207 = arith.mulf %202, %206 : vector<1x32xf32>
    %c4_86 = arith.constant 4 : index
    %c32_87 = arith.constant 32 : index
    %208 = vector.load %arg12[%c4_86, %c32_87] : memref<8x128xf32, #tpu.memory_space<vmem>>, vector<1x32xf32>
    tpu.vector_store %arg12[%c4_86, %c32_87], %207 {strides = array<i32>} : memref<8x128xf32, #tpu.memory_space<vmem>>, vector<1x32xf32>,
    %c4_88 = arith.constant 4 : index
    %c64_89 = arith.constant 64 : index
    %209 = vector.load %arg12[%c4_88, %c64_89] : memref<8x128xf32, #tpu.memory_space<vmem>>, vector<1x32xf32>
    tpu.vector_store %arg12[%c4_88, %c64_89], %205 {strides = array<i32>} : memref<8x128xf32, #tpu.memory_space<vmem>>, vector<1x32xf32>,
    %c4_90 = arith.constant 4 : index
    %c96_91 = arith.constant 96 : index
    %210 = vector.load %arg12[%c4_90, %c96_91] : memref<8x128xf32, #tpu.memory_space<vmem>>, vector<1x16xf32>
    tpu.vector_store %arg12[%c4_90, %c96_91], %183 {strides = array<i32>} : memref<8x128xf32, #tpu.memory_space<vmem>>, vector<1x16xf32>,
    %c5 = arith.constant 5 : index
    %c0_92 = arith.constant 0 : index
    %211 = vector.load %arg0[%c5, %c0_92] : memref<8x32xf32, #tpu.memory_space<vmem>>, vector<1x32xf32>
    %212 = tpu.concatenate %211, %207 in 1 : vector<1x32xf32>, vector<1x32xf32> -> vector<1x64xf32>
    %cst_93 = arith.constant dense<0.000000e+00> : vector<1x16xf32>
    %213 = tpu.matmul %212, %3, %cst_93 {dimension_numbers = #tpu.dot_dimension_numbers<[1], [0], [0], [1], [0, 0, 1, 1], [], []>} : vector<1x64xf32>, vector<64x16xf32>, vector<1x16xf32> -> vector<1x16xf32>
    %214 = arith.addf %213, %4 : vector<1x16xf32>
    %cst_94 = arith.constant dense<0xFF800000> : vector<1xf32>
    %215 = vector.multi_reduction <maximumf>, %214, %cst_94 [1] : vector<1x16xf32> to vector<1xf32>
    %216 = vector.shape_cast %215 : vector<1xf32> to vector<1x1xf32>
    %217 = vector.broadcast %216 : vector<1x1xf32> to vector<1x16xf32>
    %218 = arith.subf %214, %217 : vector<1x16xf32>
    %219 = math.exp %218 : vector<1x16xf32>
    %cst_95 = arith.constant dense<0.000000e+00> : vector<1xf32>
    %220 = vector.multi_reduction <add>, %219, %cst_95 [1] : vector<1x16xf32> to vector<1xf32>
    %221 = vector.shape_cast %220 : vector<1xf32> to vector<1x1xf32>
    %222 = vector.broadcast %221 : vector<1x1xf32> to vector<1x16xf32>
    %223 = arith.divf %219, %222 : vector<1x16xf32>
    %cst_96 = arith.constant dense<0.000000e+00> : vector<1x32xf32>
    %224 = tpu.matmul %223, %2, %cst_96 {dimension_numbers = #tpu.dot_dimension_numbers<[1], [0], [0], [1], [0, 0, 1, 1], [], []>} : vector<1x16xf32>, vector<16x32xf32>, vector<1x32xf32> -> vector<1x32xf32>
    %225 = tpu.concatenate %211, %224 in 1 : vector<1x32xf32>, vector<1x32xf32> -> vector<1x64xf32>
    %cst_97 = arith.constant dense<0.000000e+00> : vector<1x32xf32>
    %226 = tpu.matmul %225, %5, %cst_97 {dimension_numbers = #tpu.dot_dimension_numbers<[1], [0], [0], [1], [0, 0, 1, 1], [], []>} : vector<1x64xf32>, vector<64x32xf32>, vector<1x32xf32> -> vector<1x32xf32>
    %227 = arith.addf %226, %6 : vector<1x32xf32>
    %cst_98 = arith.constant 0.000000e+00 : f32
    %228 = vector.broadcast %cst_98 : f32 to vector<1x32xf32>
    %229 = arith.maximumf %227, %228 : vector<1x32xf32>
    %230 = tpu.concatenate %229, %207 in 1 : vector<1x32xf32>, vector<1x32xf32> -> vector<1x64xf32>
    %cst_99 = arith.constant dense<0.000000e+00> : vector<1x128xf32>
    %231 = tpu.matmul %230, %7, %cst_99 {dimension_numbers = #tpu.dot_dimension_numbers<[1], [0], [0], [1], [0, 0, 1, 1], [], []>} : vector<1x64xf32>, vector<64x128xf32>, vector<1x128xf32> -> vector<1x128xf32>
    %232 = arith.addf %231, %8 : vector<1x128xf32>
    %233 = arith.negf %232 : vector<1x128xf32>
    %234 = math.exp %233 : vector<1x128xf32>
    %cst_100 = arith.constant 1.000000e+00 : f32
    %235 = vector.broadcast %cst_100 : f32 to vector<1x128xf32>
    %236 = arith.addf %235, %234 : vector<1x128xf32>
    %237 = arith.divf %235, %236 : vector<1x128xf32>
    %238 = math.tanh %232 : vector<1x128xf32>
    %239 = vector.extract_strided_slice %237 {offsets = [0, 0], sizes = [1, 32], strides = [1, 1]} : vector<1x128xf32> to vector<1x32xf32>
    %240 = vector.extract_strided_slice %237 {offsets = [0, 32], sizes = [1, 32], strides = [1, 1]} : vector<1x128xf32> to vector<1x32xf32>
    %241 = vector.extract_strided_slice %238 {offsets = [0, 64], sizes = [1, 32], strides = [1, 1]} : vector<1x128xf32> to vector<1x32xf32>
    %242 = vector.extract_strided_slice %237 {offsets = [0, 96], sizes = [1, 32], strides = [1, 1]} : vector<1x128xf32> to vector<1x32xf32>
    %243 = arith.mulf %240, %205 : vector<1x32xf32>
    %244 = arith.mulf %239, %241 : vector<1x32xf32>
    %245 = arith.addf %243, %244 : vector<1x32xf32>
    %246 = math.tanh %245 : vector<1x32xf32>
    %247 = arith.mulf %242, %246 : vector<1x32xf32>
    %c5_101 = arith.constant 5 : index
    %c32_102 = arith.constant 32 : index
    %248 = vector.load %arg12[%c5_101, %c32_102] : memref<8x128xf32, #tpu.memory_space<vmem>>, vector<1x32xf32>
    tpu.vector_store %arg12[%c5_101, %c32_102], %247 {strides = array<i32>} : memref<8x128xf32, #tpu.memory_space<vmem>>, vector<1x32xf32>,
    %c5_103 = arith.constant 5 : index
    %c64_104 = arith.constant 64 : index
    %249 = vector.load %arg12[%c5_103, %c64_104] : memref<8x128xf32, #tpu.memory_space<vmem>>, vector<1x32xf32>
    tpu.vector_store %arg12[%c5_103, %c64_104], %245 {strides = array<i32>} : memref<8x128xf32, #tpu.memory_space<vmem>>, vector<1x32xf32>,
    %c5_105 = arith.constant 5 : index
    %c96_106 = arith.constant 96 : index
    %250 = vector.load %arg12[%c5_105, %c96_106] : memref<8x128xf32, #tpu.memory_space<vmem>>, vector<1x16xf32>
    tpu.vector_store %arg12[%c5_105, %c96_106], %223 {strides = array<i32>} : memref<8x128xf32, #tpu.memory_space<vmem>>, vector<1x16xf32>,
    %c6 = arith.constant 6 : index
    %c0_107 = arith.constant 0 : index
    %251 = vector.load %arg0[%c6, %c0_107] : memref<8x32xf32, #tpu.memory_space<vmem>>, vector<1x32xf32>
    %252 = tpu.concatenate %251, %247 in 1 : vector<1x32xf32>, vector<1x32xf32> -> vector<1x64xf32>
    %cst_108 = arith.constant dense<0.000000e+00> : vector<1x16xf32>
    %253 = tpu.matmul %252, %3, %cst_108 {dimension_numbers = #tpu.dot_dimension_numbers<[1], [0], [0], [1], [0, 0, 1, 1], [], []>} : vector<1x64xf32>, vector<64x16xf32>, vector<1x16xf32> -> vector<1x16xf32>
    %254 = arith.addf %253, %4 : vector<1x16xf32>
    %cst_109 = arith.constant dense<0xFF800000> : vector<1xf32>
    %255 = vector.multi_reduction <maximumf>, %254, %cst_109 [1] : vector<1x16xf32> to vector<1xf32>
    %256 = vector.shape_cast %255 : vector<1xf32> to vector<1x1xf32>
    %257 = vector.broadcast %256 : vector<1x1xf32> to vector<1x16xf32>
    %258 = arith.subf %254, %257 : vector<1x16xf32>
    %259 = math.exp %258 : vector<1x16xf32>
    %cst_110 = arith.constant dense<0.000000e+00> : vector<1xf32>
    %260 = vector.multi_reduction <add>, %259, %cst_110 [1] : vector<1x16xf32> to vector<1xf32>
    %261 = vector.shape_cast %260 : vector<1xf32> to vector<1x1xf32>
    %262 = vector.broadcast %261 : vector<1x1xf32> to vector<1x16xf32>
    %263 = arith.divf %259, %262 : vector<1x16xf32>
    %cst_111 = arith.constant dense<0.000000e+00> : vector<1x32xf32>
    %264 = tpu.matmul %263, %2, %cst_111 {dimension_numbers = #tpu.dot_dimension_numbers<[1], [0], [0], [1], [0, 0, 1, 1], [], []>} : vector<1x16xf32>, vector<16x32xf32>, vector<1x32xf32> -> vector<1x32xf32>
    %265 = tpu.concatenate %251, %264 in 1 : vector<1x32xf32>, vector<1x32xf32> -> vector<1x64xf32>
    %cst_112 = arith.constant dense<0.000000e+00> : vector<1x32xf32>
    %266 = tpu.matmul %265, %5, %cst_112 {dimension_numbers = #tpu.dot_dimension_numbers<[1], [0], [0], [1], [0, 0, 1, 1], [], []>} : vector<1x64xf32>, vector<64x32xf32>, vector<1x32xf32> -> vector<1x32xf32>
    %267 = arith.addf %266, %6 : vector<1x32xf32>
    %cst_113 = arith.constant 0.000000e+00 : f32
    %268 = vector.broadcast %cst_113 : f32 to vector<1x32xf32>
    %269 = arith.maximumf %267, %268 : vector<1x32xf32>
    %270 = tpu.concatenate %269, %247 in 1 : vector<1x32xf32>, vector<1x32xf32> -> vector<1x64xf32>
    %cst_114 = arith.constant dense<0.000000e+00> : vector<1x128xf32>
    %271 = tpu.matmul %270, %7, %cst_114 {dimension_numbers = #tpu.dot_dimension_numbers<[1], [0], [0], [1], [0, 0, 1, 1], [], []>} : vector<1x64xf32>, vector<64x128xf32>, vector<1x128xf32> -> vector<1x128xf32>
    %272 = arith.addf %271, %8 : vector<1x128xf32>
    %273 = arith.negf %272 : vector<1x128xf32>
    %274 = math.exp %273 : vector<1x128xf32>
    %cst_115 = arith.constant 1.000000e+00 : f32
    %275 = vector.broadcast %cst_115 : f32 to vector<1x128xf32>
    %276 = arith.addf %275, %274 : vector<1x128xf32>
    %277 = arith.divf %275, %276 : vector<1x128xf32>
    %278 = math.tanh %272 : vector<1x128xf32>
    %279 = vector.extract_strided_slice %277 {offsets = [0, 0], sizes = [1, 32], strides = [1, 1]} : vector<1x128xf32> to vector<1x32xf32>
    %280 = vector.extract_strided_slice %277 {offsets = [0, 32], sizes = [1, 32], strides = [1, 1]} : vector<1x128xf32> to vector<1x32xf32>
    %281 = vector.extract_strided_slice %278 {offsets = [0, 64], sizes = [1, 32], strides = [1, 1]} : vector<1x128xf32> to vector<1x32xf32>
    %282 = vector.extract_strided_slice %277 {offsets = [0, 96], sizes = [1, 32], strides = [1, 1]} : vector<1x128xf32> to vector<1x32xf32>
    %283 = arith.mulf %280, %245 : vector<1x32xf32>
    %284 = arith.mulf %279, %281 : vector<1x32xf32>
    %285 = arith.addf %283, %284 : vector<1x32xf32>
    %286 = math.tanh %285 : vector<1x32xf32>
    %287 = arith.mulf %282, %286 : vector<1x32xf32>
    %c6_116 = arith.constant 6 : index
    %c32_117 = arith.constant 32 : index
    %288 = vector.load %arg12[%c6_116, %c32_117] : memref<8x128xf32, #tpu.memory_space<vmem>>, vector<1x32xf32>
    tpu.vector_store %arg12[%c6_116, %c32_117], %287 {strides = array<i32>} : memref<8x128xf32, #tpu.memory_space<vmem>>, vector<1x32xf32>,
    %c6_118 = arith.constant 6 : index
    %c64_119 = arith.constant 64 : index
    %289 = vector.load %arg12[%c6_118, %c64_119] : memref<8x128xf32, #tpu.memory_space<vmem>>, vector<1x32xf32>
    tpu.vector_store %arg12[%c6_118, %c64_119], %285 {strides = array<i32>} : memref<8x128xf32, #tpu.memory_space<vmem>>, vector<1x32xf32>,
    %c6_120 = arith.constant 6 : index
    %c96_121 = arith.constant 96 : index
    %290 = vector.load %arg12[%c6_120, %c96_121] : memref<8x128xf32, #tpu.memory_space<vmem>>, vector<1x16xf32>
    tpu.vector_store %arg12[%c6_120, %c96_121], %263 {strides = array<i32>} : memref<8x128xf32, #tpu.memory_space<vmem>>, vector<1x16xf32>,
    %c7 = arith.constant 7 : index
    %c0_122 = arith.constant 0 : index
    %291 = vector.load %arg0[%c7, %c0_122] : memref<8x32xf32, #tpu.memory_space<vmem>>, vector<1x32xf32>
    %292 = tpu.concatenate %291, %287 in 1 : vector<1x32xf32>, vector<1x32xf32> -> vector<1x64xf32>
    %cst_123 = arith.constant dense<0.000000e+00> : vector<1x16xf32>
    %293 = tpu.matmul %292, %3, %cst_123 {dimension_numbers = #tpu.dot_dimension_numbers<[1], [0], [0], [1], [0, 0, 1, 1], [], []>} : vector<1x64xf32>, vector<64x16xf32>, vector<1x16xf32> -> vector<1x16xf32>
    %294 = arith.addf %293, %4 : vector<1x16xf32>
    %cst_124 = arith.constant dense<0xFF800000> : vector<1xf32>
    %295 = vector.multi_reduction <maximumf>, %294, %cst_124 [1] : vector<1x16xf32> to vector<1xf32>
    %296 = vector.shape_cast %295 : vector<1xf32> to vector<1x1xf32>
    %297 = vector.broadcast %296 : vector<1x1xf32> to vector<1x16xf32>
    %298 = arith.subf %294, %297 : vector<1x16xf32>
    %299 = math.exp %298 : vector<1x16xf32>
    %cst_125 = arith.constant dense<0.000000e+00> : vector<1xf32>
    %300 = vector.multi_reduction <add>, %299, %cst_125 [1] : vector<1x16xf32> to vector<1xf32>
    %301 = vector.shape_cast %300 : vector<1xf32> to vector<1x1xf32>
    %302 = vector.broadcast %301 : vector<1x1xf32> to vector<1x16xf32>
    %303 = arith.divf %299, %302 : vector<1x16xf32>
    %cst_126 = arith.constant dense<0.000000e+00> : vector<1x32xf32>
    %304 = tpu.matmul %303, %2, %cst_126 {dimension_numbers = #tpu.dot_dimension_numbers<[1], [0], [0], [1], [0, 0, 1, 1], [], []>} : vector<1x16xf32>, vector<16x32xf32>, vector<1x32xf32> -> vector<1x32xf32>
    %305 = tpu.concatenate %291, %304 in 1 : vector<1x32xf32>, vector<1x32xf32> -> vector<1x64xf32>
    %cst_127 = arith.constant dense<0.000000e+00> : vector<1x32xf32>
    %306 = tpu.matmul %305, %5, %cst_127 {dimension_numbers = #tpu.dot_dimension_numbers<[1], [0], [0], [1], [0, 0, 1, 1], [], []>} : vector<1x64xf32>, vector<64x32xf32>, vector<1x32xf32> -> vector<1x32xf32>
    %307 = arith.addf %306, %6 : vector<1x32xf32>
    %cst_128 = arith.constant 0.000000e+00 : f32
    %308 = vector.broadcast %cst_128 : f32 to vector<1x32xf32>
    %309 = arith.maximumf %307, %308 : vector<1x32xf32>
    %310 = tpu.concatenate %309, %287 in 1 : vector<1x32xf32>, vector<1x32xf32> -> vector<1x64xf32>
    %cst_129 = arith.constant dense<0.000000e+00> : vector<1x128xf32>
    %311 = tpu.matmul %310, %7, %cst_129 {dimension_numbers = #tpu.dot_dimension_numbers<[1], [0], [0], [1], [0, 0, 1, 1], [], []>} : vector<1x64xf32>, vector<64x128xf32>, vector<1x128xf32> -> vector<1x128xf32>
    %312 = arith.addf %311, %8 : vector<1x128xf32>
    %313 = arith.negf %312 : vector<1x128xf32>
    %314 = math.exp %313 : vector<1x128xf32>
    %cst_130 = arith.constant 1.000000e+00 : f32
    %315 = vector.broadcast %cst_130 : f32 to vector<1x128xf32>
    %316 = arith.addf %315, %314 : vector<1x128xf32>
    %317 = arith.divf %315, %316 : vector<1x128xf32>
    %318 = math.tanh %312 : vector<1x128xf32>
    %319 = vector.extract_strided_slice %317 {offsets = [0, 0], sizes = [1, 32], strides = [1, 1]} : vector<1x128xf32> to vector<1x32xf32>
    %320 = vector.extract_strided_slice %317 {offsets = [0, 32], sizes = [1, 32], strides = [1, 1]} : vector<1x128xf32> to vector<1x32xf32>
    %321 = vector.extract_strided_slice %318 {offsets = [0, 64], sizes = [1, 32], strides = [1, 1]} : vector<1x128xf32> to vector<1x32xf32>
    %322 = vector.extract_strided_slice %317 {offsets = [0, 96], sizes = [1, 32], strides = [1, 1]} : vector<1x128xf32> to vector<1x32xf32>
    %323 = arith.mulf %320, %285 : vector<1x32xf32>
    %324 = arith.mulf %319, %321 : vector<1x32xf32>
    %325 = arith.addf %323, %324 : vector<1x32xf32>
    %326 = math.tanh %325 : vector<1x32xf32>
    %327 = arith.mulf %322, %326 : vector<1x32xf32>
    %c7_131 = arith.constant 7 : index
    %c32_132 = arith.constant 32 : index
    %328 = vector.load %arg12[%c7_131, %c32_132] : memref<8x128xf32, #tpu.memory_space<vmem>>, vector<1x32xf32>
    tpu.vector_store %arg12[%c7_131, %c32_132], %327 {strides = array<i32>} : memref<8x128xf32, #tpu.memory_space<vmem>>, vector<1x32xf32>,
    %c7_133 = arith.constant 7 : index
    %c64_134 = arith.constant 64 : index
    %329 = vector.load %arg12[%c7_133, %c64_134] : memref<8x128xf32, #tpu.memory_space<vmem>>, vector<1x32xf32>
    tpu.vector_store %arg12[%c7_133, %c64_134], %325 {strides = array<i32>} : memref<8x128xf32, #tpu.memory_space<vmem>>, vector<1x32xf32>,
    %c7_135 = arith.constant 7 : index
    %c96_136 = arith.constant 96 : index
    %330 = vector.load %arg12[%c7_135, %c96_136] : memref<8x128xf32, #tpu.memory_space<vmem>>, vector<1x16xf32>
    tpu.vector_store %arg12[%c7_135, %c96_136], %303 {strides = array<i32>} : memref<8x128xf32, #tpu.memory_space<vmem>>, vector<1x16xf32>,
    %c0_137 = arith.constant 0 : index
    %c32_138 = arith.constant 32 : index
    %331 = vector.load %arg12[%c0_137, %c32_138] : memref<8x128xf32, #tpu.memory_space<vmem>>, vector<8x32xf32>
    %c0_139 = arith.constant 0 : index
    %c0_140 = arith.constant 0 : index
    %332 = vector.load %arg10[%c0_139, %c0_140] : memref<32x32xf32, #tpu.memory_space<vmem>>, vector<32x32xf32>
    %cst_141 = arith.constant dense<0.000000e+00> : vector<8x32xf32>
    %333 = tpu.matmul %331, %332, %cst_141 {dimension_numbers = #tpu.dot_dimension_numbers<[1], [0], [0], [1], [0, 0, 1, 1], [], []>} : vector<8x32xf32>, vector<32x32xf32>, vector<8x32xf32> -> vector<8x32xf32>
    %c0_142 = arith.constant 0 : index
    %c0_143 = arith.constant 0 : index
    %334 = vector.load %arg11[%c0_142, %c0_143] : memref<1x32xf32, #tpu.memory_space<vmem>>, vector<1x32xf32>
    %335 = vector.broadcast %334 : vector<1x32xf32> to vector<8x32xf32>
    %336 = arith.addf %333, %335 : vector<8x32xf32>
    %cst_144 = arith.constant dense<0xFF800000> : vector<8xf32>
    %337 = vector.multi_reduction <maximumf>, %336, %cst_144 [1] : vector<8x32xf32> to vector<8xf32>
    %338 = vector.shape_cast %337 : vector<8xf32> to vector<8x1xf32>
    %339 = vector.broadcast %338 : vector<8x1xf32> to vector<8x32xf32>
    %340 = arith.subf %336, %339 : vector<8x32xf32>
    %341 = math.exp %340 : vector<8x32xf32>
    %cst_145 = arith.constant dense<0.000000e+00> : vector<8xf32>
    %342 = vector.multi_reduction <add>, %341, %cst_145 [1] : vector<8x32xf32> to vector<8xf32>
    %343 = vector.shape_cast %342 : vector<8xf32> to vector<8x1xf32>
    %344 = math.log %343 : vector<8x1xf32>
    %345 = vector.broadcast %344 : vector<8x1xf32> to vector<8x32xf32>
    %346 = arith.subf %340, %345 : vector<8x32xf32>
    %c0_146 = arith.constant 0 : index
    %c0_147 = arith.constant 0 : index
    %347 = vector.load %arg12[%c0_146, %c0_147] : memref<8x128xf32, #tpu.memory_space<vmem>>, vector<8x32xf32>
    tpu.vector_store %arg12[%c0_146, %c0_147], %346 {strides = array<i32>} : memref<8x128xf32, #tpu.memory_space<vmem>>, vector<8x32xf32>,
    return
  }
}

</mosaic_0001>

<llo_original>
// kernel: attn_decoder_decode.1
$region0: #{attn_decoder_decode.1}
  #allocation0 [shape = 'u32[]', space=smem, size = 0x4, offset = 0x4, fixed_abs, tag = 'smem constant byte address 0x4 - core index']
  #allocation1 [shape = 'u32[144,128]{1,0:T(1,128)}', space=vmem, size = 0x12000, scoped, tag = 'internal scratch']
  %s0 = inlined_call_operand.vmem [shape: f32[8,32], index: 0, kind: input, shape index: {}]
  %s1 = inlined_call_operand.vmem [shape: f32[1,32], index: 1, kind: input, shape index: {}]
  %s2 = inlined_call_operand.vmem [shape: f32[1,32], index: 2, kind: input, shape index: {}]
  %s3 = inlined_call_operand.vmem [shape: f32[16,32], index: 3, kind: input, shape index: {}]
  %s4 = inlined_call_operand.vmem [shape: f32[64,16], index: 4, kind: input, shape index: {}]
  %s5 = inlined_call_operand.vmem [shape: f32[1,16], index: 5, kind: input, shape index: {}]
  %s6 = inlined_call_operand.vmem [shape: f32[64,32], index: 6, kind: input, shape index: {}]
  %s7 = inlined_call_operand.vmem [shape: f32[1,32], index: 7, kind: input, shape index: {}]
  %s8 = inlined_call_operand.vmem [shape: f32[64,128], index: 8, kind: input, shape index: {}]
  %s9 = inlined_call_operand.vmem [shape: f32[1,128], index: 9, kind: input, shape index: {}]
  %s10 = inlined_call_operand.vmem [shape: f32[32,32], index: 10, kind: input, shape index: {}]
  %s11 = inlined_call_operand.vmem [shape: f32[1,32], index: 11, kind: input, shape index: {}]
  %s12 = inlined_call_operand.vmem [shape: f32[8,128], index: 12, kind: output, shape index: {}]
  %s13 = sld [smem:[#allocation0]]
  $region58: #{attn_decoder_decode.1} parent=0
    _
  %s15 = ssub.s32 1, %s13
  %s16 = scalar_select 0, %s15, %s13
  // Predicated region
  $region2: #{attn_decoder_decode.1} parent=0 // pred_check
    _
  $region3: #{attn_decoder_decode.1} parent=0 // pred_check_branch
    %18 = sbr.rel (0) target = $region5
  $region4: #{attn_decoder_decode.1} parent=0 // pred_region
    _
  $region5: #{attn_decoder_decode.1} parent=0 // pred_fallthru
    _
  // Predicated region
  $region6: #{attn_decoder_decode.1} parent=0 // pred_check
    _
  $region7: #{attn_decoder_decode.1} parent=0 // pred_check_branch
    %20 = sbr.rel (0) target = $region9
  $region8: #{attn_decoder_decode.1} parent=0 // pred_region
    _
  $region9: #{attn_decoder_decode.1} parent=0 // pred_fallthru
    _
  // Predicated region
  $region10: #{attn_decoder_decode.1} parent=0 // pred_check
    _
  $region11: #{attn_decoder_decode.1} parent=0 // pred_check_branch
    %22 = sbr.rel (0) target = $region13
  $region12: #{attn_decoder_decode.1} parent=0 // pred_region
    _
  $region13: #{attn_decoder_decode.1} parent=0 // pred_fallthru
    _
  // Predicated region
  $region14: #{attn_decoder_decode.1} parent=0 // pred_check
    _
  $region15: #{attn_decoder_decode.1} parent=0 // pred_check_branch
    %24 = sbr.rel (0) target = $region17
  $region16: #{attn_decoder_decode.1} parent=0 // pred_region
    _
  $region17: #{attn_decoder_decode.1} parent=0 // pred_fallthru
    _
  // Predicated region
  $region18: #{attn_decoder_decode.1} parent=0 // pred_check
    _
  $region19: #{attn_decoder_decode.1} parent=0 // pred_check_branch
    %26 = sbr.rel (0) target = $region21
  $region20: #{attn_decoder_decode.1} parent=0 // pred_region
    _
  $region21: #{attn_decoder_decode.1} parent=0 // pred_fallthru
    _
  // Predicated region
  $region22: #{attn_decoder_decode.1} parent=0 // pred_check
    _
  $region23: #{attn_decoder_decode.1} parent=0 // pred_check_branch
    %28 = sbr.rel (0) target = $region25
  $region24: #{attn_decoder_decode.1} parent=0 // pred_region
    _
  $region25: #{attn_decoder_decode.1} parent=0 // pred_fallthru
    _
  // Predicated region
  $region26: #{attn_decoder_decode.1} parent=0 // pred_check
    _
  $region27: #{attn_decoder_decode.1} parent=0 // pred_check_branch
    %30 = sbr.rel (0) target = $region29
  $region28: #{attn_decoder_decode.1} parent=0 // pred_region
    _
  $region29: #{attn_decoder_decode.1} parent=0 // pred_fallthru
    _
  // Predicated region
  $region30: #{attn_decoder_decode.1} parent=0 // pred_check
    _
  $region31: #{attn_decoder_decode.1} parent=0 // pred_check_branch
    %32 = sbr.rel (0) target = $region33
  $region32: #{attn_decoder_decode.1} parent=0 // pred_region
    _
  $region33: #{attn_decoder_decode.1} parent=0 // pred_fallthru
    _
  // Predicated region
  $region34: #{attn_decoder_decode.1} parent=0 // pred_check
    _
  $region35: #{attn_decoder_decode.1} parent=0 // pred_check_branch
    %34 = sbr.rel (0) target = $region37
  $region36: #{attn_decoder_decode.1} parent=0 // pred_region
    _
  $region37: #{attn_decoder_decode.1} parent=0 // pred_fallthru
    _
  // Predicated region
  $region38: #{attn_decoder_decode.1} parent=0 // pred_check
    _
  $region39: #{attn_decoder_decode.1} parent=0 // pred_check_branch
    %36 = sbr.rel (0) target = $region41
  $region40: #{attn_decoder_decode.1} parent=0 // pred_region
    _
  $region41: #{attn_decoder_decode.1} parent=0 // pred_fallthru
    _
  // Predicated region
  $region42: #{attn_decoder_decode.1} parent=0 // pred_check
    _
  $region43: #{attn_decoder_decode.1} parent=0 // pred_check_branch
    %38 = sbr.rel (0) target = $region45
  $region44: #{attn_decoder_decode.1} parent=0 // pred_region
    _
  $region45: #{attn_decoder_decode.1} parent=0 // pred_fallthru
    _
  // Predicated region
  $region46: #{attn_decoder_decode.1} parent=0 // pred_check
    _
  $region47: #{attn_decoder_decode.1} parent=0 // pred_check_branch
    %40 = sbr.rel (0) target = $region49
  $region48: #{attn_decoder_decode.1} parent=0 // pred_region
    _
  $region49: #{attn_decoder_decode.1} parent=0 // pred_fallthru
    _
  %41 = vst [vmem:[%s12] sm:$0xff] 0.0
  %v42 = vld [vmem:[%s3] sm:$0xff]
  %v43 = vld [vmem:[%s3 + $0x8] sm:$0xff]
  %v44 = vld [vmem:[%s4] sm:$0xff]
  %v45 = vld [vmem:[%s4 + $0x8] sm:$0xff]
  %v46 = vld [vmem:[%s4 + $0x10] sm:$0xff]
  %v47 = vld [vmem:[%s4 + $0x18] sm:$0xff]
  %v48 = vld [vmem:[%s4 + $0x20] sm:$0xff]
  %v49 = vld [vmem:[%s4 + $0x28] sm:$0xff]
  %v50 = vld [vmem:[%s4 + $0x30] sm:$0xff]
  %v51 = vld [vmem:[%s4 + $0x38] sm:$0xff]
  %v52 = vld [vmem:[%s5] sm:$0x1]
  %v53 = vld [vmem:[%s6] sm:$0xff]
  %v54 = vld [vmem:[%s6 + $0x8] sm:$0xff]
  %v55 = vld [vmem:[%s6 + $0x10] sm:$0xff]
  %v56 = vld [vmem:[%s6 + $0x18] sm:$0xff]
  %v57 = vld [vmem:[%s6 + $0x20] sm:$0xff]
  %v58 = vld [vmem:[%s6 + $0x28] sm:$0xff]
  %v59 = vld [vmem:[%s6 + $0x30] sm:$0xff]
  %v60 = vld [vmem:[%s6 + $0x38] sm:$0xff]
  %v61 = vld [vmem:[%s7] sm:$0x1]
  %v62 = vld [vmem:[%s8] sm:$0xff]
  %v63 = vld [vmem:[%s8 + $0x8] sm:$0xff]
  %v64 = vld [vmem:[%s8 + $0x10] sm:$0xff]
  %v65 = vld [vmem:[%s8 + $0x18] sm:$0xff]
  %v66 = vld [vmem:[%s8 + $0x20] sm:$0xff]
  %v67 = vld [vmem:[%s8 + $0x28] sm:$0xff]
  %v68 = vld [vmem:[%s8 + $0x30] sm:$0xff]
  %v69 = vld [vmem:[%s8 + $0x38] sm:$0xff]
  %v70 = vld [vmem:[%s9] sm:$0x1]
  %v71 = vld [vmem:[%s1] sm:$0x1]
  %v72 = vld [vmem:[%s2] sm:$0x1]
  %v73 = vld [vmem:[%s0] sm:$0x1]
  %v75 = vlaneseq
  %v76 = vshrl.u32 %v75, 7
  %v77 = vsub.s32 0, %v76
  %v78 = vrot.slane %v71, %v77
  %79 = vrot.lane.b32.xlu0 %v78, 32
  %v80 = vpop.permute.xlu0 %79
  %vm82 = vcmask 261120
  %v83 = vsel %vm82, %v73, %v80
  %vm84 = vcmask 523264
  %v86 = vsel %vm84, %v83, 0
  %88 = vmatprep.subr.mxu0 0.0
  %89 = vmatpush1.msra.mxu0 %v44
  %90 = vmatprep.subr.mxu0 0.0
  %91 = vmatpush1.msra.mxu0 %v45
  %92 = vmatprep.subr.mxu0 0.0
  %93 = vmatpush1.msra.mxu0 %v46
  %94 = vmatprep.subr.mxu0 0.0
  %95 = vmatpush1.msra.mxu0 %v47
  %96 = vmatprep.subr.mxu0 0.0
  %97 = vmatpush1.msra.mxu0 %v48
  %98 = vmatprep.subr.mxu0 0.0
  %99 = vmatpush1.msra.mxu0 %v49
  %100 = vmatprep.subr.mxu0 0.0
  %101 = vmatpush1.msra.mxu0 %v50
  %102 = vmatprep.subr.mxu0 0.0
  %103 = vmatpush1.msra.mxu0 %v51
  %104 = vmatprep.subr.mxu0 0.0
  %105 = vmatpush1.msra.mxu0 0.0
  %106 = vmatprep.subr.mxu0 0.0
  %107 = vmatpush1.msra.mxu0 0.0
  %108 = vmatprep.subr.mxu0 0.0
  %109 = vmatpush1.msra.mxu0 0.0
  %110 = vmatprep.subr.mxu0 0.0
  %111 = vmatpush1.msra.mxu0 0.0
  %112 = vmatprep.subr.mxu0 0.0
  %113 = vmatpush1.msra.mxu0 0.0
  %114 = vmatprep.subr.mxu0 0.0
  %115 = vmatpush1.msra.mxu0 0.0
  %116 = vmatprep.subr.mxu0 0.0
  %117 = vmatpush1.msra.mxu0 0.0
  %118 = vmatprep.subr.mxu0 0.0
  %119 = vmatpush1.msra.mxu0 0.0
  %120 = vmatprep.subr.mxu0 0.0
  %121 = vmatpush1.msra.mxu0 0.0
  %122 = vmatprep.subr.mxu0 0.0
  %123 = vmatpush1.msra.mxu0 0.0
  %124 = vmatprep.subr.mxu0 0.0
  %125 = vmatpush1.msra.mxu0 0.0
  %126 = vmatprep.subr.mxu0 0.0
  %127 = vmatpush1.msra.mxu0 0.0
  %128 = vmatprep.subr.mxu0 0.0
  %129 = vmatpush1.msra.mxu0 0.0
  %130 = vmatprep.subr.mxu0 0.0
  %131 = vmatpush1.msra.mxu0 0.0
  %132 = vmatprep.subr.mxu0 0.0
  %133 = vmatpush1.msra.mxu0 0.0
  %134 = vmatprep.subr.mxu0 0.0
  %135 = vmatpush1.msra.mxu0 0.0
  %136 = vmatprep.subr.mxu0 0.0
  %137 = vmatpush1.msra.mxu0 0.0
  %138 = vmatprep.subr.mxu0 0.0
  %139 = vmatpush1.msra.mxu0 0.0
  %140 = vmatprep.subr.mxu0 0.0
  %141 = vmatpush1.msra.mxu0 0.0
  %142 = vmatprep.subr.mxu0 0.0
  %143 = vmatpush1.msra.mxu0 0.0
  %144 = vmatprep.subr.mxu0 0.0
  %145 = vmatpush1.msra.mxu0 0.0
  %146 = vmatprep.subr.mxu0 0.0
  %147 = vmatpush1.msra.mxu0 0.0
  %148 = vmatprep.subr.mxu0 0.0
  %149 = vmatpush1.msra.mxu0 0.0
  %150 = vmatprep.subr.mxu0 0.0
  %151 = vmatpush1.msra.mxu0 0.0
  %152 = vmatprep.mubr.f32.mxu0 0.0
  %153 = vmatmul.mubr.f32.gmra.mrb[0].mxu0 %v86
  %v154 = vpop.f32.mrb[0].mxu0
  %v155 = vadd.f32 %v52, %v154
  %v156 = vpop.f32.mrb[0].mxu0
  %157 = vdwg.mxu0
  %vm158 = vcmask 122880
  %v159 = vsel %vm158, %v155, -inf
  %160 = vmax.xlane.f32.xlu0 %v159
  %v161 = vpop.xlane.xlu0 %160
  %v162 = vsub.f32 %v155, %v161
  %v163 = vmul.f32 %v162, 1.442695
  %v164 = vpow.pop %v163
  %v165 = vsel %vm158, %v164, 0.0
  %166 = vadd.xlane.f32.xlu0 %v165
  %v167 = vpop.xlane.xlu0 %166
  %v168 = vrcp.pop %v167
  %v169 = vmul.f32 %v164, %v168
  %vm170 = vcmask 130048
  %v172 = vsel %vm170, %v169, 0
  %174 = vmatprep.subr.mxu0 0.0
  %175 = vmatpush1.msra.mxu0 %v42
  %176 = vmatprep.subr.mxu0 0.0
  %177 = vmatpush1.msra.mxu0 %v43
  %178 = vmatprep.subr.mxu0 0.0
  %179 = vmatpush1.msra.mxu0 0.0
  %180 = vmatprep.subr.mxu0 0.0
  %181 = vmatpush1.msra.mxu0 0.0
  %182 = vmatprep.subr.mxu0 0.0
  %183 = vmatpush1.msra.mxu0 0.0
  %184 = vmatprep.subr.mxu0 0.0
  %185 = vmatpush1.msra.mxu0 0.0
  %186 = vmatprep.subr.mxu0 0.0
  %187 = vmatpush1.msra.mxu0 0.0
  %188 = vmatprep.subr.mxu0 0.0
  %189 = vmatpush1.msra.mxu0 0.0
  %190 = vmatprep.subr.mxu0 0.0
  %191 = vmatpush1.msra.mxu0 0.0
  %192 = vmatprep.subr.mxu0 0.0
  %193 = vmatpush1.msra.mxu0 0.0
  %194 = vmatprep.subr.mxu0 0.0
  %195 = vmatpush1.msra.mxu0 0.0
  %196 = vmatprep.subr.mxu0 0.0
  %197 = vmatpush1.msra.mxu0 0.0
  %198 = vmatprep.subr.mxu0 0.0
  %199 = vmatpush1.msra.mxu0 0.0
  %200 = vmatprep.subr.mxu0 0.0
  %201 = vmatpush1.msra.mxu0 0.0
  %202 = vmatprep.subr.mxu0 0.0
  %203 = vmatpush1.msra.mxu0 0.0
  %204 = vmatprep.subr.mxu0 0.0
  %205 = vmatpush1.msra.mxu0 0.0
  %206 = vmatprep.subr.mxu0 0.0
  %207 = vmatpush1.msra.mxu0 0.0
  %208 = vmatprep.subr.mxu0 0.0
  %209 = vmatpush1.msra.mxu0 0.0
  %210 = vmatprep.subr.mxu0 0.0
  %211 = vmatpush1.msra.mxu0 0.0
  %212 = vmatprep.subr.mxu0 0.0
  %213 = vmatpush1.msra.mxu0 0.0
  %214 = vmatprep.subr.mxu0 0.0
  %215 = vmatpush1.msra.mxu0 0.0
  %216 = vmatprep.subr.mxu0 0.0
  %217 = vmatpush1.msra.mxu0 0.0
  %218 = vmatprep.subr.mxu0 0.0
  %219 = vmatpush1.msra.mxu0 0.0
  %220 = vmatprep.subr.mxu0 0.0
  %221 = vmatpush1.msra.mxu0 0.0
  %222 = vmatprep.subr.mxu0 0.0
  %223 = vmatpush1.msra.mxu0 0.0
  %224 = vmatprep.subr.mxu0 0.0
  %225 = vmatpush1.msra.mxu0 0.0
  %226 = vmatprep.subr.mxu0 0.0
  %227 = vmatpush1.msra.mxu0 0.0
  %228 = vmatprep.subr.mxu0 0.0
  %229 = vmatpush1.msra.mxu0 0.0
  %230 = vmatprep.subr.mxu0 0.0
  %231 = vmatpush1.msra.mxu0 0.0
  %232 = vmatprep.subr.mxu0 0.0
  %233 = vmatpush1.msra.mxu0 0.0
  %234 = vmatprep.subr.mxu0 0.0
  %235 = vmatpush1.msra.mxu0 0.0
  %236 = vmatprep.subr.mxu0 0.0
  %237 = vmatpush1.msra.mxu0 0.0
  %238 = vmatprep.mubr.f32.mxu0 0.0
  %239 = vmatmul.mubr.f32.gmra.mrb[0].mxu0 %v172
  %v240 = vpop.f32.mrb[0].mxu0
  %v241 = vadd.f32 0.0, %v240
  %v242 = vpop.f32.mrb[0].mxu0
  %243 = vdwg.mxu0
  %245 = vrot.lane.b32.xlu0 %v241, 32
  %v246 = vpop.permute.xlu0 %245
  %v248 = vsel %vm82, %v73, %v246
  %v250 = vsel %vm84, %v248, 0
  %252 = vmatprep.subr.mxu0 0.0
  %253 = vmatpush1.msra.mxu0 %v53
  %254 = vmatprep.subr.mxu0 0.0
  %255 = vmatpush1.msra.mxu0 %v54
  %256 = vmatprep.subr.mxu0 0.0
  %257 = vmatpush1.msra.mxu0 %v55
  %258 = vmatprep.subr.mxu0 0.0
  %259 = vmatpush1.msra.mxu0 %v56
  %260 = vmatprep.subr.mxu0 0.0
  %261 = vmatpush1.msra.mxu0 %v57
  %262 = vmatprep.subr.mxu0 0.0
  %263 = vmatpush1.msra.mxu0 %v58
  %264 = vmatprep.subr.mxu0 0.0
  %265 = vmatpush1.msra.mxu0 %v59
  %266 = vmatprep.subr.mxu0 0.0
  %267 = vmatpush1.msra.mxu0 %v60
  %268 = vmatprep.subr.mxu0 0.0
  %269 = vmatpush1.msra.mxu0 0.0
  %270 = vmatprep.subr.mxu0 0.0
  %271 = vmatpush1.msra.mxu0 0.0
  %272 = vmatprep.subr.mxu0 0.0
  %273 = vmatpush1.msra.mxu0 0.0
  %274 = vmatprep.subr.mxu0 0.0
  %275 = vmatpush1.msra.mxu0 0.0
  %276 = vmatprep.subr.mxu0 0.0
  %277 = vmatpush1.msra.mxu0 0.0
  %278 = vmatprep.subr.mxu0 0.0
  %279 = vmatpush1.msra.mxu0 0.0
  %280 = vmatprep.subr.mxu0 0.0
  %281 = vmatpush1.msra.mxu0 0.0
  %282 = vmatprep.subr.mxu0 0.0
  %283 = vmatpush1.msra.mxu0 0.0
  %284 = vmatprep.subr.mxu0 0.0
  %285 = vmatpush1.msra.mxu0 0.0
  %286 = vmatprep.subr.mxu0 0.0
  %287 = vmatpush1.msra.mxu0 0.0
  %288 = vmatprep.subr.mxu0 0.0
  %289 = vmatpush1.msra.mxu0 0.0
  %290 = vmatprep.subr.mxu0 0.0
  %291 = vmatpush1.msra.mxu0 0.0
  %292 = vmatprep.subr.mxu0 0.0
  %293 = vmatpush1.msra.mxu0 0.0
  %294 = vmatprep.subr.mxu0 0.0
  %295 = vmatpush1.msra.mxu0 0.0
  %296 = vmatprep.subr.mxu0 0.0
  %297 = vmatpush1.msra.mxu0 0.0
  %298 = vmatprep.subr.mxu0 0.0
  %299 = vmatpush1.msra.mxu0 0.0
  %300 = vmatprep.subr.mxu0 0.0
  %301 = vmatpush1.msra.mxu0 0.0
  %302 = vmatprep.subr.mxu0 0.0
  %303 = vmatpush1.msra.mxu0 0.0
  %304 = vmatprep.subr.mxu0 0.0
  %305 = vmatpush1.msra.mxu0 0.0
  %306 = vmatprep.subr.mxu0 0.0
  %307 = vmatpush1.msra.mxu0 0.0
  %308 = vmatprep.subr.mxu0 0.0
  %309 = vmatpush1.msra.mxu0 0.0
  %310 = vmatprep.subr.mxu0 0.0
  %311 = vmatpush1.msra.mxu0 0.0
  %312 = vmatprep.subr.mxu0 0.0
  %313 = vmatpush1.msra.mxu0 0.0
  %314 = vmatprep.subr.mxu0 0.0
  %315 = vmatpush1.msra.mxu0 0.0
  %316 = vmatprep.mubr.f32.mxu0 0.0
  %317 = vmatmul.mubr.f32.gmra.mrb[0].mxu0 %v250
  %v318 = vpop.f32.mrb[0].mxu0
  %v319 = vadd.f32 %v61, %v318
  %v320 = vpop.f32.mrb[0].mxu0
  %321 = vdwg.mxu0
  %v322 = vmax.f32 %v319, 0.0
  %v323 = vsel %vm82, %v322, %v80
  %v325 = vsel %vm84, %v323, 0
  %327 = vmatprep.subr.mxu0 0.0
  %328 = vmatpush1.msra.mxu0 %v62
  %329 = vmatprep.subr.mxu0 0.0
  %330 = vmatpush1.msra.mxu0 %v63
  %331 = vmatprep.subr.mxu0 0.0
  %332 = vmatpush1.msra.mxu0 %v64
  %333 = vmatprep.subr.mxu0 0.0
  %334 = vmatpush1.msra.mxu0 %v65
  %335 = vmatprep.subr.mxu0 0.0
  %336 = vmatpush1.msra.mxu0 %v66
  %337 = vmatprep.subr.mxu0 0.0
  %338 = vmatpush1.msra.mxu0 %v67
  %339 = vmatprep.subr.mxu0 0.0
  %340 = vmatpush1.msra.mxu0 %v68
  %341 = vmatprep.subr.mxu0 0.0
  %342 = vmatpush1.msra.mxu0 %v69
  %343 = vmatprep.subr.mxu0 0.0
  %344 = vmatpush1.msra.mxu0 0.0
  %345 = vmatprep.subr.mxu0 0.0
  %346 = vmatpush1.msra.mxu0 0.0
  %347 = vmatprep.subr.mxu0 0.0
  %348 = vmatpush1.msra.mxu0 0.0
  %349 = vmatprep.subr.mxu0 0.0
  %350 = vmatpush1.msra.mxu0 0.0
  %351 = vmatprep.subr.mxu0 0.0
  %352 = vmatpush1.msra.mxu0 0.0
  %353 = vmatprep.subr.mxu0 0.0
  %354 = vmatpush1.msra.mxu0 0.0
  %355 = vmatprep.subr.mxu0 0.0
  %356 = vmatpush1.msra.mxu0 0.0
  %357 = vmatprep.subr.mxu0 0.0
  %358 = vmatpush1.msra.mxu0 0.0
  %359 = vmatprep.subr.mxu0 0.0
  %360 = vmatpush1.msra.mxu0 0.0
  %361 = vmatprep.subr.mxu0 0.0
  %362 = vmatpush1.msra.mxu0 0.0
  %363 = vmatprep.subr.mxu0 0.0
  %364 = vmatpush1.msra.mxu0 0.0
  %365 = vmatprep.subr.mxu0 0.0
  %366 = vmatpush1.msra.mxu0 0.0
  %367 = vmatprep.subr.mxu0 0.0
  %368 = vmatpush1.msra.mxu0 0.0
  %369 = vmatprep.subr.mxu0 0.0
  %370 = vmatpush1.msra.mxu0 0.0
  %371 = vmatprep.subr.mxu0 0.0
  %372 = vmatpush1.msra.mxu0 0.0
  %373 = vmatprep.subr.mxu0 0.0
  %374 = vmatpush1.msra.mxu0 0.0
  %375 = vmatprep.subr.mxu0 0.0
  %376 = vmatpush1.msra.mxu0 0.0
  %377 = vmatprep.subr.mxu0 0.0
  %378 = vmatpush1.msra.mxu0 0.0
  %379 = vmatprep.subr.mxu0 0.0
  %380 = vmatpush1.msra.mxu0 0.0
  %381 = vmatprep.subr.mxu0 0.0
  %382 = vmatpush1.msra.mxu0 0.0
  %383 = vmatprep.subr.mxu0 0.0
  %384 = vmatpush1.msra.mxu0 0.0
  %385 = vmatprep.subr.mxu0 0.0
  %386 = vmatpush1.msra.mxu0 0.0
  %387 = vmatprep.subr.mxu0 0.0
  %388 = vmatpush1.msra.mxu0 0.0
  %389 = vmatprep.subr.mxu0 0.0
  %390 = vmatpush1.msra.mxu0 0.0
  %391 = vmatprep.mubr.f32.mxu0 0.0
  %392 = vmatmul.mubr.f32.gmra.mrb[0].mxu0 %v325
  %v393 = vpop.f32.mrb[0].mxu0
  %v394 = vadd.f32 %v70, %v393
  %v395 = vpop.f32.mrb[0].mxu0
  %396 = vdwg.mxu0
  %v397 = vxor.u32 %v394, 2147483648
  %v398 = vmul.f32 %v397, 1.442695
  %v399 = vpow.pop %v398
  %v400 = vadd.f32 %v399, 1.0
  %v401 = vrcp.pop %v400
  %v402 = vmul.f32 1.0, %v401
  %v403 = vtanh.pop %v394
  %v405 = vlaneseq
  %v406 = vshrl.u32 %v405, 7
  %v407 = vsub.s32 0, %v406
  %v408 = vrot.slane %v72, %v407
  %409 = vrot.lane.b32.xlu0 %v408, 32
  %v410 = vpop.permute.xlu0 %409
  %v412 = vmul.f32 %v402, %v410
  %414 = vrot.lane.b32.xlu0 %v403, 64
  %v415 = vpop.permute.xlu0 %414
  %v417 = vmul.f32 %v402, %v415
  %419 = vrot.lane.b32.xlu0 %v417, 32
  %v420 = vpop.permute.xlu0 %419
  %v422 = vadd.f32 %v412, %v420
  %v423 = vtanh.pop %v422
  %425 = vrot.lane.b32.xlu0 %v423, 64
  %v426 = vpop.permute.xlu0 %425
  %v428 = vmul.f32 %v402, %v426
  %430 = vrot.lane.b32.xlu0 %v428, 64
  %v431 = vpop.permute.xlu0 %430
  %vm433 = vcmask 516352
  %434 = vst.msk [vmem:[%s12] sm:$0x1] %vm433, %v431
  %436 = vrot.lane.b32.xlu0 %v422, 32
  %v437 = vpop.permute.xlu0 %436
  %vm439 = vcmask 778752
  %440 = vst.msk [vmem:[%s12] sm:$0x1] %vm439, %v437
  %441 = vrot.lane.b32.xlu0 %v169, 96
  %v442 = vpop.permute.xlu0 %441
  %vm444 = vcmask 910080
  %445 = vst.msk [vmem:[%s12] sm:$0x1] %vm444, %v442
  %v446 = vld [vmem:[%s0 + $0x1] sm:$0x1]
  %v447 = vsel %vm82, %v446, %v431
  %v449 = vsel %vm84, %v447, 0
  %451 = vmatprep.subr.mxu0 0.0
  %452 = vmatpush1.msra.mxu0 %v44
  %453 = vmatprep.subr.mxu0 0.0
  %454 = vmatpush1.msra.mxu0 %v45
  %455 = vmatprep.subr.mxu0 0.0
  %456 = vmatpush1.msra.mxu0 %v46
  %457 = vmatprep.subr.mxu0 0.0
  %458 = vmatpush1.msra.mxu0 %v47
  %459 = vmatprep.subr.mxu0 0.0
  %460 = vmatpush1.msra.mxu0 %v48
  %461 = vmatprep.subr.mxu0 0.0
  %462 = vmatpush1.msra.mxu0 %v49
  %463 = vmatprep.subr.mxu0 0.0
  %464 = vmatpush1.msra.mxu0 %v50
  %465 = vmatprep.subr.mxu0 0.0
  %466 = vmatpush1.msra.mxu0 %v51
  %467 = vmatprep.subr.mxu0 0.0
  %468 = vmatpush1.msra.mxu0 0.0
  %469 = vmatprep.subr.mxu0 0.0
  %470 = vmatpush1.msra.mxu0 0.0
  %471 = vmatprep.subr.mxu0 0.0
  %472 = vmatpush1.msra.mxu0 0.0
  %473 = vmatprep.subr.mxu0 0.0
  %474 = vmatpush1.msra.mxu0 0.0
  %475 = vmatprep.subr.mxu0 0.0
  %476 = vmatpush1.msra.mxu0 0.0
  %477 = vmatprep.subr.mxu0 0.0
  %478 = vmatpush1.msra.mxu0 0.0
  %479 = vmatprep.subr.mxu0 0.0
  %480 = vmatpush1.msra.mxu0 0.0
  %481 = vmatprep.subr.mxu0 0.0
  %482 = vmatpush1.msra.mxu0 0.0
  %483 = vmatprep.subr.mxu0 0.0
  %484 = vmatpush1.msra.mxu0 0.0
  %485 = vmatprep.subr.mxu0 0.0
  %486 = vmatpush1.msra.mxu0 0.0
  %487 = vmatprep.subr.mxu0 0.0
  %488 = vmatpush1.msra.mxu0 0.0
  %489 = vmatprep.subr.mxu0 0.0
  %490 = vmatpush1.msra.mxu0 0.0
  %491 = vmatprep.subr.mxu0 0.0
  %492 = vmatpush1.msra.mxu0 0.0
  %493 = vmatprep.subr.mxu0 0.0
  %494 = vmatpush1.msra.mxu0 0.0
  %495 = vmatprep.subr.mxu0 0.0
  %496 = vmatpush1.msra.mxu0 0.0
  %497 = vmatprep.subr.mxu0 0.0
  %498 = vmatpush1.msra.mxu0 0.0
  %499 = vmatprep.subr.mxu0 0.0
  %500 = vmatpush1.msra.mxu0 0.0
  %501 = vmatprep.subr.mxu0 0.0
  %502 = vmatpush1.msra.mxu0 0.0
  %503 = vmatprep.subr.mxu0 0.0
  %504 = vmatpush1.msra.mxu0 0.0
  %505 = vmatprep.subr.mxu0 0.0
  %506 = vmatpush1.msra.mxu0 0.0
  %507 = vmatprep.subr.mxu0 0.0
  %508 = vmatpush1.msra.mxu0 0.0
  %509 = vmatprep.subr.mxu0 0.0
  %510 = vmatpush1.msra.mxu0 0.0
  %511 = vmatprep.subr.mxu0 0.0
  %512 = vmatpush1.msra.mxu0 0.0
  %513 = vmatprep.subr.mxu0 0.0
  %514 = vmatpush1.msra.mxu0 0.0
  %515 = vmatprep.mubr.f32.mxu0 0.0
  %516 = vmatmul.mubr.f32.gmra.mrb[0].mxu0 %v449
  %v517 = vpop.f32.mrb[0].mxu0
  %v518 = vadd.f32 %v52, %v517
  %v519 = vpop.f32.mrb[0].mxu0
  %520 = vdwg.mxu0
  %v521 = vsel %vm158, %v518, -inf
  %522 = vmax.xlane.f32.xlu0 %v521
  %v523 = vpop.xlane.xlu0 %522
  %v524 = vsub.f32 %v518, %v523
  %v525 = vmul.f32 %v524, 1.442695
  %v526 = vpow.pop %v525
  %v527 = vsel %vm158, %v526, 0.0
  %528 = vadd.xlane.f32.xlu0 %v527
  %v529 = vpop.xlane.xlu0 %528
  %v530 = vrcp.pop %v529
  %v531 = vmul.f32 %v526, %v530
  %v533 = vsel %vm170, %v531, 0
  %535 = vmatprep.subr.mxu0 0.0
  %536 = vmatpush1.msra.mxu0 %v42
  %537 = vmatprep.subr.mxu0 0.0
  %538 = vmatpush1.msra.mxu0 %v43
  %539 = vmatprep.subr.mxu0 0.0
  %540 = vmatpush1.msra.mxu0 0.0
  %541 = vmatprep.subr.mxu0 0.0
  %542 = vmatpush1.msra.mxu0 0.0
  %543 = vmatprep.subr.mxu0 0.0
  %544 = vmatpush1.msra.mxu0 0.0
  %545 = vmatprep.subr.mxu0 0.0
  %546 = vmatpush1.msra.mxu0 0.0
  %547 = vmatprep.subr.mxu0 0.0
  %548 = vmatpush1.msra.mxu0 0.0
  %549 = vmatprep.subr.mxu0 0.0
  %550 = vmatpush1.msra.mxu0 0.0
  %551 = vmatprep.subr.mxu0 0.0
  %552 = vmatpush1.msra.mxu0 0.0
  %553 = vmatprep.subr.mxu0 0.0
  %554 = vmatpush1.msra.mxu0 0.0
  %555 = vmatprep.subr.mxu0 0.0
  %556 = vmatpush1.msra.mxu0 0.0
  %557 = vmatprep.subr.mxu0 0.0
  %558 = vmatpush1.msra.mxu0 0.0
  %559 = vmatprep.subr.mxu0 0.0
  %560 = vmatpush1.msra.mxu0 0.0
  %561 = vmatprep.subr.mxu0 0.0
  %562 = vmatpush1.msra.mxu0 0.0
  %563 = vmatprep.subr.mxu0 0.0
  %564 = vmatpush1.msra.mxu0 0.0
  %565 = vmatprep.subr.mxu0 0.0
  %566 = vmatpush1.msra.mxu0 0.0
  %567 = vmatprep.subr.mxu0 0.0
  %568 = vmatpush1.msra.mxu0 0.0
  %569 = vmatprep.subr.mxu0 0.0
  %570 = vmatpush1.msra.mxu0 0.0
  %571 = vmatprep.subr.mxu0 0.0
  %572 = vmatpush1.msra.mxu0 0.0
  %573 = vmatprep.subr.mxu0 0.0
  %574 = vmatpush1.msra.mxu0 0.0
  %575 = vmatprep.subr.mxu0 0.0
  %576 = vmatpush1.msra.mxu0 0.0
  %577 = vmatprep.subr.mxu0 0.0
  %578 = vmatpush1.msra.mxu0 0.0
  %579 = vmatprep.subr.mxu0 0.0
  %580 = vmatpush1.msra.mxu0 0.0
  %581 = vmatprep.subr.mxu0 0.0
  %582 = vmatpush1.msra.mxu0 0.0
  %583 = vmatprep.subr.mxu0 0.0
  %584 = vmatpush1.msra.mxu0 0.0
  %585 = vmatprep.subr.mxu0 0.0
  %586 = vmatpush1.msra.mxu0 0.0
  %587 = vmatprep.subr.mxu0 0.0
  %588 = vmatpush1.msra.mxu0 0.0
  %589 = vmatprep.subr.mxu0 0.0
  %590 = vmatpush1.msra.mxu0 0.0
  %591 = vmatprep.subr.mxu0 0.0
  %592 = vmatpush1.msra.mxu0 0.0
  %593 = vmatprep.subr.mxu0 0.0
  %594 = vmatpush1.msra.mxu0 0.0
  %595 = vmatprep.subr.mxu0 0.0
  %596 = vmatpush1.msra.mxu0 0.0
  %597 = vmatprep.subr.mxu0 0.0
  %598 = vmatpush1.msra.mxu0 0.0
  %599 = vmatprep.mubr.f32.mxu0 0.0
  %600 = vmatmul.mubr.f32.gmra.mrb[0].mxu0 %v533
  %v601 = vpop.f32.mrb[0].mxu0
  %v602 = vadd.f32 0.0, %v601
  %v603 = vpop.f32.mrb[0].mxu0
  %604 = vdwg.mxu0
  %606 = vrot.lane.b32.xlu0 %v602, 32
  %v607 = vpop.permute.xlu0 %606
  %v609 = vsel %vm82, %v446, %v607
  %v611 = vsel %vm84, %v609, 0
  %613 = vmatprep.subr.mxu0 0.0
  %614 = vmatpush1.msra.mxu0 %v53
  %615 = vmatprep.subr.mxu0 0.0
  %616 = vmatpush1.msra.mxu0 %v54
  %617 = vmatprep.subr.mxu0 0.0
  %618 = vmatpush1.msra.mxu0 %v55
  %619 = vmatprep.subr.mxu0 0.0
  %620 = vmatpush1.msra.mxu0 %v56
  %621 = vmatprep.subr.mxu0 0.0
  %622 = vmatpush1.msra.mxu0 %v57
  %623 = vmatprep.subr.mxu0 0.0
  %624 = vmatpush1.msra.mxu0 %v58
  %625 = vmatprep.subr.mxu0 0.0
  %626 = vmatpush1.msra.mxu0 %v59
  %627 = vmatprep.subr.mxu0 0.0
  %628 = vmatpush1.msra.mxu0 %v60
  %629 = vmatprep.subr.mxu0 0.0
  %630 = vmatpush1.msra.mxu0 0.0
  %631 = vmatprep.subr.mxu0 0.0
  %632 = vmatpush1.msra.mxu0 0.0
  %633 = vmatprep.subr.mxu0 0.0
  %634 = vmatpush1.msra.mxu0 0.0
  %635 = vmatprep.subr.mxu0 0.0
  %636 = vmatpush1.msra.mxu0 0.0
  %637 = vmatprep.subr.mxu0 0.0
  %638 = vmatpush1.msra.mxu0 0.0
  %639 = vmatprep.subr.mxu0 0.0
  %640 = vmatpush1.msra.mxu0 0.0
  %641 = vmatprep.subr.mxu0 0.0
  %642 = vmatpush1.msra.mxu0 0.0
  %643 = vmatprep.subr.mxu0 0.0
  %644 = vmatpush1.msra.mxu0 0.0
  %645 = vmatprep.subr.mxu0 0.0
  %646 = vmatpush1.msra.mxu0 0.0
  %647 = vmatprep.subr.mxu0 0.0
  %648 = vmatpush1.msra.mxu0 0.0
  %649 = vmatprep.subr.mxu0 0.0
  %650 = vmatpush1.msra.mxu0 0.0
  %651 = vmatprep.subr.mxu0 0.0
  %652 = vmatpush1.msra.mxu0 0.0
  %653 = vmatprep.subr.mxu0 0.0
  %654 = vmatpush1.msra.mxu0 0.0
  %655 = vmatprep.subr.mxu0 0.0
  %656 = vmatpush1.msra.mxu0 0.0
  %657 = vmatprep.subr.mxu0 0.0
  %658 = vmatpush1.msra.mxu0 0.0
  %659 = vmatprep.subr.mxu0 0.0
  %660 = vmatpush1.msra.mxu0 0.0
  %661 = vmatprep.subr.mxu0 0.0
  %662 = vmatpush1.msra.mxu0 0.0
  %663 = vmatprep.subr.mxu0 0.0
  %664 = vmatpush1.msra.mxu0 0.0
  %665 = vmatprep.subr.mxu0 0.0
  %666 = vmatpush1.msra.mxu0 0.0
  %667 = vmatprep.subr.mxu0 0.0
  %668 = vmatpush1.msra.mxu0 0.0
  %669 = vmatprep.subr.mxu0 0.0
  %670 = vmatpush1.msra.mxu0 0.0
  %671 = vmatprep.subr.mxu0 0.0
  %672 = vmatpush1.msra.mxu0 0.0
  %673 = vmatprep.subr.mxu0 0.0
  %674 = vmatpush1.msra.mxu0 0.0
  %675 = vmatprep.subr.mxu0 0.0
  %676 = vmatpush1.msra.mxu0 0.0
  %677 = vmatprep.mubr.f32.mxu0 0.0
  %678 = vmatmul.mubr.f32.gmra.mrb[0].mxu0 %v611
  %v679 = vpop.f32.mrb[0].mxu0
  %v680 = vadd.f32 %v61, %v679
  %v681 = vpop.f32.mrb[0].mxu0
  %682 = vdwg.mxu0
  %v683 = vmax.f32 %v680, 0.0
  %v684 = vsel %vm82, %v683, %v431
  %v686 = vsel %vm84, %v684, 0
  %688 = vmatprep.subr.mxu0 0.0
  %689 = vmatpush1.msra.mxu0 %v62
  %690 = vmatprep.subr.mxu0 0.0
  %691 = vmatpush1.msra.mxu0 %v63
  %692 = vmatprep.subr.mxu0 0.0
  %693 = vmatpush1.msra.mxu0 %v64
  %694 = vmatprep.subr.mxu0 0.0
  %695 = vmatpush1.msra.mxu0 %v65
  %696 = vmatprep.subr.mxu0 0.0
  %697 = vmatpush1.msra.mxu0 %v66
  %698 = vmatprep.subr.mxu0 0.0
  %699 = vmatpush1.msra.mxu0 %v67
  %700 = vmatprep.subr.mxu0 0.0
  %701 = vmatpush1.msra.mxu0 %v68
  %702 = vmatprep.subr.mxu0 0.0
  %703 = vmatpush1.msra.mxu0 %v69
  %704 = vmatprep.subr.mxu0 0.0
  %705 = vmatpush1.msra.mxu0 0.0
  %706 = vmatprep.subr.mxu0 0.0
  %707 = vmatpush1.msra.mxu0 0.0
  %708 = vmatprep.subr.mxu0 0.0
  %709 = vmatpush1.msra.mxu0 0.0
  %710 = vmatprep.subr.mxu0 0.0
  %711 = vmatpush1.msra.mxu0 0.0
  %712 = vmatprep.subr.mxu0 0.0
  %713 = vmatpush1.msra.mxu0 0.0
  %714 = vmatprep.subr.mxu0 0.0
  %715 = vmatpush1.msra.mxu0 0.0
  %716 = vmatprep.subr.mxu0 0.0
  %717 = vmatpush1.msra.mxu0 0.0
  %718 = vmatprep.subr.mxu0 0.0
  %719 = vmatpush1.msra.mxu0 0.0
  %720 = vmatprep.subr.mxu0 0.0
  %721 = vmatpush1.msra.mxu0 0.0
  %722 = vmatprep.subr.mxu0 0.0
  %723 = vmatpush1.msra.mxu0 0.0
  %724 = vmatprep.subr.mxu0 0.0
  %725 = vmatpush1.msra.mxu0 0.0
  %726 = vmatprep.subr.mxu0 0.0
  %727 = vmatpush1.msra.mxu0 0.0
  %728 = vmatprep.subr.mxu0 0.0
  %729 = vmatpush1.msra.mxu0 0.0
  %730 = vmatprep.subr.mxu0 0.0
  %731 = vmatpush1.msra.mxu0 0.0
  %732 = vmatprep.subr.mxu0 0.0
  %733 = vmatpush1.msra.mxu0 0.0
  %734 = vmatprep.subr.mxu0 0.0
  %735 = vmatpush1.msra.mxu0 0.0
  %736 = vmatprep.subr.mxu0 0.0
  %737 = vmatpush1.msra.mxu0 0.0
  %738 = vmatprep.subr.mxu0 0.0
  %739 = vmatpush1.msra.mxu0 0.0
  %740 = vmatprep.subr.mxu0 0.0
  %741 = vmatpush1.msra.mxu0 0.0
  %742 = vmatprep.subr.mxu0 0.0
  %743 = vmatpush1.msra.mxu0 0.0
  %744 = vmatprep.subr.mxu0 0.0
  %745 = vmatpush1.msra.mxu0 0.0
  %746 = vmatprep.subr.mxu0 0.0
  %747 = vmatpush1.msra.mxu0 0.0
  %748 = vmatprep.subr.mxu0 0.0
  %749 = vmatpush1.msra.mxu0 0.0
  %750 = vmatprep.subr.mxu0 0.0
  %751 = vmatpush1.msra.mxu0 0.0
  %752 = vmatprep.mubr.f32.mxu0 0.0
  %753 = vmatmul.mubr.f32.gmra.mrb[0].mxu0 %v686
  %v754 = vpop.f32.mrb[0].mxu0
  %v755 = vadd.f32 %v70, %v754
  %v756 = vpop.f32.mrb[0].mxu0
  %757 = vdwg.mxu0
  %v758 = vxor.u32 %v755, 2147483648
  %v759 = vmul.f32 %v758, 1.442695
  %v760 = vpow.pop %v759
  %v761 = vadd.f32 %v760, 1.0
  %v762 = vrcp.pop %v761
  %v763 = vmul.f32 1.0, %v762
  %v764 = vtanh.pop %v755
  %v765 = vmul.f32 %v763, %v422
  %767 = vrot.lane.b32.xlu0 %v764, 64
  %v768 = vpop.permute.xlu0 %767
  %v770 = vmul.f32 %v763, %v768
  %772 = vrot.lane.b32.xlu0 %v770, 32
  %v773 = vpop.permute.xlu0 %772
  %v775 = vadd.f32 %v765, %v773
  %v776 = vtanh.pop %v775
  %778 = vrot.lane.b32.xlu0 %v776, 64
  %v779 = vpop.permute.xlu0 %778
  %v781 = vmul.f32 %v763, %v779
  %783 = vrot.lane.b32.xlu0 %v781, 64
  %v784 = vpop.permute.xlu0 %783
  %786 = vst.msk [vmem:[%s12 + $0x1] sm:$0x1] %vm433, %v784
  %788 = vrot.lane.b32.xlu0 %v775, 32
  %v789 = vpop.permute.xlu0 %788
  %791 = vst.msk [vmem:[%s12 + $0x1] sm:$0x1] %vm439, %v789
  %792 = vrot.lane.b32.xlu0 %v531, 96
  %v793 = vpop.permute.xlu0 %792
  %795 = vst.msk [vmem:[%s12 + $0x1] sm:$0x1] %vm444, %v793
  %v796 = vld [vmem:[%s0 + $0x2] sm:$0x1]
  %v797 = vsel %vm82, %v796, %v784
  %v799 = vsel %vm84, %v797, 0
  %801 = vmatprep.subr.mxu0 0.0
  %802 = vmatpush1.msra.mxu0 %v44
  %803 = vmatprep.subr.mxu0 0.0
  %804 = vmatpush1.msra.mxu0 %v45
  %805 = vmatprep.subr.mxu0 0.0
  %806 = vmatpush1.msra.mxu0 %v46
  %807 = vmatprep.subr.mxu0 0.0
  %808 = vmatpush1.msra.mxu0 %v47
  %809 = vmatprep.subr.mxu0 0.0
  %810 = vmatpush1.msra.mxu0 %v48
  %811 = vmatprep.subr.mxu0 0.0
  %812 = vmatpush1.msra.mxu0 %v49
  %813 = vmatprep.subr.mxu0 0.0
  %814 = vmatpush1.msra.mxu0 %v50
  %815 = vmatprep.subr.mxu0 0.0
  %816 = vmatpush1.msra.mxu0 %v51
  %817 = vmatprep.subr.mxu0 0.0
  %818 = vmatpush1.msra.mxu0 0.0
  %819 = vmatprep.subr.mxu0 0.0
  %820 = vmatpush1.msra.mxu0 0.0
  %821 = vmatprep.subr.mxu0 0.0
  %822 = vmatpush1.msra.mxu0 0.0
  %823 = vmatprep.subr.mxu0 0.0
  %824 = vmatpush1.msra.mxu0 0.0
  %825 = vmatprep.subr.mxu0 0.0
  %826 = vmatpush1.msra.mxu0 0.0
  %827 = vmatprep.subr.mxu0 0.0
  %828 = vmatpush1.msra.mxu0 0.0
  %829 = vmatprep.subr.mxu0 0.0
  %830 = vmatpush1.msra.mxu0 0.0
  %831 = vmatprep.subr.mxu0 0.0
  %832 = vmatpush1.msra.mxu0 0.0
  %833 = vmatprep.subr.mxu0 0.0
  %834 = vmatpush1.msra.mxu0 0.0
  %835 = vmatprep.subr.mxu0 0.0
  %836 = vmatpush1.msra.mxu0 0.0
  %837 = vmatprep.subr.mxu0 0.0
  %838 = vmatpush1.msra.mxu0 0.0
  %839 = vmatprep.subr.mxu0 0.0
  %840 = vmatpush1.msra.mxu0 0.0
  %841 = vmatprep.subr.mxu0 0.0
  %842 = vmatpush1.msra.mxu0 0.0
  %843 = vmatprep.subr.mxu0 0.0
  %844 = vmatpush1.msra.mxu0 0.0
  %845 = vmatprep.subr.mxu0 0.0
  %846 = vmatpush1.msra.mxu0 0.0
  %847 = vmatprep.subr.mxu0 0.0
  %848 = vmatpush1.msra.mxu0 0.0
  %849 = vmatprep.subr.mxu0 0.0
  %850 = vmatpush1.msra.mxu0 0.0
  %851 = vmatprep.subr.mxu0 0.0
  %852 = vmatpush1.msra.mxu0 0.0
  %853 = vmatprep.subr.mxu0 0.0
  %854 = vmatpush1.msra.mxu0 0.0
  %855 = vmatprep.subr.mxu0 0.0
  %856 = vmatpush1.msra.mxu0 0.0
  %857 = vmatprep.subr.mxu0 0.0
  %858 = vmatpush1.msra.mxu0 0.0
  %859 = vmatprep.subr.mxu0 0.0
  %860 = vmatpush1.msra.mxu0 0.0
  %861 = vmatprep.subr.mxu0 0.0
  %862 = vmatpush1.msra.mxu0 0.0
  %863 = vmatprep.subr.mxu0 0.0
  %864 = vmatpush1.msra.mxu0 0.0
  %865 = vmatprep.mubr.f32.mxu0 0.0
  %866 = vmatmul.mubr.f32.gmra.mrb[0].mxu0 %v799
  %v867 = vpop.f32.mrb[0].mxu0
  %v868 = vadd.f32 %v52, %v867
  %v869 = vpop.f32.mrb[0].mxu0
  %870 = vdwg.mxu0
  %v871 = vsel %vm158, %v868, -inf
  %872 = vmax.xlane.f32.xlu0 %v871
  %v873 = vpop.xlane.xlu0 %872
  %v874 = vsub.f32 %v868, %v873
  %v875 = vmul.f32 %v874, 1.442695
  %v876 = vpow.pop %v875
  %v877 = vsel %vm158, %v876, 0.0
  %878 = vadd.xlane.f32.xlu0 %v877
  %v879 = vpop.xlane.xlu0 %878
  %v880 = vrcp.pop %v879
  %v881 = vmul.f32 %v876, %v880
  %v883 = vsel %vm170, %v881, 0
  %885 = vmatprep.subr.mxu0 0.0
  %886 = vmatpush1.msra.mxu0 %v42
  %887 = vmatprep.subr.mxu0 0.0
  %888 = vmatpush1.msra.mxu0 %v43
  %889 = vmatprep.subr.mxu0 0.0
  %890 = vmatpush1.msra.mxu0 0.0
  %891 = vmatprep.subr.mxu0 0.0
  %892 = vmatpush1.msra.mxu0 0.0
  %893 = vmatprep.subr.mxu0 0.0
  %894 = vmatpush1.msra.mxu0 0.0
  %895 = vmatprep.subr.mxu0 0.0
  %896 = vmatpush1.msra.mxu0 0.0
  %897 = vmatprep.subr.mxu0 0.0
  %898 = vmatpush1.msra.mxu0 0.0
  %899 = vmatprep.subr.mxu0 0.0
  %900 = vmatpush1.msra.mxu0 0.0
  %901 = vmatprep.subr.mxu0 0.0
  %902 = vmatpush1.msra.mxu0 0.0
  %903 = vmatprep.subr.mxu0 0.0
  %904 = vmatpush1.msra.mxu0 0.0
  %905 = vmatprep.subr.mxu0 0.0
  %906 = vmatpush1.msra.mxu0 0.0
  %907 = vmatprep.subr.mxu0 0.0
  %908 = vmatpush1.msra.mxu0 0.0
  %909 = vmatprep.subr.mxu0 0.0
  %910 = vmatpush1.msra.mxu0 0.0
  %911 = vmatprep.subr.mxu0 0.0
  %912 = vmatpush1.msra.mxu0 0.0
  %913 = vmatprep.subr.mxu0 0.0
  %914 = vmatpush1.msra.mxu0 0.0
  %915 = vmatprep.subr.mxu0 0.0
  %916 = vmatpush1.msra.mxu0 0.0
  %917 = vmatprep.subr.mxu0 0.0
  %918 = vmatpush1.msra.mxu0 0.0
  %919 = vmatprep.subr.mxu0 0.0
  %920 = vmatpush1.msra.mxu0 0.0
  %921 = vmatprep.subr.mxu0 0.0
  %922 = vmatpush1.msra.mxu0 0.0
  %923 = vmatprep.subr.mxu0 0.0
  %924 = vmatpush1.msra.mxu0 0.0
  %925 = vmatprep.subr.mxu0 0.0
  %926 = vmatpush1.msra.mxu0 0.0
  %927 = vmatprep.subr.mxu0 0.0
  %928 = vmatpush1.msra.mxu0 0.0
  %929 = vmatprep.subr.mxu0 0.0
  %930 = vmatpush1.msra.mxu0 0.0
  %931 = vmatprep.subr.mxu0 0.0
  %932 = vmatpush1.msra.mxu0 0.0
  %933 = vmatprep.subr.mxu0 0.0
  %934 = vmatpush1.msra.mxu0 0.0
  %935 = vmatprep.subr.mxu0 0.0
  %936 = vmatpush1.msra.mxu0 0.0
  %937 = vmatprep.subr.mxu0 0.0
  %938 = vmatpush1.msra.mxu0 0.0
  %939 = vmatprep.subr.mxu0 0.0
  %940 = vmatpush1.msra.mxu0 0.0
  %941 = vmatprep.subr.mxu0 0.0
  %942 = vmatpush1.msra.mxu0 0.0
  %943 = vmatprep.subr.mxu0 0.0
  %944 = vmatpush1.msra.mxu0 0.0
  %945 = vmatprep.subr.mxu0 0.0
  %946 = vmatpush1.msra.mxu0 0.0
  %947 = vmatprep.subr.mxu0 0.0
  %948 = vmatpush1.msra.mxu0 0.0
  %949 = vmatprep.mubr.f32.mxu0 0.0
  %950 = vmatmul.mubr.f32.gmra.mrb[0].mxu0 %v883
  %v951 = vpop.f32.mrb[0].mxu0
  %v952 = vadd.f32 0.0, %v951
  %v953 = vpop.f32.mrb[0].mxu0
  %954 = vdwg.mxu0
  %956 = vrot.lane.b32.xlu0 %v952, 32
  %v957 = vpop.permute.xlu0 %956
  %v959 = vsel %vm82, %v796, %v957
  %v961 = vsel %vm84, %v959, 0
  %963 = vmatprep.subr.mxu0 0.0
  %964 = vmatpush1.msra.mxu0 %v53
  %965 = vmatprep.subr.mxu0 0.0
  %966 = vmatpush1.msra.mxu0 %v54
  %967 = vmatprep.subr.mxu0 0.0
  %968 = vmatpush1.msra.mxu0 %v55
  %969 = vmatprep.subr.mxu0 0.0
  %970 = vmatpush1.msra.mxu0 %v56
  %971 = vmatprep.subr.mxu0 0.0
  %972 = vmatpush1.msra.mxu0 %v57
  %973 = vmatprep.subr.mxu0 0.0
  %974 = vmatpush1.msra.mxu0 %v58
  %975 = vmatprep.subr.mxu0 0.0
  %976 = vmatpush1.msra.mxu0 %v59
  %977 = vmatprep.subr.mxu0 0.0
  %978 = vmatpush1.msra.mxu0 %v60
  %979 = vmatprep.subr.mxu0 0.0
  %980 = vmatpush1.msra.mxu0 0.0
  %981 = vmatprep.subr.mxu0 0.0
  %982 = vmatpush1.msra.mxu0 0.0
  %983 = vmatprep.subr.mxu0 0.0
  %984 = vmatpush1.msra.mxu0 0.0
  %985 = vmatprep.subr.mxu0 0.0
  %986 = vmatpush1.msra.mxu0 0.0
  %987 = vmatprep.subr.mxu0 0.0
  %988 = vmatpush1.msra.mxu0 0.0
  %989 = vmatprep.subr.mxu0 0.0
  %990 = vmatpush1.msra.mxu0 0.0
  %991 = vmatprep.subr.mxu0 0.0
  %992 = vmatpush1.msra.mxu0 0.0
  %993 = vmatprep.subr.mxu0 0.0
  %994 = vmatpush1.msra.mxu0 0.0
  %995 = vmatprep.subr.mxu0 0.0
  %996 = vmatpush1.msra.mxu0 0.0
  %997 = vmatprep.subr.mxu0 0.0
  %998 = vmatpush1.msra.mxu0 0.0
  %999 = vmatprep.subr.mxu0 0.0
  %1000 = vmatpush1.msra.mxu0 0.0
  %1001 = vmatprep.subr.mxu0 0.0
  %1002 = vmatpush1.msra.mxu0 0.0
  %1003 = vmatprep.subr.mxu0 0.0
  %1004 = vmatpush1.msra.mxu0 0.0
  %1005 = vmatprep.subr.mxu0 0.0
  %1006 = vmatpush1.msra.mxu0 0.0
  %1007 = vmatprep.subr.mxu0 0.0
  %1008 = vmatpush1.msra.mxu0 0.0
  %1009 = vmatprep.subr.mxu0 0.0
  %1010 = vmatpush1.msra.mxu0 0.0
  %1011 = vmatprep.subr.mxu0 0.0
  %1012 = vmatpush1.msra.mxu0 0.0
  %1013 = vmatprep.subr.mxu0 0.0
  %1014 = vmatpush1.msra.mxu0 0.0
  %1015 = vmatprep.subr.mxu0 0.0
  %1016 = vmatpush1.msra.mxu0 0.0
  %1017 = vmatprep.subr.mxu0 0.0
  %1018 = vmatpush1.msra.mxu0 0.0
  %1019 = vmatprep.subr.mxu0 0.0
  %1020 = vmatpush1.msra.mxu0 0.0
  %1021 = vmatprep.subr.mxu0 0.0
  %1022 = vmatpush1.msra.mxu0 0.0
  %1023 = vmatprep.subr.mxu0 0.0
  %1024 = vmatpush1.msra.mxu0 0.0
  %1025 = vmatprep.subr.mxu0 0.0
  %1026 = vmatpush1.msra.mxu0 0.0
  %1027 = vmatprep.mubr.f32.mxu0 0.0
  %1028 = vmatmul.mubr.f32.gmra.mrb[0].mxu0 %v961
  %v1029 = vpop.f32.mrb[0].mxu0
  %v1030 = vadd.f32 %v61, %v1029
  %v1031 = vpop.f32.mrb[0].mxu0
  %1032 = vdwg.mxu0
  %v1033 = vmax.f32 %v1030, 0.0
  %v1034 = vsel %vm82, %v1033, %v784
  %v1036 = vsel %vm84, %v1034, 0
  %1038 = vmatprep.subr.mxu0 0.0
  %1039 = vmatpush1.msra.mxu0 %v62
  %1040 = vmatprep.subr.mxu0 0.0
  %1041 = vmatpush1.msra.mxu0 %v63
  %1042 = vmatprep.subr.mxu0 0.0
  %1043 = vmatpush1.msra.mxu0 %v64
  %1044 = vmatprep.subr.mxu0 0.0
  %1045 = vmatpush1.msra.mxu0 %v65
  %1046 = vmatprep.subr.mxu0 0.0
  %1047 = vmatpush1.msra.mxu0 %v66
  %1048 = vmatprep.subr.mxu0 0.0
  %1049 = vmatpush1.msra.mxu0 %v67
  %1050 = vmatprep.subr.mxu0 0.0
  %1051 = vmatpush1.msra.mxu0 %v68
  %1052 = vmatprep.subr.mxu0 0.0
  %1053 = vmatpush1.msra.mxu0 %v69
  %1054 = vmatprep.subr.mxu0 0.0
  %1055 = vmatpush1.msra.mxu0 0.0
  %1056 = vmatprep.subr.mxu0 0.0
  %1057 = vmatpush1.msra.mxu0 0.0
  %1058 = vmatprep.subr.mxu0 0.0
  %1059 = vmatpush1.msra.mxu0 0.0
  %1060 = vmatprep.subr.mxu0 0.0
  %1061 = vmatpush1.msra.mxu0 0.0
  %1062 = vmatprep.subr.mxu0 0.0
  %1063 = vmatpush1.msra.mxu0 0.0
  %1064 = vmatprep.subr.mxu0 0.0
  %1065 = vmatpush1.msra.mxu0 0.0
  %1066 = vmatprep.subr.mxu0 0.0
  %1067 = vmatpush1.msra.mxu0 0.0
  %1068 = vmatprep.subr.mxu0 0.0
  %1069 = vmatpush1.msra.mxu0 0.0
  %1070 = vmatprep.subr.mxu0 0.0
  %1071 = vmatpush1.msra.mxu0 0.0
  %1072 = vmatprep.subr.mxu0 0.0
  %1073 = vmatpush1.msra.mxu0 0.0
  %1074 = vmatprep.subr.mxu0 0.0
  %1075 = vmatpush1.msra.mxu0 0.0
  %1076 = vmatprep.subr.mxu0 0.0
  %1077 = vmatpush1.msra.mxu0 0.0
  %1078 = vmatprep.subr.mxu0 0.0
  %1079 = vmatpush1.msra.mxu0 0.0
  %1080 = vmatprep.subr.mxu0 0.0
  %1081 = vmatpush1.msra.mxu0 0.0
  %1082 = vmatprep.subr.mxu0 0.0
  %1083 = vmatpush1.msra.mxu0 0.0
  %1084 = vmatprep.subr.mxu0 0.0
  %1085 = vmatpush1.msra.mxu0 0.0
  %1086 = vmatprep.subr.mxu0 0.0
  %1087 = vmatpush1.msra.mxu0 0.0
  %1088 = vmatprep.subr.mxu0 0.0
  %1089 = vmatpush1.msra.mxu0 0.0
  %1090 = vmatprep.subr.mxu0 0.0
  %1091 = vmatpush1.msra.mxu0 0.0
  %1092 = vmatprep.subr.mxu0 0.0
  %1093 = vmatpush1.msra.mxu0 0.0
  %1094 = vmatprep.subr.mxu0 0.0
  %1095 = vmatpush1.msra.mxu0 0.0
  %1096 = vmatprep.subr.mxu0 0.0
  %1097 = vmatpush1.msra.mxu0 0.0
  %1098 = vmatprep.subr.mxu0 0.0
  %1099 = vmatpush1.msra.mxu0 0.0
  %1100 = vmatprep.subr.mxu0 0.0
  %1101 = vmatpush1.msra.mxu0 0.0
  %1102 = vmatprep.mubr.f32.mxu0 0.0
  %1103 = vmatmul.mubr.f32.gmra.mrb[0].mxu0 %v1036
  %v1104 = vpop.f32.mrb[0].mxu0
  %v1105 = vadd.f32 %v70, %v1104
  %v1106 = vpop.f32.mrb[0].mxu0
  %1107 = vdwg.mxu0
  %v1108 = vxor.u32 %v1105, 2147483648
  %v1109 = vmul.f32 %v1108, 1.442695
  %v1110 = vpow.pop %v1109
  %v1111 = vadd.f32 %v1110, 1.0
  %v1112 = vrcp.pop %v1111
  %v1113 = vmul.f32 1.0, %v1112
  %v1114 = vtanh.pop %v1105
  %v1115 = vmul.f32 %v1113, %v775
  %1117 = vrot.lane.b32.xlu0 %v1114, 64
  %v1118 = vpop.permute.xlu0 %1117
  %v1120 = vmul.f32 %v1113, %v1118
  %1122 = vrot.lane.b32.xlu0 %v1120, 32
  %v1123 = vpop.permute.xlu0 %1122
  %v1125 = vadd.f32 %v1115, %v1123
  %v1126 = vtanh.pop %v1125
  %1128 = vrot.lane.b32.xlu0 %v1126, 64
  %v1129 = vpop.permute.xlu0 %1128
  %v1131 = vmul.f32 %v1113, %v1129
  %1133 = vrot.lane.b32.xlu0 %v1131, 64
  %v1134 = vpop.permute.xlu0 %1133
  %1136 = vst.msk [vmem:[%s12 + $0x2] sm:$0x1] %vm433, %v1134
  %1138 = vrot.lane.b32.xlu0 %v1125, 32
  %v1139 = vpop.permute.xlu0 %1138
  %1141 = vst.msk [vmem:[%s12 + $0x2] sm:$0x1] %vm439, %v1139
  %1142 = vrot.lane.b32.xlu0 %v881, 96
  %v1143 = vpop.permute.xlu0 %1142
  %1145 = vst.msk [vmem:[%s12 + $0x2] sm:$0x1] %vm444, %v1143
  %v1146 = vld [vmem:[%s0 + $0x3] sm:$0x1]
  %v1147 = vsel %vm82, %v1146, %v1134
  %v1149 = vsel %vm84, %v1147, 0
  %1151 = vmatprep.subr.mxu0 0.0
  %1152 = vmatpush1.msra.mxu0 %v44
  %1153 = vmatprep.subr.mxu0 0.0
  %1154 = vmatpush1.msra.mxu0 %v45
  %1155 = vmatprep.subr.mxu0 0.0
  %1156 = vmatpush1.msra.mxu0 %v46
  %1157 = vmatprep.subr.mxu0 0.0
  %1158 = vmatpush1.msra.mxu0 %v47
  %1159 = vmatprep.subr.mxu0 0.0
  %1160 = vmatpush1.msra.mxu0 %v48
  %1161 = vmatprep.subr.mxu0 0.0
  %1162 = vmatpush1.msra.mxu0 %v49
  %1163 = vmatprep.subr.mxu0 0.0
  %1164 = vmatpush1.msra.mxu0 %v50
  %1165 = vmatprep.subr.mxu0 0.0
  %1166 = vmatpush1.msra.mxu0 %v51
  %1167 = vmatprep.subr.mxu0 0.0
  %1168 = vmatpush1.msra.mxu0 0.0
  %1169 = vmatprep.subr.mxu0 0.0
  %1170 = vmatpush1.msra.mxu0 0.0
  %1171 = vmatprep.subr.mxu0 0.0
  %1172 = vmatpush1.msra.mxu0 0.0
  %1173 = vmatprep.subr.mxu0 0.0
  %1174 = vmatpush1.msra.mxu0 0.0
  %1175 = vmatprep.subr.mxu0 0.0
  %1176 = vmatpush1.msra.mxu0 0.0
  %1177 = vmatprep.subr.mxu0 0.0
  %1178 = vmatpush1.msra.mxu0 0.0
  %1179 = vmatprep.subr.mxu0 0.0
  %1180 = vmatpush1.msra.mxu0 0.0
  %1181 = vmatprep.subr.mxu0 0.0
  %1182 = vmatpush1.msra.mxu0 0.0
  %1183 = vmatprep.subr.mxu0 0.0
  %1184 = vmatpush1.msra.mxu0 0.0
  %1185 = vmatprep.subr.mxu0 0.0
  %1186 = vmatpush1.msra.mxu0 0.0
  %1187 = vmatprep.subr.mxu0 0.0
  %1188 = vmatpush1.msra.mxu0 0.0
  %1189 = vmatprep.subr.mxu0 0.0
  %1190 = vmatpush1.msra.mxu0 0.0
  %1191 = vmatprep.subr.mxu0 0.0
  %1192 = vmatpush1.msra.mxu0 0.0
  %1193 = vmatprep.subr.mxu0 0.0
  %1194 = vmatpush1.msra.mxu0 0.0
  %1195 = vmatprep.subr.mxu0 0.0
  %1196 = vmatpush1.msra.mxu0 0.0
  %1197 = vmatprep.subr.mxu0 0.0
  %1198 = vmatpush1.msra.mxu0 0.0
  %1199 = vmatprep.subr.mxu0 0.0
  %1200 = vmatpush1.msra.mxu0 0.0
  %1201 = vmatprep.subr.mxu0 0.0
  %1202 = vmatpush1.msra.mxu0 0.0
  %1203 = vmatprep.subr.mxu0 0.0
  %1204 = vmatpush1.msra.mxu0 0.0
  %1205 = vmatprep.subr.mxu0 0.0
  %1206 = vmatpush1.msra.mxu0 0.0
  %1207 = vmatprep.subr.mxu0 0.0
  %1208 = vmatpush1.msra.mxu0 0.0
  %1209 = vmatprep.subr.mxu0 0.0
  %1210 = vmatpush1.msra.mxu0 0.0
  %1211 = vmatprep.subr.mxu0 0.0
  %1212 = vmatpush1.msra.mxu0 0.0
  %1213 = vmatprep.subr.mxu0 0.0
  %1214 = vmatpush1.msra.mxu0 0.0
  %1215 = vmatprep.mubr.f32.mxu0 0.0
  %1216 = vmatmul.mubr.f32.gmra.mrb[0].mxu0 %v1149
  %v1217 = vpop.f32.mrb[0].mxu0
  %v1218 = vadd.f32 %v52, %v1217
  %v1219 = vpop.f32.mrb[0].mxu0
  %1220 = vdwg.mxu0
  %v1221 = vsel %vm158, %v1218, -inf
  %1222 = vmax.xlane.f32.xlu0 %v1221
  %v1223 = vpop.xlane.xlu0 %1222
  %v1224 = vsub.f32 %v1218, %v1223
  %v1225 = vmul.f32 %v1224, 1.442695
  %v1226 = vpow.pop %v1225
  %v1227 = vsel %vm158, %v1226, 0.0
  %1228 = vadd.xlane.f32.xlu0 %v1227
  %v1229 = vpop.xlane.xlu0 %1228
  %v1230 = vrcp.pop %v1229
  %v1231 = vmul.f32 %v1226, %v1230
  %v1233 = vsel %vm170, %v1231, 0
  %1235 = vmatprep.subr.mxu0 0.0
  %1236 = vmatpush1.msra.mxu0 %v42
  %1237 = vmatprep.subr.mxu0 0.0
  %1238 = vmatpush1.msra.mxu0 %v43
  %1239 = vmatprep.subr.mxu0 0.0
  %1240 = vmatpush1.msra.mxu0 0.0
  %1241 = vmatprep.subr.mxu0 0.0
  %1242 = vmatpush1.msra.mxu0 0.0
  %1243 = vmatprep.subr.mxu0 0.0
  %1244 = vmatpush1.msra.mxu0 0.0
  %1245 = vmatprep.subr.mxu0 0.0
  %1246 = vmatpush1.msra.mxu0 0.0
  %1247 = vmatprep.subr.mxu0 0.0
  %1248 = vmatpush1.msra.mxu0 0.0
  %1249 = vmatprep.subr.mxu0 0.0
  %1250 = vmatpush1.msra.mxu0 0.0
  %1251 = vmatprep.subr.mxu0 0.0
  %1252 = vmatpush1.msra.mxu0 0.0
  %1253 = vmatprep.subr.mxu0 0.0
  %1254 = vmatpush1.msra.mxu0 0.0
  %1255 = vmatprep.subr.mxu0 0.0
  %1256 = vmatpush1.msra.mxu0 0.0
  %1257 = vmatprep.subr.mxu0 0.0
  %1258 = vmatpush1.msra.mxu0 0.0
  %1259 = vmatprep.subr.mxu0 0.0
  %1260 = vmatpush1.msra.mxu0 0.0
  %1261 = vmatprep.subr.mxu0 0.0
  %1262 = vmatpush1.msra.mxu0 0.0
  %1263 = vmatprep.subr.mxu0 0.0
  %1264 = vmatpush1.msra.mxu0 0.0
  %1265 = vmatprep.subr.mxu0 0.0
  %1266 = vmatpush1.msra.mxu0 0.0
  %1267 = vmatprep.subr.mxu0 0.0
  %1268 = vmatpush1.msra.mxu0 0.0
  %1269 = vmatprep.subr.mxu0 0.0
  %1270 = vmatpush1.msra.mxu0 0.0
  %1271 = vmatprep.subr.mxu0 0.0
  %1272 = vmatpush1.msra.mxu0 0.0
  %1273 = vmatprep.subr.mxu0 0.0
  %1274 = vmatpush1.msra.mxu0 0.0
  %1275 = vmatprep.subr.mxu0 0.0
  %1276 = vmatpush1.msra.mxu0 0.0
  %1277 = vmatprep.subr.mxu0 0.0
  %1278 = vmatpush1.msra.mxu0 0.0
  %1279 = vmatprep.subr.mxu0 0.0
  %1280 = vmatpush1.msra.mxu0 0.0
  %1281 = vmatprep.subr.mxu0 0.0
  %1282 = vmatpush1.msra.mxu0 0.0
  %1283 = vmatprep.subr.mxu0 0.0
  %1284 = vmatpush1.msra.mxu0 0.0
  %1285 = vmatprep.subr.mxu0 0.0
  %1286 = vmatpush1.msra.mxu0 0.0
  %1287 = vmatprep.subr.mxu0 0.0
  %1288 = vmatpush1.msra.mxu0 0.0
  %1289 = vmatprep.subr.mxu0 0.0
  %1290 = vmatpush1.msra.mxu0 0.0
  %1291 = vmatprep.subr.mxu0 0.0
  %1292 = vmatpush1.msra.mxu0 0.0
  %1293 = vmatprep.subr.mxu0 0.0
  %1294 = vmatpush1.msra.mxu0 0.0
  %1295 = vmatprep.subr.mxu0 0.0
  %1296 = vmatpush1.msra.mxu0 0.0
  %1297 = vmatprep.subr.mxu0 0.0
  %1298 = vmatpush1.msra.mxu0 0.0
  %1299 = vmatprep.mubr.f32.mxu0 0.0
  %1300 = vmatmul.mubr.f32.gmra.mrb[0].mxu0 %v1233
  %v1301 = vpop.f32.mrb[0].mxu0
  %v1302 = vadd.f32 0.0, %v1301
  %v1303 = vpop.f32.mrb[0].mxu0
  %1304 = vdwg.mxu0
  %1306 = vrot.lane.b32.xlu0 %v1302, 32
  %v1307 = vpop.permute.xlu0 %1306
  %v1309 = vsel %vm82, %v1146, %v1307
  %v1311 = vsel %vm84, %v1309, 0
  %1313 = vmatprep.subr.mxu0 0.0
  %1314 = vmatpush1.msra.mxu0 %v53
  %1315 = vmatprep.subr.mxu0 0.0
  %1316 = vmatpush1.msra.mxu0 %v54
  %1317 = vmatprep.subr.mxu0 0.0
  %1318 = vmatpush1.msra.mxu0 %v55
  %1319 = vmatprep.subr.mxu0 0.0
  %1320 = vmatpush1.msra.mxu0 %v56
  %1321 = vmatprep.subr.mxu0 0.0
  %1322 = vmatpush1.msra.mxu0 %v57
  %1323 = vmatprep.subr.mxu0 0.0
  %1324 = vmatpush1.msra.mxu0 %v58
  %1325 = vmatprep.subr.mxu0 0.0
  %1326 = vmatpush1.msra.mxu0 %v59
  %1327 = vmatprep.subr.mxu0 0.0
  %1328 = vmatpush1.msra.mxu0 %v60
  %1329 = vmatprep.subr.mxu0 0.0
  %1330 = vmatpush1.msra.mxu0 0.0
  %1331 = vmatprep.subr.mxu0 0.0
  %1332 = vmatpush1.msra.mxu0 0.0
  %1333 = vmatprep.subr.mxu0 0.0
  %1334 = vmatpush1.msra.mxu0 0.0
  %1335 = vmatprep.subr.mxu0 0.0
  %1336 = vmatpush1.msra.mxu0 0.0
  %1337 = vmatprep.subr.mxu0 0.0
  %1338 = vmatpush1.msra.mxu0 0.0
  %1339 = vmatprep.subr.mxu0 0.0
  %1340 = vmatpush1.msra.mxu0 0.0
  %1341 = vmatprep.subr.mxu0 0.0
  %1342 = vmatpush1.msra.mxu0 0.0
  %1343 = vmatprep.subr.mxu0 0.0
  %1344 = vmatpush1.msra.mxu0 0.0
  %1345 = vmatprep.subr.mxu0 0.0
  %1346 = vmatpush1.msra.mxu0 0.0
  %1347 = vmatprep.subr.mxu0 0.0
  %1348 = vmatpush1.msra.mxu0 0.0
  %1349 = vmatprep.subr.mxu0 0.0
  %1350 = vmatpush1.msra.mxu0 0.0
  %1351 = vmatprep.subr.mxu0 0.0
  %1352 = vmatpush1.msra.mxu0 0.0
  %1353 = vmatprep.subr.mxu0 0.0
  %1354 = vmatpush1.msra.mxu0 0.0
  %1355 = vmatprep.subr.mxu0 0.0
  %1356 = vmatpush1.msra.mxu0 0.0
  %1357 = vmatprep.subr.mxu0 0.0
  %1358 = vmatpush1.msra.mxu0 0.0
  %1359 = vmatprep.subr.mxu0 0.0
  %1360 = vmatpush1.msra.mxu0 0.0
  %1361 = vmatprep.subr.mxu0 0.0
  %1362 = vmatpush1.msra.mxu0 0.0
  %1363 = vmatprep.subr.mxu0 0.0
  %1364 = vmatpush1.msra.mxu0 0.0
  %1365 = vmatprep.subr.mxu0 0.0
  %1366 = vmatpush1.msra.mxu0 0.0
  %1367 = vmatprep.subr.mxu0 0.0
  %1368 = vmatpush1.msra.mxu0 0.0
  %1369 = vmatprep.subr.mxu0 0.0
  %1370 = vmatpush1.msra.mxu0 0.0
  %1371 = vmatprep.subr.mxu0 0.0
  %1372 = vmatpush1.msra.mxu0 0.0
  %1373 = vmatprep.subr.mxu0 0.0
  %1374 = vmatpush1.msra.mxu0 0.0
  %1375 = vmatprep.subr.mxu0 0.0
  %1376 = vmatpush1.msra.mxu0 0.0
  %1377 = vmatprep.mubr.f32.mxu0 0.0
  %1378 = vmatmul.mubr.f32.gmra.mrb[0].mxu0 %v1311
  %v1379 = vpop.f32.mrb[0].mxu0
  %v1380 = vadd.f32 %v61, %v1379
  %v1381 = vpop.f32.mrb[0].mxu0
  %1382 = vdwg.mxu0
  %v1383 = vmax.f32 %v1380, 0.0
  %v1384 = vsel %vm82, %v1383, %v1134
  %v1386 = vsel %vm84, %v1384, 0
  %1388 = vmatprep.subr.mxu0 0.0
  %1389 = vmatpush1.msra.mxu0 %v62
  %1390 = vmatprep.subr.mxu0 0.0
  %1391 = vmatpush1.msra.mxu0 %v63
  %1392 = vmatprep.subr.mxu0 0.0
  %1393 = vmatpush1.msra.mxu0 %v64
  %1394 = vmatprep.subr.mxu0 0.0
  %1395 = vmatpush1.msra.mxu0 %v65
  %1396 = vmatprep.subr.mxu0 0.0
  %1397 = vmatpush1.msra.mxu0 %v66
  %1398 = vmatprep.subr.mxu0 0.0
  %1399 = vmatpush1.msra.mxu0 %v67
  %1400 = vmatprep.subr.mxu0 0.0
  %1401 = vmatpush1.msra.mxu0 %v68
  %1402 = vmatprep.subr.mxu0 0.0
  %1403 = vmatpush1.msra.mxu0 %v69
  %1404 = vmatprep.subr.mxu0 0.0
  %1405 = vmatpush1.msra.mxu0 0.0
  %1406 = vmatprep.subr.mxu0 0.0
  %1407 = vmatpush1.msra.mxu0 0.0
  %1408 = vmatprep.subr.mxu0 0.0
  %1409 = vmatpush1.msra.mxu0 0.0
  %1410 = vmatprep.subr.mxu0 0.0
  %1411 = vmatpush1.msra.mxu0 0.0
  %1412 = vmatprep.subr.mxu0 0.0
  %1413 = vmatpush1.msra.mxu0 0.0
  %1414 = vmatprep.subr.mxu0 0.0
  %1415 = vmatpush1.msra.mxu0 0.0
  %1416 = vmatprep.subr.mxu0 0.0
  %1417 = vmatpush1.msra.mxu0 0.0
  %1418 = vmatprep.subr.mxu0 0.0
  %1419 = vmatpush1.msra.mxu0 0.0
  %1420 = vmatprep.subr.mxu0 0.0
  %1421 = vmatpush1.msra.mxu0 0.0
  %1422 = vmatprep.subr.mxu0 0.0
  %1423 = vmatpush1.msra.mxu0 0.0
  %1424 = vmatprep.subr.mxu0 0.0
  %1425 = vmatpush1.msra.mxu0 0.0
  %1426 = vmatprep.subr.mxu0 0.0
  %1427 = vmatpush1.msra.mxu0 0.0
  %1428 = vmatprep.subr.mxu0 0.0
  %1429 = vmatpush1.msra.mxu0 0.0
  %1430 = vmatprep.subr.mxu0 0.0
  %1431 = vmatpush1.msra.mxu0 0.0
  %1432 = vmatprep.subr.mxu0 0.0
  %1433 = vmatpush1.msra.mxu0 0.0
  %1434 = vmatprep.subr.mxu0 0.0
  %1435 = vmatpush1.msra.mxu0 0.0
  %1436 = vmatprep.subr.mxu0 0.0
  %1437 = vmatpush1.msra.mxu0 0.0
  %1438 = vmatprep.subr.mxu0 0.0
  %1439 = vmatpush1.msra.mxu0 0.0
  %1440 = vmatprep.subr.mxu0 0.0
  %1441 = vmatpush1.msra.mxu0 0.0
  %1442 = vmatprep.subr.mxu0 0.0
  %1443 = vmatpush1.msra.mxu0 0.0
  %1444 = vmatprep.subr.mxu0 0.0
  %1445 = vmatpush1.msra.mxu0 0.0
  %1446 = vmatprep.subr.mxu0 0.0
  %1447 = vmatpush1.msra.mxu0 0.0
  %1448 = vmatprep.subr.mxu0 0.0
  %1449 = vmatpush1.msra.mxu0 0.0
  %1450 = vmatprep.subr.mxu0 0.0
  %1451 = vmatpush1.msra.mxu0 0.0
  %1452 = vmatprep.mubr.f32.mxu0 0.0
  %1453 = vmatmul.mubr.f32.gmra.mrb[0].mxu0 %v1386
  %v1454 = vpop.f32.mrb[0].mxu0
  %v1455 = vadd.f32 %v70, %v1454
  %v1456 = vpop.f32.mrb[0].mxu0
  %1457 = vdwg.mxu0
  %v1458 = vxor.u32 %v1455, 2147483648
  %v1459 = vmul.f32 %v1458, 1.442695
  %v1460 = vpow.pop %v1459
  %v1461 = vadd.f32 %v1460, 1.0
  %v1462 = vrcp.pop %v1461
  %v1463 = vmul.f32 1.0, %v1462
  %v1464 = vtanh.pop %v1455
  %v1465 = vmul.f32 %v1463, %v1125
  %1467 = vrot.lane.b32.xlu0 %v1464, 64
  %v1468 = vpop.permute.xlu0 %1467
  %v1470 = vmul.f32 %v1463, %v1468
  %1472 = vrot.lane.b32.xlu0 %v1470, 32
  %v1473 = vpop.permute.xlu0 %1472
  %v1475 = vadd.f32 %v1465, %v1473
  %v1476 = vtanh.pop %v1475
  %1478 = vrot.lane.b32.xlu0 %v1476, 64
  %v1479 = vpop.permute.xlu0 %1478
  %v1481 = vmul.f32 %v1463, %v1479
  %1483 = vrot.lane.b32.xlu0 %v1481, 64
  %v1484 = vpop.permute.xlu0 %1483
  %1486 = vst.msk [vmem:[%s12 + $0x3] sm:$0x1] %vm433, %v1484
  %1488 = vrot.lane.b32.xlu0 %v1475, 32
  %v1489 = vpop.permute.xlu0 %1488
  %1491 = vst.msk [vmem:[%s12 + $0x3] sm:$0x1] %vm439, %v1489
  %1492 = vrot.lane.b32.xlu0 %v1231, 96
  %v1493 = vpop.permute.xlu0 %1492
  %1495 = vst.msk [vmem:[%s12 + $0x3] sm:$0x1] %vm444, %v1493
  %v1496 = vld [vmem:[%s0 + $0x4] sm:$0x1]
  %v1497 = vsel %vm82, %v1496, %v1484
  %v1499 = vsel %vm84, %v1497, 0
  %1501 = vmatprep.subr.mxu0 0.0
  %1502 = vmatpush1.msra.mxu0 %v44
  %1503 = vmatprep.subr.mxu0 0.0
  %1504 = vmatpush1.msra.mxu0 %v45
  %1505 = vmatprep.subr.mxu0 0.0
  %1506 = vmatpush1.msra.mxu0 %v46
  %1507 = vmatprep.subr.mxu0 0.0
  %1508 = vmatpush1.msra.mxu0 %v47
  %1509 = vmatprep.subr.mxu0 0.0
  %1510 = vmatpush1.msra.mxu0 %v48
  %1511 = vmatprep.subr.mxu0 0.0
  %1512 = vmatpush1.msra.mxu0 %v49
  %1513 = vmatprep.subr.mxu0 0.0
  %1514 = vmatpush1.msra.mxu0 %v50
  %1515 = vmatprep.subr.mxu0 0.0
  %1516 = vmatpush1.msra.mxu0 %v51
  %1517 = vmatprep.subr.mxu0 0.0
  %1518 = vmatpush1.msra.mxu0 0.0
  %1519 = vmatprep.subr.mxu0 0.0
  %1520 = vmatpush1.msra.mxu0 0.0
  %1521 = vmatprep.subr.mxu0 0.0
  %1522 = vmatpush1.msra.mxu0 0.0
  %1523 = vmatprep.subr.mxu0 0.0
  %1524 = vmatpush1.msra.mxu0 0.0
  %1525 = vmatprep.subr.mxu0 0.0
  %1526 = vmatpush1.msra.mxu0 0.0
  %1527 = vmatprep.subr.mxu0 0.0
  %1528 = vmatpush1.msra.mxu0 0.0
  %1529 = vmatprep.subr.mxu0 0.0
  %1530 = vmatpush1.msra.mxu0 0.0
  %1531 = vmatprep.subr.mxu0 0.0
  %1532 = vmatpush1.msra.mxu0 0.0
  %1533 = vmatprep.subr.mxu0 0.0
  %1534 = vmatpush1.msra.mxu0 0.0
  %1535 = vmatprep.subr.mxu0 0.0
  %1536 = vmatpush1.msra.mxu0 0.0
  %1537 = vmatprep.subr.mxu0 0.0
  %1538 = vmatpush1.msra.mxu0 0.0
  %1539 = vmatprep.subr.mxu0 0.0
  %1540 = vmatpush1.msra.mxu0 0.0
  %1541 = vmatprep.subr.mxu0 0.0
  %1542 = vmatpush1.msra.mxu0 0.0
  %1543 = vmatprep.subr.mxu0 0.0
  %1544 = vmatpush1.msra.mxu0 0.0
  %1545 = vmatprep.subr.mxu0 0.0
  %1546 = vmatpush1.msra.mxu0 0.0
  %1547 = vmatprep.subr.mxu0 0.0
  %1548 = vmatpush1.msra.mxu0 0.0
  %1549 = vmatprep.subr.mxu0 0.0
  %1550 = vmatpush1.msra.mxu0 0.0
  %1551 = vmatprep.subr.mxu0 0.0
  %1552 = vmatpush1.msra.mxu0 0.0
  %1553 = vmatprep.subr.mxu0 0.0
  %1554 = vmatpush1.msra.mxu0 0.0
  %1555 = vmatprep.subr.mxu0 0.0
  %1556 = vmatpush1.msra.mxu0 0.0
  %1557 = vmatprep.subr.mxu0 0.0
  %1558 = vmatpush1.msra.mxu0 0.0
  %1559 = vmatprep.subr.mxu0 0.0
  %1560 = vmatpush1.msra.mxu0 0.0
  %1561 = vmatprep.subr.mxu0 0.0
  %1562 = vmatpush1.msra.mxu0 0.0
  %1563 = vmatprep.subr.mxu0 0.0
  %1564 = vmatpush1.msra.mxu0 0.0
  %1565 = vmatprep.mubr.f32.mxu0 0.0
  %1566 = vmatmul.mubr.f32.gmra.mrb[0].mxu0 %v1499
  %v1567 = vpop.f32.mrb[0].mxu0
  %v1568 = vadd.f32 %v52, %v1567
  %v1569 = vpop.f32.mrb[0].mxu0
  %1570 = vdwg.mxu0
  %v1571 = vsel %vm158, %v1568, -inf
  %1572 = vmax.xlane.f32.xlu0 %v1571
  %v1573 = vpop.xlane.xlu0 %1572
  %v1574 = vsub.f32 %v1568, %v1573
  %v1575 = vmul.f32 %v1574, 1.442695
  %v1576 = vpow.pop %v1575
  %v1577 = vsel %vm158, %v1576, 0.0
  %1578 = vadd.xlane.f32.xlu0 %v1577
  %v1579 = vpop.xlane.xlu0 %1578
  %v1580 = vrcp.pop %v1579
  %v1581 = vmul.f32 %v1576, %v1580
  %v1583 = vsel %vm170, %v1581, 0
  %1585 = vmatprep.subr.mxu0 0.0
  %1586 = vmatpush1.msra.mxu0 %v42
  %1587 = vmatprep.subr.mxu0 0.0
  %1588 = vmatpush1.msra.mxu0 %v43
  %1589 = vmatprep.subr.mxu0 0.0
  %1590 = vmatpush1.msra.mxu0 0.0
  %1591 = vmatprep.subr.mxu0 0.0
  %1592 = vmatpush1.msra.mxu0 0.0
  %1593 = vmatprep.subr.mxu0 0.0
  %1594 = vmatpush1.msra.mxu0 0.0
  %1595 = vmatprep.subr.mxu0 0.0
  %1596 = vmatpush1.msra.mxu0 0.0
  %1597 = vmatprep.subr.mxu0 0.0
  %1598 = vmatpush1.msra.mxu0 0.0
  %1599 = vmatprep.subr.mxu0 0.0
  %1600 = vmatpush1.msra.mxu0 0.0
  %1601 = vmatprep.subr.mxu0 0.0
  %1602 = vmatpush1.msra.mxu0 0.0
  %1603 = vmatprep.subr.mxu0 0.0
  %1604 = vmatpush1.msra.mxu0 0.0
  %1605 = vmatprep.subr.mxu0 0.0
  %1606 = vmatpush1.msra.mxu0 0.0
  %1607 = vmatprep.subr.mxu0 0.0
  %1608 = vmatpush1.msra.mxu0 0.0
  %1609 = vmatprep.subr.mxu0 0.0
  %1610 = vmatpush1.msra.mxu0 0.0
  %1611 = vmatprep.subr.mxu0 0.0
  %1612 = vmatpush1.msra.mxu0 0.0
  %1613 = vmatprep.subr.mxu0 0.0
  %1614 = vmatpush1.msra.mxu0 0.0
  %1615 = vmatprep.subr.mxu0 0.0
  %1616 = vmatpush1.msra.mxu0 0.0
  %1617 = vmatprep.subr.mxu0 0.0
  %1618 = vmatpush1.msra.mxu0 0.0
  %1619 = vmatprep.subr.mxu0 0.0
  %1620 = vmatpush1.msra.mxu0 0.0
  %1621 = vmatprep.subr.mxu0 0.0
  %1622 = vmatpush1.msra.mxu0 0.0
  %1623 = vmatprep.subr.mxu0 0.0
  %1624 = vmatpush1.msra.mxu0 0.0
  %1625 = vmatprep.subr.mxu0 0.0
  %1626 = vmatpush1.msra.mxu0 0.0
  %1627 = vmatprep.subr.mxu0 0.0
  %1628 = vmatpush1.msra.mxu0 0.0
  %1629 = vmatprep.subr.mxu0 0.0
  %1630 = vmatpush1.msra.mxu0 0.0
  %1631 = vmatprep.subr.mxu0 0.0
  %1632 = vmatpush1.msra.mxu0 0.0
  %1633 = vmatprep.subr.mxu0 0.0
  %1634 = vmatpush1.msra.mxu0 0.0
  %1635 = vmatprep.subr.mxu0 0.0
  %1636 = vmatpush1.msra.mxu0 0.0
  %1637 = vmatprep.subr.mxu0 0.0
  %1638 = vmatpush1.msra.mxu0 0.0
  %1639 = vmatprep.subr.mxu0 0.0
  %1640 = vmatpush1.msra.mxu0 0.0
  %1641 = vmatprep.subr.mxu0 0.0
  %1642 = vmatpush1.msra.mxu0 0.0
  %1643 = vmatprep.subr.mxu0 0.0
  %1644 = vmatpush1.msra.mxu0 0.0
  %1645 = vmatprep.subr.mxu0 0.0
  %1646 = vmatpush1.msra.mxu0 0.0
  %1647 = vmatprep.subr.mxu0 0.0
  %1648 = vmatpush1.msra.mxu0 0.0
  %1649 = vmatprep.mubr.f32.mxu0 0.0
  %1650 = vmatmul.mubr.f32.gmra.mrb[0].mxu0 %v1583
  %v1651 = vpop.f32.mrb[0].mxu0
  %v1652 = vadd.f32 0.0, %v1651
  %v1653 = vpop.f32.mrb[0].mxu0
  %1654 = vdwg.mxu0
  %1656 = vrot.lane.b32.xlu0 %v1652, 32
  %v1657 = vpop.permute.xlu0 %1656
  %v1659 = vsel %vm82, %v1496, %v1657
  %v1661 = vsel %vm84, %v1659, 0
  %1663 = vmatprep.subr.mxu0 0.0
  %1664 = vmatpush1.msra.mxu0 %v53
  %1665 = vmatprep.subr.mxu0 0.0
  %1666 = vmatpush1.msra.mxu0 %v54
  %1667 = vmatprep.subr.mxu0 0.0
  %1668 = vmatpush1.msra.mxu0 %v55
  %1669 = vmatprep.subr.mxu0 0.0
  %1670 = vmatpush1.msra.mxu0 %v56
  %1671 = vmatprep.subr.mxu0 0.0
  %1672 = vmatpush1.msra.mxu0 %v57
  %1673 = vmatprep.subr.mxu0 0.0
  %1674 = vmatpush1.msra.mxu0 %v58
  %1675 = vmatprep.subr.mxu0 0.0
  %1676 = vmatpush1.msra.mxu0 %v59
  %1677 = vmatprep.subr.mxu0 0.0
  %1678 = vmatpush1.msra.mxu0 %v60
  %1679 = vmatprep.subr.mxu0 0.0
  %1680 = vmatpush1.msra.mxu0 0.0
  %1681 = vmatprep.subr.mxu0 0.0
  %1682 = vmatpush1.msra.mxu0 0.0
  %1683 = vmatprep.subr.mxu0 0.0
  %1684 = vmatpush1.msra.mxu0 0.0
  %1685 = vmatprep.subr.mxu0 0.0
  %1686 = vmatpush1.msra.mxu0 0.0
  %1687 = vmatprep.subr.mxu0 0.0
  %1688 = vmatpush1.msra.mxu0 0.0
  %1689 = vmatprep.subr.mxu0 0.0
  %1690 = vmatpush1.msra.mxu0 0.0
  %1691 = vmatprep.subr.mxu0 0.0
  %1692 = vmatpush1.msra.mxu0 0.0
  %1693 = vmatprep.subr.mxu0 0.0
  %1694 = vmatpush1.msra.mxu0 0.0
  %1695 = vmatprep.subr.mxu0 0.0
  %1696 = vmatpush1.msra.mxu0 0.0
  %1697 = vmatprep.subr.mxu0 0.0
  %1698 = vmatpush1.msra.mxu0 0.0
  %1699 = vmatprep.subr.mxu0 0.0
  %1700 = vmatpush1.msra.mxu0 0.0
  %1701 = vmatprep.subr.mxu0 0.0
  %1702 = vmatpush1.msra.mxu0 0.0
  %1703 = vmatprep.subr.mxu0 0.0
  %1704 = vmatpush1.msra.mxu0 0.0
  %1705 = vmatprep.subr.mxu0 0.0
  %1706 = vmatpush1.msra.mxu0 0.0
  %1707 = vmatprep.subr.mxu0 0.0
  %1708 = vmatpush1.msra.mxu0 0.0
  %1709 = vmatprep.subr.mxu0 0.0
  %1710 = vmatpush1.msra.mxu0 0.0
  %1711 = vmatprep.subr.mxu0 0.0
  %1712 = vmatpush1.msra.mxu0 0.0
  %1713 = vmatprep.subr.mxu0 0.0
  %1714 = vmatpush1.msra.mxu0 0.0
  %1715 = vmatprep.subr.mxu0 0.0
  %1716 = vmatpush1.msra.mxu0 0.0
  %1717 = vmatprep.subr.mxu0 0.0
  %1718 = vmatpush1.msra.mxu0 0.0
  %1719 = vmatprep.subr.mxu0 0.0
  %1720 = vmatpush1.msra.mxu0 0.0
  %1721 = vmatprep.subr.mxu0 0.0
  %1722 = vmatpush1.msra.mxu0 0.0
  %1723 = vmatprep.subr.mxu0 0.0
  %1724 = vmatpush1.msra.mxu0 0.0
  %1725 = vmatprep.subr.mxu0 0.0
  %1726 = vmatpush1.msra.mxu0 0.0
  %1727 = vmatprep.mubr.f32.mxu0 0.0
  %1728 = vmatmul.mubr.f32.gmra.mrb[0].mxu0 %v1661
  %v1729 = vpop.f32.mrb[0].mxu0
  %v1730 = vadd.f32 %v61, %v1729
  %v1731 = vpop.f32.mrb[0].mxu0
  %1732 = vdwg.mxu0
  %v1733 = vmax.f32 %v1730, 0.0
  %v1734 = vsel %vm82, %v1733, %v1484
  %v1736 = vsel %vm84, %v1734, 0
  %1738 = vmatprep.subr.mxu0 0.0
  %1739 = vmatpush1.msra.mxu0 %v62
  %1740 = vmatprep.subr.mxu0 0.0
  %1741 = vmatpush1.msra.mxu0 %v63
  %1742 = vmatprep.subr.mxu0 0.0
  %1743 = vmatpush1.msra.mxu0 %v64
  %1744 = vmatprep.subr.mxu0 0.0
  %1745 = vmatpush1.msra.mxu0 %v65
  %1746 = vmatprep.subr.mxu0 0.0
  %1747 = vmatpush1.msra.mxu0 %v66
  %1748 = vmatprep.subr.mxu0 0.0
  %1749 = vmatpush1.msra.mxu0 %v67
  %1750 = vmatprep.subr.mxu0 0.0
  %1751 = vmatpush1.msra.mxu0 %v68
  %1752 = vmatprep.subr.mxu0 0.0
  %1753 = vmatpush1.msra.mxu0 %v69
  %1754 = vmatprep.subr.mxu0 0.0
  %1755 = vmatpush1.msra.mxu0 0.0
  %1756 = vmatprep.subr.mxu0 0.0
  %1757 = vmatpush1.msra.mxu0 0.0
  %1758 = vmatprep.subr.mxu0 0.0
  %1759 = vmatpush1.msra.mxu0 0.0
  %1760 = vmatprep.subr.mxu0 0.0
  %1761 = vmatpush1.msra.mxu0 0.0
  %1762 = vmatprep.subr.mxu0 0.0
  %1763 = vmatpush1.msra.mxu0 0.0
  %1764 = vmatprep.subr.mxu0 0.0
  %1765 = vmatpush1.msra.mxu0 0.0
  %1766 = vmatprep.subr.mxu0 0.0
  %1767 = vmatpush1.msra.mxu0 0.0
  %1768 = vmatprep.subr.mxu0 0.0
  %1769 = vmatpush1.msra.mxu0 0.0
  %1770 = vmatprep.subr.mxu0 0.0
  %1771 = vmatpush1.msra.mxu0 0.0
  %1772 = vmatprep.subr.mxu0 0.0
  %1773 = vmatpush1.msra.mxu0 0.0
  %1774 = vmatprep.subr.mxu0 0.0
  %1775 = vmatpush1.msra.mxu0 0.0
  %1776 = vmatprep.subr.mxu0 0.0
  %1777 = vmatpush1.msra.mxu0 0.0
  %1778 = vmatprep.subr.mxu0 0.0
  %1779 = vmatpush1.msra.mxu0 0.0
  %1780 = vmatprep.subr.mxu0 0.0
  %1781 = vmatpush1.msra.mxu0 0.0
  %1782 = vmatprep.subr.mxu0 0.0
  %1783 = vmatpush1.msra.mxu0 0.0
  %1784 = vmatprep.subr.mxu0 0.0
  %1785 = vmatpush1.msra.mxu0 0.0
  %1786 = vmatprep.subr.mxu0 0.0
  %1787 = vmatpush1.msra.mxu0 0.0
  %1788 = vmatprep.subr.mxu0 0.0
  %1789 = vmatpush1.msra.mxu0 0.0
  %1790 = vmatprep.subr.mxu0 0.0
  %1791 = vmatpush1.msra.mxu0 0.0
  %1792 = vmatprep.subr.mxu0 0.0
  %1793 = vmatpush1.msra.mxu0 0.0
  %1794 = vmatprep.subr.mxu0 0.0
  %1795 = vmatpush1.msra.mxu0 0.0
  %1796 = vmatprep.subr.mxu0 0.0
  %1797 = vmatpush1.msra.mxu0 0.0
  %1798 = vmatprep.subr.mxu0 0.0
  %1799 = vmatpush1.msra.mxu0 0.0
  %1800 = vmatprep.subr.mxu0 0.0
  %1801 = vmatpush1.msra.mxu0 0.0
  %1802 = vmatprep.mubr.f32.mxu0 0.0
  %1803 = vmatmul.mubr.f32.gmra.mrb[0].mxu0 %v1736
  %v1804 = vpop.f32.mrb[0].mxu0
  %v1805 = vadd.f32 %v70, %v1804
  %v1806 = vpop.f32.mrb[0].mxu0
  %1807 = vdwg.mxu0
  %v1808 = vxor.u32 %v1805, 2147483648
  %v1809 = vmul.f32 %v1808, 1.442695
  %v1810 = vpow.pop %v1809
  %v1811 = vadd.f32 %v1810, 1.0
  %v1812 = vrcp.pop %v1811
  %v1813 = vmul.f32 1.0, %v1812
  %v1814 = vtanh.pop %v1805
  %v1815 = vmul.f32 %v1813, %v1475
  %1817 = vrot.lane.b32.xlu0 %v1814, 64
  %v1818 = vpop.permute.xlu0 %1817
  %v1820 = vmul.f32 %v1813, %v1818
  %1822 = vrot.lane.b32.xlu0 %v1820, 32
  %v1823 = vpop.permute.xlu0 %1822
  %v1825 = vadd.f32 %v1815, %v1823
  %v1826 = vtanh.pop %v1825
  %1828 = vrot.lane.b32.xlu0 %v1826, 64
  %v1829 = vpop.permute.xlu0 %1828
  %v1831 = vmul.f32 %v1813, %v1829
  %1833 = vrot.lane.b32.xlu0 %v1831, 64
  %v1834 = vpop.permute.xlu0 %1833
  %1836 = vst.msk [vmem:[%s12 + $0x4] sm:$0x1] %vm433, %v1834
  %1838 = vrot.lane.b32.xlu0 %v1825, 32
  %v1839 = vpop.permute.xlu0 %1838
  %1841 = vst.msk [vmem:[%s12 + $0x4] sm:$0x1] %vm439, %v1839
  %1842 = vrot.lane.b32.xlu0 %v1581, 96
  %v1843 = vpop.permute.xlu0 %1842
  %1845 = vst.msk [vmem:[%s12 + $0x4] sm:$0x1] %vm444, %v1843
  %v1846 = vld [vmem:[%s0 + $0x5] sm:$0x1]
  %v1847 = vsel %vm82, %v1846, %v1834
  %v1849 = vsel %vm84, %v1847, 0
  %1851 = vmatprep.subr.mxu0 0.0
  %1852 = vmatpush1.msra.mxu0 %v44
  %1853 = vmatprep.subr.mxu0 0.0
  %1854 = vmatpush1.msra.mxu0 %v45
  %1855 = vmatprep.subr.mxu0 0.0
  %1856 = vmatpush1.msra.mxu0 %v46
  %1857 = vmatprep.subr.mxu0 0.0
  %1858 = vmatpush1.msra.mxu0 %v47
  %1859 = vmatprep.subr.mxu0 0.0
  %1860 = vmatpush1.msra.mxu0 %v48
  %1861 = vmatprep.subr.mxu0 0.0
  %1862 = vmatpush1.msra.mxu0 %v49
  %1863 = vmatprep.subr.mxu0 0.0
  %1864 = vmatpush1.msra.mxu0 %v50
  %1865 = vmatprep.subr.mxu0 0.0
  %1866 = vmatpush1.msra.mxu0 %v51
  %1867 = vmatprep.subr.mxu0 0.0
  %1868 = vmatpush1.msra.mxu0 0.0
  %1869 = vmatprep.subr.mxu0 0.0
  %1870 = vmatpush1.msra.mxu0 0.0
  %1871 = vmatprep.subr.mxu0 0.0
  %1872 = vmatpush1.msra.mxu0 0.0
  %1873 = vmatprep.subr.mxu0 0.0
  %1874 = vmatpush1.msra.mxu0 0.0
  %1875 = vmatprep.subr.mxu0 0.0
  %1876 = vmatpush1.msra.mxu0 0.0
  %1877 = vmatprep.subr.mxu0 0.0
  %1878 = vmatpush1.msra.mxu0 0.0
  %1879 = vmatprep.subr.mxu0 0.0
  %1880 = vmatpush1.msra.mxu0 0.0
  %1881 = vmatprep.subr.mxu0 0.0
  %1882 = vmatpush1.msra.mxu0 0.0
  %1883 = vmatprep.subr.mxu0 0.0
  %1884 = vmatpush1.msra.mxu0 0.0
  %1885 = vmatprep.subr.mxu0 0.0
  %1886 = vmatpush1.msra.mxu0 0.0
  %1887 = vmatprep.subr.mxu0 0.0
  %1888 = vmatpush1.msra.mxu0 0.0
  %1889 = vmatprep.subr.mxu0 0.0
  %1890 = vmatpush1.msra.mxu0 0.0
  %1891 = vmatprep.subr.mxu0 0.0
  %1892 = vmatpush1.msra.mxu0 0.0
  %1893 = vmatprep.subr.mxu0 0.0
  %1894 = vmatpush1.msra.mxu0 0.0
  %1895 = vmatprep.subr.mxu0 0.0
  %1896 = vmatpush1.msra.mxu0 0.0
  %1897 = vmatprep.subr.mxu0 0.0
  %1898 = vmatpush1.msra.mxu0 0.0
  %1899 = vmatprep.subr.mxu0 0.0
  %1900 = vmatpush1.msra.mxu0 0.0
  %1901 = vmatprep.subr.mxu0 0.0
  %1902 = vmatpush1.msra.mxu0 0.0
  %1903 = vmatprep.subr.mxu0 0.0
  %1904 = vmatpush1.msra.mxu0 0.0
  %1905 = vmatprep.subr.mxu0 0.0
  %1906 = vmatpush1.msra.mxu0 0.0
  %1907 = vmatprep.subr.mxu0 0.0
  %1908 = vmatpush1.msra.mxu0 0.0
  %1909 = vmatprep.subr.mxu0 0.0
  %1910 = vmatpush1.msra.mxu0 0.0
  %1911 = vmatprep.subr.mxu0 0.0
  %1912 = vmatpush1.msra.mxu0 0.0
  %1913 = vmatprep.subr.mxu0 0.0
  %1914 = vmatpush1.msra.mxu0 0.0
  %1915 = vmatprep.mubr.f32.mxu0 0.0
  %1916 = vmatmul.mubr.f32.gmra.mrb[0].mxu0 %v1849
  %v1917 = vpop.f32.mrb[0].mxu0
  %v1918 = vadd.f32 %v52, %v1917
  %v1919 = vpop.f32.mrb[0].mxu0
  %1920 = vdwg.mxu0
  %v1921 = vsel %vm158, %v1918, -inf
  %1922 = vmax.xlane.f32.xlu0 %v1921
  %v1923 = vpop.xlane.xlu0 %1922
  %v1924 = vsub.f32 %v1918, %v1923
  %v1925 = vmul.f32 %v1924, 1.442695
  %v1926 = vpow.pop %v1925
  %v1927 = vsel %vm158, %v1926, 0.0
  %1928 = vadd.xlane.f32.xlu0 %v1927
  %v1929 = vpop.xlane.xlu0 %1928
  %v1930 = vrcp.pop %v1929
  %v1931 = vmul.f32 %v1926, %v1930
  %v1933 = vsel %vm170, %v1931, 0
  %1935 = vmatprep.subr.mxu0 0.0
  %1936 = vmatpush1.msra.mxu0 %v42
  %1937 = vmatprep.subr.mxu0 0.0
  %1938 = vmatpush1.msra.mxu0 %v43
  %1939 = vmatprep.subr.mxu0 0.0
  %1940 = vmatpush1.msra.mxu0 0.0
  %1941 = vmatprep.subr.mxu0 0.0
  %1942 = vmatpush1.msra.mxu0 0.0
  %1943 = vmatprep.subr.mxu0 0.0
  %1944 = vmatpush1.msra.mxu0 0.0
  %1945 = vmatprep.subr.mxu0 0.0
  %1946 = vmatpush1.msra.mxu0 0.0
  %1947 = vmatprep.subr.mxu0 0.0
  %1948 = vmatpush1.msra.mxu0 0.0
  %1949 = vmatprep.subr.mxu0 0.0
  %1950 = vmatpush1.msra.mxu0 0.0
  %1951 = vmatprep.subr.mxu0 0.0
  %1952 = vmatpush1.msra.mxu0 0.0
  %1953 = vmatprep.subr.mxu0 0.0
  %1954 = vmatpush1.msra.mxu0 0.0
  %1955 = vmatprep.subr.mxu0 0.0
  %1956 = vmatpush1.msra.mxu0 0.0
  %1957 = vmatprep.subr.mxu0 0.0
  %1958 = vmatpush1.msra.mxu0 0.0
  %1959 = vmatprep.subr.mxu0 0.0
  %1960 = vmatpush1.msra.mxu0 0.0
  %1961 = vmatprep.subr.mxu0 0.0
  %1962 = vmatpush1.msra.mxu0 0.0
  %1963 = vmatprep.subr.mxu0 0.0
  %1964 = vmatpush1.msra.mxu0 0.0
  %1965 = vmatprep.subr.mxu0 0.0
  %1966 = vmatpush1.msra.mxu0 0.0
  %1967 = vmatprep.subr.mxu0 0.0
  %1968 = vmatpush1.msra.mxu0 0.0
  %1969 = vmatprep.subr.mxu0 0.0
  %1970 = vmatpush1.msra.mxu0 0.0
  %1971 = vmatprep.subr.mxu0 0.0
  %1972 = vmatpush1.msra.mxu0 0.0
  %1973 = vmatprep.subr.mxu0 0.0
  %1974 = vmatpush1.msra.mxu0 0.0
  %1975 = vmatprep.subr.mxu0 0.0
  %1976 = vmatpush1.msra.mxu0 0.0
  %1977 = vmatprep.subr.mxu0 0.0
  %1978 = vmatpush1.msra.mxu0 0.0
  %1979 = vmatprep.subr.mxu0 0.0
  %1980 = vmatpush1.msra.mxu0 0.0
  %1981 = vmatprep.subr.mxu0 0.0
  %1982 = vmatpush1.msra.mxu0 0.0
  %1983 = vmatprep.subr.mxu0 0.0
  %1984 = vmatpush1.msra.mxu0 0.0
  %1985 = vmatprep.subr.mxu0 0.0
  %1986 = vmatpush1.msra.mxu0 0.0
  %1987 = vmatprep.subr.mxu0 0.0
  %1988 = vmatpush1.msra.mxu0 0.0
  %1989 = vmatprep.subr.mxu0 0.0
  %1990 = vmatpush1.msra.mxu0 0.0
  %1991 = vmatprep.subr.mxu0 0.0
  %1992 = vmatpush1.msra.mxu0 0.0
  %1993 = vmatprep.subr.mxu0 0.0
  %1994 = vmatpush1.msra.mxu0 0.0
  %1995 = vmatprep.subr.mxu0 0.0
  %1996 = vmatpush1.msra.mxu0 0.0
  %1997 = vmatprep.subr.mxu0 0.0
  %1998 = vmatpush1.msra.mxu0 0.0
  %1999 = vmatprep.mubr.f32.mxu0 0.0
  %2000 = vmatmul.mubr.f32.gmra.mrb[0].mxu0 %v1933
  %v2001 = vpop.f32.mrb[0].mxu0
  %v2002 = vadd.f32 0.0, %v2001
  %v2003 = vpop.f32.mrb[0].mxu0
  %2004 = vdwg.mxu0
  %2006 = vrot.lane.b32.xlu0 %v2002, 32
  %v2007 = vpop.permute.xlu0 %2006
  %v2009 = vsel %vm82, %v1846, %v2007
  %v2011 = vsel %vm84, %v2009, 0
  %2013 = vmatprep.subr.mxu0 0.0
  %2014 = vmatpush1.msra.mxu0 %v53
  %2015 = vmatprep.subr.mxu0 0.0
  %2016 = vmatpush1.msra.mxu0 %v54
  %2017 = vmatprep.subr.mxu0 0.0
  %2018 = vmatpush1.msra.mxu0 %v55
  %2019 = vmatprep.subr.mxu0 0.0
  %2020 = vmatpush1.msra.mxu0 %v56
  %2021 = vmatprep.subr.mxu0 0.0
  %2022 = vmatpush1.msra.mxu0 %v57
  %2023 = vmatprep.subr.mxu0 0.0
  %2024 = vmatpush1.msra.mxu0 %v58
  %2025 = vmatprep.subr.mxu0 0.0
  %2026 = vmatpush1.msra.mxu0 %v59
  %2027 = vmatprep.subr.mxu0 0.0
  %2028 = vmatpush1.msra.mxu0 %v60
  %2029 = vmatprep.subr.mxu0 0.0
  %2030 = vmatpush1.msra.mxu0 0.0
  %2031 = vmatprep.subr.mxu0 0.0
  %2032 = vmatpush1.msra.mxu0 0.0
  %2033 = vmatprep.subr.mxu0 0.0
  %2034 = vmatpush1.msra.mxu0 0.0
  %2035 = vmatprep.subr.mxu0 0.0
  %2036 = vmatpush1.msra.mxu0 0.0
  %2037 = vmatprep.subr.mxu0 0.0
  %2038 = vmatpush1.msra.mxu0 0.0
  %2039 = vmatprep.subr.mxu0 0.0
  %2040 = vmatpush1.msra.mxu0 0.0
  %2041 = vmatprep.subr.mxu0 0.0
  %2042 = vmatpush1.msra.mxu0 0.0
  %2043 = vmatprep.subr.mxu0 0.0
  %2044 = vmatpush1.msra.mxu0 0.0
  %2045 = vmatprep.subr.mxu0 0.0
  %2046 = vmatpush1.msra.mxu0 0.0
  %2047 = vmatprep.subr.mxu0 0.0
  %2048 = vmatpush1.msra.mxu0 0.0
  %2049 = vmatprep.subr.mxu0 0.0
  %2050 = vmatpush1.msra.mxu0 0.0
  %2051 = vmatprep.subr.mxu0 0.0
  %2052 = vmatpush1.msra.mxu0 0.0
  %2053 = vmatprep.subr.mxu0 0.0
  %2054 = vmatpush1.msra.mxu0 0.0
  %2055 = vmatprep.subr.mxu0 0.0
  %2056 = vmatpush1.msra.mxu0 0.0
  %2057 = vmatprep.subr.mxu0 0.0
  %2058 = vmatpush1.msra.mxu0 0.0
  %2059 = vmatprep.subr.mxu0 0.0
  %2060 = vmatpush1.msra.mxu0 0.0
  %2061 = vmatprep.subr.mxu0 0.0
  %2062 = vmatpush1.msra.mxu0 0.0
  %2063 = vmatprep.subr.mxu0 0.0
  %2064 = vmatpush1.msra.mxu0 0.0
  %2065 = vmatprep.subr.mxu0 0.0
  %2066 = vmatpush1.msra.mxu0 0.0
  %2067 = vmatprep.subr.mxu0 0.0
  %2068 = vmatpush1.msra.mxu0 0.0
  %2069 = vmatprep.subr.mxu0 0.0
  %2070 = vmatpush1.msra.mxu0 0.0
  %2071 = vmatprep.subr.mxu0 0.0
  %2072 = vmatpush1.msra.mxu0 0.0
  %2073 = vmatprep.subr.mxu0 0.0
  %2074 = vmatpush1.msra.mxu0 0.0
  %2075 = vmatprep.subr.mxu0 0.0
  %2076 = vmatpush1.msra.mxu0 0.0
  %2077 = vmatprep.mubr.f32.mxu0 0.0
  %2078 = vmatmul.mubr.f32.gmra.mrb[0].mxu0 %v2011
  %v2079 = vpop.f32.mrb[0].mxu0
  %v2080 = vadd.f32 %v61, %v2079
  %v2081 = vpop.f32.mrb[0].mxu0
  %2082 = vdwg.mxu0
  %v2083 = vmax.f32 %v2080, 0.0
  %v2084 = vsel %vm82, %v2083, %v1834
  %v2086 = vsel %vm84, %v2084, 0
  %2088 = vmatprep.subr.mxu0 0.0
  %2089 = vmatpush1.msra.mxu0 %v62
  %2090 = vmatprep.subr.mxu0 0.0
  %2091 = vmatpush1.msra.mxu0 %v63
  %2092 = vmatprep.subr.mxu0 0.0
  %2093 = vmatpush1.msra.mxu0 %v64
  %2094 = vmatprep.subr.mxu0 0.0
  %2095 = vmatpush1.msra.mxu0 %v65
  %2096 = vmatprep.subr.mxu0 0.0
  %2097 = vmatpush1.msra.mxu0 %v66
  %2098 = vmatprep.subr.mxu0 0.0
  %2099 = vmatpush1.msra.mxu0 %v67
  %2100 = vmatprep.subr.mxu0 0.0
  %2101 = vmatpush1.msra.mxu0 %v68
  %2102 = vmatprep.subr.mxu0 0.0
  %2103 = vmatpush1.msra.mxu0 %v69
  %2104 = vmatprep.subr.mxu0 0.0
  %2105 = vmatpush1.msra.mxu0 0.0
  %2106 = vmatprep.subr.mxu0 0.0
  %2107 = vmatpush1.msra.mxu0 0.0
  %2108 = vmatprep.subr.mxu0 0.0
  %2109 = vmatpush1.msra.mxu0 0.0
  %2110 = vmatprep.subr.mxu0 0.0
  %2111 = vmatpush1.msra.mxu0 0.0
  %2112 = vmatprep.subr.mxu0 0.0
  %2113 = vmatpush1.msra.mxu0 0.0
  %2114 = vmatprep.subr.mxu0 0.0
  %2115 = vmatpush1.msra.mxu0 0.0
  %2116 = vmatprep.subr.mxu0 0.0
  %2117 = vmatpush1.msra.mxu0 0.0
  %2118 = vmatprep.subr.mxu0 0.0
  %2119 = vmatpush1.msra.mxu0 0.0
  %2120 = vmatprep.subr.mxu0 0.0
  %2121 = vmatpush1.msra.mxu0 0.0
  %2122 = vmatprep.subr.mxu0 0.0
  %2123 = vmatpush1.msra.mxu0 0.0
  %2124 = vmatprep.subr.mxu0 0.0
  %2125 = vmatpush1.msra.mxu0 0.0
  %2126 = vmatprep.subr.mxu0 0.0
  %2127 = vmatpush1.msra.mxu0 0.0
  %2128 = vmatprep.subr.mxu0 0.0
  %2129 = vmatpush1.msra.mxu0 0.0
  %2130 = vmatprep.subr.mxu0 0.0
  %2131 = vmatpush1.msra.mxu0 0.0
  %2132 = vmatprep.subr.mxu0 0.0
  %2133 = vmatpush1.msra.mxu0 0.0
  %2134 = vmatprep.subr.mxu0 0.0
  %2135 = vmatpush1.msra.mxu0 0.0
  %2136 = vmatprep.subr.mxu0 0.0
  %2137 = vmatpush1.msra.mxu0 0.0
  %2138 = vmatprep.subr.mxu0 0.0
  %2139 = vmatpush1.msra.mxu0 0.0
  %2140 = vmatprep.subr.mxu0 0.0
  %2141 = vmatpush1.msra.mxu0 0.0
  %2142 = vmatprep.subr.mxu0 0.0
  %2143 = vmatpush1.msra.mxu0 0.0
  %2144 = vmatprep.subr.mxu0 0.0
  %2145 = vmatpush1.msra.mxu0 0.0
  %2146 = vmatprep.subr.mxu0 0.0
  %2147 = vmatpush1.msra.mxu0 0.0
  %2148 = vmatprep.subr.mxu0 0.0
  %2149 = vmatpush1.msra.mxu0 0.0
  %2150 = vmatprep.subr.mxu0 0.0
  %2151 = vmatpush1.msra.mxu0 0.0
  %2152 = vmatprep.mubr.f32.mxu0 0.0
  %2153 = vmatmul.mubr.f32.gmra.mrb[0].mxu0 %v2086
  %v2154 = vpop.f32.mrb[0].mxu0
  %v2155 = vadd.f32 %v70, %v2154
  %v2156 = vpop.f32.mrb[0].mxu0
  %2157 = vdwg.mxu0
  %v2158 = vxor.u32 %v2155, 2147483648
  %v2159 = vmul.f32 %v2158, 1.442695
  %v2160 = vpow.pop %v2159
  %v2161 = vadd.f32 %v2160, 1.0
  %v2162 = vrcp.pop %v2161
  %v2163 = vmul.f32 1.0, %v2162
  %v2164 = vtanh.pop %v2155
  %v2165 = vmul.f32 %v2163, %v1825
  %2167 = vrot.lane.b32.xlu0 %v2164, 64
  %v2168 = vpop.permute.xlu0 %2167
  %v2170 = vmul.f32 %v2163, %v2168
  %2172 = vrot.lane.b32.xlu0 %v2170, 32
  %v2173 = vpop.permute.xlu0 %2172
  %v2175 = vadd.f32 %v2165, %v2173
  %v2176 = vtanh.pop %v2175
  %2178 = vrot.lane.b32.xlu0 %v2176, 64
  %v2179 = vpop.permute.xlu0 %2178
  %v2181 = vmul.f32 %v2163, %v2179
  %2183 = vrot.lane.b32.xlu0 %v2181, 64
  %v2184 = vpop.permute.xlu0 %2183
  %2186 = vst.msk [vmem:[%s12 + $0x5] sm:$0x1] %vm433, %v2184
  %2188 = vrot.lane.b32.xlu0 %v2175, 32
  %v2189 = vpop.permute.xlu0 %2188
  %2191 = vst.msk [vmem:[%s12 + $0x5] sm:$0x1] %vm439, %v2189
  %2192 = vrot.lane.b32.xlu0 %v1931, 96
  %v2193 = vpop.permute.xlu0 %2192
  %2195 = vst.msk [vmem:[%s12 + $0x5] sm:$0x1] %vm444, %v2193
  %v2196 = vld [vmem:[%s0 + $0x6] sm:$0x1]
  %v2197 = vsel %vm82, %v2196, %v2184
  %v2199 = vsel %vm84, %v2197, 0
  %2201 = vmatprep.subr.mxu0 0.0
  %2202 = vmatpush1.msra.mxu0 %v44
  %2203 = vmatprep.subr.mxu0 0.0
  %2204 = vmatpush1.msra.mxu0 %v45
  %2205 = vmatprep.subr.mxu0 0.0
  %2206 = vmatpush1.msra.mxu0 %v46
  %2207 = vmatprep.subr.mxu0 0.0
  %2208 = vmatpush1.msra.mxu0 %v47
  %2209 = vmatprep.subr.mxu0 0.0
  %2210 = vmatpush1.msra.mxu0 %v48
  %2211 = vmatprep.subr.mxu0 0.0
  %2212 = vmatpush1.msra.mxu0 %v49
  %2213 = vmatprep.subr.mxu0 0.0
  %2214 = vmatpush1.msra.mxu0 %v50
  %2215 = vmatprep.subr.mxu0 0.0
  %2216 = vmatpush1.msra.mxu0 %v51
  %2217 = vmatprep.subr.mxu0 0.0
  %2218 = vmatpush1.msra.mxu0 0.0
  %2219 = vmatprep.subr.mxu0 0.0
  %2220 = vmatpush1.msra.mxu0 0.0
  %2221 = vmatprep.subr.mxu0 0.0
  %2222 = vmatpush1.msra.mxu0 0.0
  %2223 = vmatprep.subr.mxu0 0.0
  %2224 = vmatpush1.msra.mxu0 0.0
  %2225 = vmatprep.subr.mxu0 0.0
  %2226 = vmatpush1.msra.mxu0 0.0
  %2227 = vmatprep.subr.mxu0 0.0
  %2228 = vmatpush1.msra.mxu0 0.0
  %2229 = vmatprep.subr.mxu0 0.0
  %2230 = vmatpush1.msra.mxu0 0.0
  %2231 = vmatprep.subr.mxu0 0.0
  %2232 = vmatpush1.msra.mxu0 0.0
  %2233 = vmatprep.subr.mxu0 0.0
  %2234 = vmatpush1.msra.mxu0 0.0
  %2235 = vmatprep.subr.mxu0 0.0
  %2236 = vmatpush1.msra.mxu0 0.0
  %2237 = vmatprep.subr.mxu0 0.0
  %2238 = vmatpush1.msra.mxu0 0.0
  %2239 = vmatprep.subr.mxu0 0.0
  %2240 = vmatpush1.msra.mxu0 0.0
  %2241 = vmatprep.subr.mxu0 0.0
  %2242 = vmatpush1.msra.mxu0 0.0
  %2243 = vmatprep.subr.mxu0 0.0
  %2244 = vmatpush1.msra.mxu0 0.0
  %2245 = vmatprep.subr.mxu0 0.0
  %2246 = vmatpush1.msra.mxu0 0.0
  %2247 = vmatprep.subr.mxu0 0.0
  %2248 = vmatpush1.msra.mxu0 0.0
  %2249 = vmatprep.subr.mxu0 0.0
  %2250 = vmatpush1.msra.mxu0 0.0
  %2251 = vmatprep.subr.mxu0 0.0
  %2252 = vmatpush1.msra.mxu0 0.0
  %2253 = vmatprep.subr.mxu0 0.0
  %2254 = vmatpush1.msra.mxu0 0.0
  %2255 = vmatprep.subr.mxu0 0.0
  %2256 = vmatpush1.msra.mxu0 0.0
  %2257 = vmatprep.subr.mxu0 0.0
  %2258 = vmatpush1.msra.mxu0 0.0
  %2259 = vmatprep.subr.mxu0 0.0
  %2260 = vmatpush1.msra.mxu0 0.0
  %2261 = vmatprep.subr.mxu0 0.0
  %2262 = vmatpush1.msra.mxu0 0.0
  %2263 = vmatprep.subr.mxu0 0.0
  %2264 = vmatpush1.msra.mxu0 0.0
  %2265 = vmatprep.mubr.f32.mxu0 0.0
  %2266 = vmatmul.mubr.f32.gmra.mrb[0].mxu0 %v2199
  %v2267 = vpop.f32.mrb[0].mxu0
  %v2268 = vadd.f32 %v52, %v2267
  %v2269 = vpop.f32.mrb[0].mxu0
  %2270 = vdwg.mxu0
  %v2271 = vsel %vm158, %v2268, -inf
  %2272 = vmax.xlane.f32.xlu0 %v2271
  %v2273 = vpop.xlane.xlu0 %2272
  %v2274 = vsub.f32 %v2268, %v2273
  %v2275 = vmul.f32 %v2274, 1.442695
  %v2276 = vpow.pop %v2275
  %v2277 = vsel %vm158, %v2276, 0.0
  %2278 = vadd.xlane.f32.xlu0 %v2277
  %v2279 = vpop.xlane.xlu0 %2278
  %v2280 = vrcp.pop %v2279
  %v2281 = vmul.f32 %v2276, %v2280
  %v2283 = vsel %vm170, %v2281, 0
  %2285 = vmatprep.subr.mxu0 0.0
  %2286 = vmatpush1.msra.mxu0 %v42
  %2287 = vmatprep.subr.mxu0 0.0
  %2288 = vmatpush1.msra.mxu0 %v43
  %2289 = vmatprep.subr.mxu0 0.0
  %2290 = vmatpush1.msra.mxu0 0.0
  %2291 = vmatprep.subr.mxu0 0.0
  %2292 = vmatpush1.msra.mxu0 0.0
  %2293 = vmatprep.subr.mxu0 0.0
  %2294 = vmatpush1.msra.mxu0 0.0
  %2295 = vmatprep.subr.mxu0 0.0
  %2296 = vmatpush1.msra.mxu0 0.0
  %2297 = vmatprep.subr.mxu0 0.0
  %2298 = vmatpush1.msra.mxu0 0.0
  %2299 = vmatprep.subr.mxu0 0.0
  %2300 = vmatpush1.msra.mxu0 0.0
  %2301 = vmatprep.subr.mxu0 0.0
  %2302 = vmatpush1.msra.mxu0 0.0
  %2303 = vmatprep.subr.mxu0 0.0
  %2304 = vmatpush1.msra.mxu0 0.0
  %2305 = vmatprep.subr.mxu0 0.0
  %2306 = vmatpush1.msra.mxu0 0.0
  %2307 = vmatprep.subr.mxu0 0.0
  %2308 = vmatpush1.msra.mxu0 0.0
  %2309 = vmatprep.subr.mxu0 0.0
  %2310 = vmatpush1.msra.mxu0 0.0
  %2311 = vmatprep.subr.mxu0 0.0
  %2312 = vmatpush1.msra.mxu0 0.0
  %2313 = vmatprep.subr.mxu0 0.0
  %2314 = vmatpush1.msra.mxu0 0.0
  %2315 = vmatprep.subr.mxu0 0.0
  %2316 = vmatpush1.msra.mxu0 0.0
  %2317 = vmatprep.subr.mxu0 0.0
  %2318 = vmatpush1.msra.mxu0 0.0
  %2319 = vmatprep.subr.mxu0 0.0
  %2320 = vmatpush1.msra.mxu0 0.0
  %2321 = vmatprep.subr.mxu0 0.0
  %2322 = vmatpush1.msra.mxu0 0.0
  %2323 = vmatprep.subr.mxu0 0.0
  %2324 = vmatpush1.msra.mxu0 0.0
  %2325 = vmatprep.subr.mxu0 0.0
  %2326 = vmatpush1.msra.mxu0 0.0
  %2327 = vmatprep.subr.mxu0 0.0
  %2328 = vmatpush1.msra.mxu0 0.0
  %2329 = vmatprep.subr.mxu0 0.0
  %2330 = vmatpush1.msra.mxu0 0.0
  %2331 = vmatprep.subr.mxu0 0.0
  %2332 = vmatpush1.msra.mxu0 0.0
  %2333 = vmatprep.subr.mxu0 0.0
  %2334 = vmatpush1.msra.mxu0 0.0
  %2335 = vmatprep.subr.mxu0 0.0
  %2336 = vmatpush1.msra.mxu0 0.0
  %2337 = vmatprep.subr.mxu0 0.0
  %2338 = vmatpush1.msra.mxu0 0.0
  %2339 = vmatprep.subr.mxu0 0.0
  %2340 = vmatpush1.msra.mxu0 0.0
  %2341 = vmatprep.subr.mxu0 0.0
  %2342 = vmatpush1.msra.mxu0 0.0
  %2343 = vmatprep.subr.mxu0 0.0
  %2344 = vmatpush1.msra.mxu0 0.0
  %2345 = vmatprep.subr.mxu0 0.0
  %2346 = vmatpush1.msra.mxu0 0.0
  %2347 = vmatprep.subr.mxu0 0.0
  %2348 = vmatpush1.msra.mxu0 0.0
  %2349 = vmatprep.mubr.f32.mxu0 0.0
  %2350 = vmatmul.mubr.f32.gmra.mrb[0].mxu0 %v2283
  %v2351 = vpop.f32.mrb[0].mxu0
  %v2352 = vadd.f32 0.0, %v2351
  %v2353 = vpop.f32.mrb[0].mxu0
  %2354 = vdwg.mxu0
  %2356 = vrot.lane.b32.xlu0 %v2352, 32
  %v2357 = vpop.permute.xlu0 %2356
  %v2359 = vsel %vm82, %v2196, %v2357
  %v2361 = vsel %vm84, %v2359, 0
  %2363 = vmatprep.subr.mxu0 0.0
  %2364 = vmatpush1.msra.mxu0 %v53
  %2365 = vmatprep.subr.mxu0 0.0
  %2366 = vmatpush1.msra.mxu0 %v54
  %2367 = vmatprep.subr.mxu0 0.0
  %2368 = vmatpush1.msra.mxu0 %v55
  %2369 = vmatprep.subr.mxu0 0.0
  %2370 = vmatpush1.msra.mxu0 %v56
  %2371 = vmatprep.subr.mxu0 0.0
  %2372 = vmatpush1.msra.mxu0 %v57
  %2373 = vmatprep.subr.mxu0 0.0
  %2374 = vmatpush1.msra.mxu0 %v58
  %2375 = vmatprep.subr.mxu0 0.0
  %2376 = vmatpush1.msra.mxu0 %v59
  %2377 = vmatprep.subr.mxu0 0.0
  %2378 = vmatpush1.msra.mxu0 %v60
  %2379 = vmatprep.subr.mxu0 0.0
  %2380 = vmatpush1.msra.mxu0 0.0
  %2381 = vmatprep.subr.mxu0 0.0
  %2382 = vmatpush1.msra.mxu0 0.0
  %2383 = vmatprep.subr.mxu0 0.0
  %2384 = vmatpush1.msra.mxu0 0.0
  %2385 = vmatprep.subr.mxu0 0.0
  %2386 = vmatpush1.msra.mxu0 0.0
  %2387 = vmatprep.subr.mxu0 0.0
  %2388 = vmatpush1.msra.mxu0 0.0
  %2389 = vmatprep.subr.mxu0 0.0
  %2390 = vmatpush1.msra.mxu0 0.0
  %2391 = vmatprep.subr.mxu0 0.0
  %2392 = vmatpush1.msra.mxu0 0.0
  %2393 = vmatprep.subr.mxu0 0.0
  %2394 = vmatpush1.msra.mxu0 0.0
  %2395 = vmatprep.subr.mxu0 0.0
  %2396 = vmatpush1.msra.mxu0 0.0
  %2397 = vmatprep.subr.mxu0 0.0
  %2398 = vmatpush1.msra.mxu0 0.0
  %2399 = vmatprep.subr.mxu0 0.0
  %2400 = vmatpush1.msra.mxu0 0.0
  %2401 = vmatprep.subr.mxu0 0.0
  %2402 = vmatpush1.msra.mxu0 0.0
  %2403 = vmatprep.subr.mxu0 0.0
  %2404 = vmatpush1.msra.mxu0 0.0
  %2405 = vmatprep.subr.mxu0 0.0
  %2406 = vmatpush1.msra.mxu0 0.0
  %2407 = vmatprep.subr.mxu0 0.0
  %2408 = vmatpush1.msra.mxu0 0.0
  %2409 = vmatprep.subr.mxu0 0.0
  %2410 = vmatpush1.msra.mxu0 0.0
  %2411 = vmatprep.subr.mxu0 0.0
  %2412 = vmatpush1.msra.mxu0 0.0
  %2413 = vmatprep.subr.mxu0 0.0
  %2414 = vmatpush1.msra.mxu0 0.0
  %2415 = vmatprep.subr.mxu0 0.0
  %2416 = vmatpush1.msra.mxu0 0.0
  %2417 = vmatprep.subr.mxu0 0.0
  %2418 = vmatpush1.msra.mxu0 0.0
  %2419 = vmatprep.subr.mxu0 0.0
  %2420 = vmatpush1.msra.mxu0 0.0
  %2421 = vmatprep.subr.mxu0 0.0
  %2422 = vmatpush1.msra.mxu0 0.0
  %2423 = vmatprep.subr.mxu0 0.0
  %2424 = vmatpush1.msra.mxu0 0.0
  %2425 = vmatprep.subr.mxu0 0.0
  %2426 = vmatpush1.msra.mxu0 0.0
  %2427 = vmatprep.mubr.f32.mxu0 0.0
  %2428 = vmatmul.mubr.f32.gmra.mrb[0].mxu0 %v2361
  %v2429 = vpop.f32.mrb[0].mxu0
  %v2430 = vadd.f32 %v61, %v2429
  %v2431 = vpop.f32.mrb[0].mxu0
  %2432 = vdwg.mxu0
  %v2433 = vmax.f32 %v2430, 0.0
  %v2434 = vsel %vm82, %v2433, %v2184
  %v2436 = vsel %vm84, %v2434, 0
  %2438 = vmatprep.subr.mxu0 0.0
  %2439 = vmatpush1.msra.mxu0 %v62
  %2440 = vmatprep.subr.mxu0 0.0
  %2441 = vmatpush1.msra.mxu0 %v63
  %2442 = vmatprep.subr.mxu0 0.0
  %2443 = vmatpush1.msra.mxu0 %v64
  %2444 = vmatprep.subr.mxu0 0.0
  %2445 = vmatpush1.msra.mxu0 %v65
  %2446 = vmatprep.subr.mxu0 0.0
  %2447 = vmatpush1.msra.mxu0 %v66
  %2448 = vmatprep.subr.mxu0 0.0
  %2449 = vmatpush1.msra.mxu0 %v67
  %2450 = vmatprep.subr.mxu0 0.0
  %2451 = vmatpush1.msra.mxu0 %v68
  %2452 = vmatprep.subr.mxu0 0.0
  %2453 = vmatpush1.msra.mxu0 %v69
  %2454 = vmatprep.subr.mxu0 0.0
  %2455 = vmatpush1.msra.mxu0 0.0
  %2456 = vmatprep.subr.mxu0 0.0
  %2457 = vmatpush1.msra.mxu0 0.0
  %2458 = vmatprep.subr.mxu0 0.0
  %2459 = vmatpush1.msra.mxu0 0.0
  %2460 = vmatprep.subr.mxu0 0.0
  %2461 = vmatpush1.msra.mxu0 0.0
  %2462 = vmatprep.subr.mxu0 0.0
  %2463 = vmatpush1.msra.mxu0 0.0
  %2464 = vmatprep.subr.mxu0 0.0
  %2465 = vmatpush1.msra.mxu0 0.0
  %2466 = vmatprep.subr.mxu0 0.0
  %2467 = vmatpush1.msra.mxu0 0.0
  %2468 = vmatprep.subr.mxu0 0.0
  %2469 = vmatpush1.msra.mxu0 0.0
  %2470 = vmatprep.subr.mxu0 0.0
  %2471 = vmatpush1.msra.mxu0 0.0
  %2472 = vmatprep.subr.mxu0 0.0
  %2473 = vmatpush1.msra.mxu0 0.0
  %2474 = vmatprep.subr.mxu0 0.0
  %2475 = vmatpush1.msra.mxu0 0.0
  %2476 = vmatprep.subr.mxu0 0.0
  %2477 = vmatpush1.msra.mxu0 0.0
  %2478 = vmatprep.subr.mxu0 0.0
  %2479 = vmatpush1.msra.mxu0 0.0
  %2480 = vmatprep.subr.mxu0 0.0
  %2481 = vmatpush1.msra.mxu0 0.0
  %2482 = vmatprep.subr.mxu0 0.0
  %2483 = vmatpush1.msra.mxu0 0.0
  %2484 = vmatprep.subr.mxu0 0.0
  %2485 = vmatpush1.msra.mxu0 0.0
  %2486 = vmatprep.subr.mxu0 0.0
  %2487 = vmatpush1.msra.mxu0 0.0
  %2488 = vmatprep.subr.mxu0 0.0
  %2489 = vmatpush1.msra.mxu0 0.0
  %2490 = vmatprep.subr.mxu0 0.0
  %2491 = vmatpush1.msra.mxu0 0.0
  %2492 = vmatprep.subr.mxu0 0.0
  %2493 = vmatpush1.msra.mxu0 0.0
  %2494 = vmatprep.subr.mxu0 0.0
  %2495 = vmatpush1.msra.mxu0 0.0
  %2496 = vmatprep.subr.mxu0 0.0
  %2497 = vmatpush1.msra.mxu0 0.0
  %2498 = vmatprep.subr.mxu0 0.0
  %2499 = vmatpush1.msra.mxu0 0.0
  %2500 = vmatprep.subr.mxu0 0.0
  %2501 = vmatpush1.msra.mxu0 0.0
  %2502 = vmatprep.mubr.f32.mxu0 0.0
  %2503 = vmatmul.mubr.f32.gmra.mrb[0].mxu0 %v2436
  %v2504 = vpop.f32.mrb[0].mxu0
  %v2505 = vadd.f32 %v70, %v2504
  %v2506 = vpop.f32.mrb[0].mxu0
  %2507 = vdwg.mxu0
  %v2508 = vxor.u32 %v2505, 2147483648
  %v2509 = vmul.f32 %v2508, 1.442695
  %v2510 = vpow.pop %v2509
  %v2511 = vadd.f32 %v2510, 1.0
  %v2512 = vrcp.pop %v2511
  %v2513 = vmul.f32 1.0, %v2512
  %v2514 = vtanh.pop %v2505
  %v2515 = vmul.f32 %v2513, %v2175
  %2517 = vrot.lane.b32.xlu0 %v2514, 64
  %v2518 = vpop.permute.xlu0 %2517
  %v2520 = vmul.f32 %v2513, %v2518
  %2522 = vrot.lane.b32.xlu0 %v2520, 32
  %v2523 = vpop.permute.xlu0 %2522
  %v2525 = vadd.f32 %v2515, %v2523
  %v2526 = vtanh.pop %v2525
  %2528 = vrot.lane.b32.xlu0 %v2526, 64
  %v2529 = vpop.permute.xlu0 %2528
  %v2531 = vmul.f32 %v2513, %v2529
  %2533 = vrot.lane.b32.xlu0 %v2531, 64
  %v2534 = vpop.permute.xlu0 %2533
  %2536 = vst.msk [vmem:[%s12 + $0x6] sm:$0x1] %vm433, %v2534
  %2538 = vrot.lane.b32.xlu0 %v2525, 32
  %v2539 = vpop.permute.xlu0 %2538
  %2541 = vst.msk [vmem:[%s12 + $0x6] sm:$0x1] %vm439, %v2539
  %2542 = vrot.lane.b32.xlu0 %v2281, 96
  %v2543 = vpop.permute.xlu0 %2542
  %2545 = vst.msk [vmem:[%s12 + $0x6] sm:$0x1] %vm444, %v2543
  %v2546 = vld [vmem:[%s0 + $0x7] sm:$0x1]
  %v2547 = vsel %vm82, %v2546, %v2534
  %v2549 = vsel %vm84, %v2547, 0
  %2551 = vmatprep.subr.mxu0 0.0
  %2552 = vmatpush1.msra.mxu0 %v44
  %2553 = vmatprep.subr.mxu0 0.0
  %2554 = vmatpush1.msra.mxu0 %v45
  %2555 = vmatprep.subr.mxu0 0.0
  %2556 = vmatpush1.msra.mxu0 %v46
  %2557 = vmatprep.subr.mxu0 0.0
  %2558 = vmatpush1.msra.mxu0 %v47
  %2559 = vmatprep.subr.mxu0 0.0
  %2560 = vmatpush1.msra.mxu0 %v48
  %2561 = vmatprep.subr.mxu0 0.0
  %2562 = vmatpush1.msra.mxu0 %v49
  %2563 = vmatprep.subr.mxu0 0.0
  %2564 = vmatpush1.msra.mxu0 %v50
  %2565 = vmatprep.subr.mxu0 0.0
  %2566 = vmatpush1.msra.mxu0 %v51
  %2567 = vmatprep.subr.mxu0 0.0
  %2568 = vmatpush1.msra.mxu0 0.0
  %2569 = vmatprep.subr.mxu0 0.0
  %2570 = vmatpush1.msra.mxu0 0.0
  %2571 = vmatprep.subr.mxu0 0.0
  %2572 = vmatpush1.msra.mxu0 0.0
  %2573 = vmatprep.subr.mxu0 0.0
  %2574 = vmatpush1.msra.mxu0 0.0
  %2575 = vmatprep.subr.mxu0 0.0
  %2576 = vmatpush1.msra.mxu0 0.0
  %2577 = vmatprep.subr.mxu0 0.0
  %2578 = vmatpush1.msra.mxu0 0.0
  %2579 = vmatprep.subr.mxu0 0.0
  %2580 = vmatpush1.msra.mxu0 0.0
  %2581 = vmatprep.subr.mxu0 0.0
  %2582 = vmatpush1.msra.mxu0 0.0
  %2583 = vmatprep.subr.mxu0 0.0
  %2584 = vmatpush1.msra.mxu0 0.0
  %2585 = vmatprep.subr.mxu0 0.0
  %2586 = vmatpush1.msra.mxu0 0.0
  %2587 = vmatprep.subr.mxu0 0.0
  %2588 = vmatpush1.msra.mxu0 0.0
  %2589 = vmatprep.subr.mxu0 0.0
  %2590 = vmatpush1.msra.mxu0 0.0
  %2591 = vmatprep.subr.mxu0 0.0
  %2592 = vmatpush1.msra.mxu0 0.0
  %2593 = vmatprep.subr.mxu0 0.0
  %2594 = vmatpush1.msra.mxu0 0.0
  %2595 = vmatprep.subr.mxu0 0.0
  %2596 = vmatpush1.msra.mxu0 0.0
  %2597 = vmatprep.subr.mxu0 0.0
  %2598 = vmatpush1.msra.mxu0 0.0
  %2599 = vmatprep.subr.mxu0 0.0
  %2600 = vmatpush1.msra.mxu0 0.0
  %2601 = vmatprep.subr.mxu0 0.0
  %2602 = vmatpush1.msra.mxu0 0.0
  %2603 = vmatprep.subr.mxu0 0.0
  %2604 = vmatpush1.msra.mxu0 0.0
  %2605 = vmatprep.subr.mxu0 0.0
  %2606 = vmatpush1.msra.mxu0 0.0
  %2607 = vmatprep.subr.mxu0 0.0
  %2608 = vmatpush1.msra.mxu0 0.0
  %2609 = vmatprep.subr.mxu0 0.0
  %2610 = vmatpush1.msra.mxu0 0.0
  %2611 = vmatprep.subr.mxu0 0.0
  %2612 = vmatpush1.msra.mxu0 0.0
  %2613 = vmatprep.subr.mxu0 0.0
  %2614 = vmatpush1.msra.mxu0 0.0
  %2615 = vmatprep.mubr.f32.mxu0 0.0
  %2616 = vmatmul.mubr.f32.gmra.mrb[0].mxu0 %v2549
  %v2617 = vpop.f32.mrb[0].mxu0
  %v2618 = vadd.f32 %v52, %v2617
  %v2619 = vpop.f32.mrb[0].mxu0
  %2620 = vdwg.mxu0
  %v2621 = vsel %vm158, %v2618, -inf
  %2622 = vmax.xlane.f32.xlu0 %v2621
  %v2623 = vpop.xlane.xlu0 %2622
  %v2624 = vsub.f32 %v2618, %v2623
  %v2625 = vmul.f32 %v2624, 1.442695
  %v2626 = vpow.pop %v2625
  %v2627 = vsel %vm158, %v2626, 0.0
  %2628 = vadd.xlane.f32.xlu0 %v2627
  %v2629 = vpop.xlane.xlu0 %2628
  %v2630 = vrcp.pop %v2629
  %v2631 = vmul.f32 %v2626, %v2630
  %v2633 = vsel %vm170, %v2631, 0
  %2635 = vmatprep.subr.mxu0 0.0
  %2636 = vmatpush1.msra.mxu0 %v42
  %2637 = vmatprep.subr.mxu0 0.0
  %2638 = vmatpush1.msra.mxu0 %v43
  %2639 = vmatprep.subr.mxu0 0.0
  %2640 = vmatpush1.msra.mxu0 0.0
  %2641 = vmatprep.subr.mxu0 0.0
  %2642 = vmatpush1.msra.mxu0 0.0
  %2643 = vmatprep.subr.mxu0 0.0
  %2644 = vmatpush1.msra.mxu0 0.0
  %2645 = vmatprep.subr.mxu0 0.0
  %2646 = vmatpush1.msra.mxu0 0.0
  %2647 = vmatprep.subr.mxu0 0.0
  %2648 = vmatpush1.msra.mxu0 0.0
  %2649 = vmatprep.subr.mxu0 0.0
  %2650 = vmatpush1.msra.mxu0 0.0
  %2651 = vmatprep.subr.mxu0 0.0
  %2652 = vmatpush1.msra.mxu0 0.0
  %2653 = vmatprep.subr.mxu0 0.0
  %2654 = vmatpush1.msra.mxu0 0.0
  %2655 = vmatprep.subr.mxu0 0.0
  %2656 = vmatpush1.msra.mxu0 0.0
  %2657 = vmatprep.subr.mxu0 0.0
  %2658 = vmatpush1.msra.mxu0 0.0
  %2659 = vmatprep.subr.mxu0 0.0
  %2660 = vmatpush1.msra.mxu0 0.0
  %2661 = vmatprep.subr.mxu0 0.0
  %2662 = vmatpush1.msra.mxu0 0.0
  %2663 = vmatprep.subr.mxu0 0.0
  %2664 = vmatpush1.msra.mxu0 0.0
  %2665 = vmatprep.subr.mxu0 0.0
  %2666 = vmatpush1.msra.mxu0 0.0
  %2667 = vmatprep.subr.mxu0 0.0
  %2668 = vmatpush1.msra.mxu0 0.0
  %2669 = vmatprep.subr.mxu0 0.0
  %2670 = vmatpush1.msra.mxu0 0.0
  %2671 = vmatprep.subr.mxu0 0.0
  %2672 = vmatpush1.msra.mxu0 0.0
  %2673 = vmatprep.subr.mxu0 0.0
  %2674 = vmatpush1.msra.mxu0 0.0
  %2675 = vmatprep.subr.mxu0 0.0
  %2676 = vmatpush1.msra.mxu0 0.0
  %2677 = vmatprep.subr.mxu0 0.0
  %2678 = vmatpush1.msra.mxu0 0.0
  %2679 = vmatprep.subr.mxu0 0.0
  %2680 = vmatpush1.msra.mxu0 0.0
  %2681 = vmatprep.subr.mxu0 0.0
  %2682 = vmatpush1.msra.mxu0 0.0
  %2683 = vmatprep.subr.mxu0 0.0
  %2684 = vmatpush1.msra.mxu0 0.0
  %2685 = vmatprep.subr.mxu0 0.0
  %2686 = vmatpush1.msra.mxu0 0.0
  %2687 = vmatprep.subr.mxu0 0.0
  %2688 = vmatpush1.msra.mxu0 0.0
  %2689 = vmatprep.subr.mxu0 0.0
  %2690 = vmatpush1.msra.mxu0 0.0
  %2691 = vmatprep.subr.mxu0 0.0
  %2692 = vmatpush1.msra.mxu0 0.0
  %2693 = vmatprep.subr.mxu0 0.0
  %2694 = vmatpush1.msra.mxu0 0.0
  %2695 = vmatprep.subr.mxu0 0.0
  %2696 = vmatpush1.msra.mxu0 0.0
  %2697 = vmatprep.subr.mxu0 0.0
  %2698 = vmatpush1.msra.mxu0 0.0
  %2699 = vmatprep.mubr.f32.mxu0 0.0
  %2700 = vmatmul.mubr.f32.gmra.mrb[0].mxu0 %v2633
  %v2701 = vpop.f32.mrb[0].mxu0
  %v2702 = vadd.f32 0.0, %v2701
  %v2703 = vpop.f32.mrb[0].mxu0
  %2704 = vdwg.mxu0
  %2706 = vrot.lane.b32.xlu0 %v2702, 32
  %v2707 = vpop.permute.xlu0 %2706
  %v2709 = vsel %vm82, %v2546, %v2707
  %v2711 = vsel %vm84, %v2709, 0
  %2713 = vmatprep.subr.mxu0 0.0
  %2714 = vmatpush1.msra.mxu0 %v53
  %2715 = vmatprep.subr.mxu0 0.0
  %2716 = vmatpush1.msra.mxu0 %v54
  %2717 = vmatprep.subr.mxu0 0.0
  %2718 = vmatpush1.msra.mxu0 %v55
  %2719 = vmatprep.subr.mxu0 0.0
  %2720 = vmatpush1.msra.mxu0 %v56
  %2721 = vmatprep.subr.mxu0 0.0
  %2722 = vmatpush1.msra.mxu0 %v57
  %2723 = vmatprep.subr.mxu0 0.0
  %2724 = vmatpush1.msra.mxu0 %v58
  %2725 = vmatprep.subr.mxu0 0.0
  %2726 = vmatpush1.msra.mxu0 %v59
  %2727 = vmatprep.subr.mxu0 0.0
  %2728 = vmatpush1.msra.mxu0 %v60
  %2729 = vmatprep.subr.mxu0 0.0
  %2730 = vmatpush1.msra.mxu0 0.0
  %2731 = vmatprep.subr.mxu0 0.0
  %2732 = vmatpush1.msra.mxu0 0.0
  %2733 = vmatprep.subr.mxu0 0.0
  %2734 = vmatpush1.msra.mxu0 0.0
  %2735 = vmatprep.subr.mxu0 0.0
  %2736 = vmatpush1.msra.mxu0 0.0
  %2737 = vmatprep.subr.mxu0 0.0
  %2738 = vmatpush1.msra.mxu0 0.0
  %2739 = vmatprep.subr.mxu0 0.0
  %2740 = vmatpush1.msra.mxu0 0.0
  %2741 = vmatprep.subr.mxu0 0.0
  %2742 = vmatpush1.msra.mxu0 0.0
  %2743 = vmatprep.subr.mxu0 0.0
  %2744 = vmatpush1.msra.mxu0 0.0
  %2745 = vmatprep.subr.mxu0 0.0
  %2746 = vmatpush1.msra.mxu0 0.0
  %2747 = vmatprep.subr.mxu0 0.0
  %2748 = vmatpush1.msra.mxu0 0.0
  %2749 = vmatprep.subr.mxu0 0.0
  %2750 = vmatpush1.msra.mxu0 0.0
  %2751 = vmatprep.subr.mxu0 0.0
  %2752 = vmatpush1.msra.mxu0 0.0
  %2753 = vmatprep.subr.mxu0 0.0
  %2754 = vmatpush1.msra.mxu0 0.0
  %2755 = vmatprep.subr.mxu0 0.0
  %2756 = vmatpush1.msra.mxu0 0.0
  %2757 = vmatprep.subr.mxu0 0.0
  %2758 = vmatpush1.msra.mxu0 0.0
  %2759 = vmatprep.subr.mxu0 0.0
  %2760 = vmatpush1.msra.mxu0 0.0
  %2761 = vmatprep.subr.mxu0 0.0
  %2762 = vmatpush1.msra.mxu0 0.0
  %2763 = vmatprep.subr.mxu0 0.0
  %2764 = vmatpush1.msra.mxu0 0.0
  %2765 = vmatprep.subr.mxu0 0.0
  %2766 = vmatpush1.msra.mxu0 0.0
  %2767 = vmatprep.subr.mxu0 0.0
  %2768 = vmatpush1.msra.mxu0 0.0
  %2769 = vmatprep.subr.mxu0 0.0
  %2770 = vmatpush1.msra.mxu0 0.0
  %2771 = vmatprep.subr.mxu0 0.0
  %2772 = vmatpush1.msra.mxu0 0.0
  %2773 = vmatprep.subr.mxu0 0.0
  %2774 = vmatpush1.msra.mxu0 0.0
  %2775 = vmatprep.subr.mxu0 0.0
  %2776 = vmatpush1.msra.mxu0 0.0
  %2777 = vmatprep.mubr.f32.mxu0 0.0
  %2778 = vmatmul.mubr.f32.gmra.mrb[0].mxu0 %v2711
  %v2779 = vpop.f32.mrb[0].mxu0
  %v2780 = vadd.f32 %v61, %v2779
  %v2781 = vpop.f32.mrb[0].mxu0
  %2782 = vdwg.mxu0
  %v2783 = vmax.f32 %v2780, 0.0
  %v2784 = vsel %vm82, %v2783, %v2534
  %v2786 = vsel %vm84, %v2784, 0
  %2788 = vmatprep.subr.mxu0 0.0
  %2789 = vmatpush1.msra.mxu0 %v62
  %2790 = vmatprep.subr.mxu0 0.0
  %2791 = vmatpush1.msra.mxu0 %v63
  %2792 = vmatprep.subr.mxu0 0.0
  %2793 = vmatpush1.msra.mxu0 %v64
  %2794 = vmatprep.subr.mxu0 0.0
  %2795 = vmatpush1.msra.mxu0 %v65
  %2796 = vmatprep.subr.mxu0 0.0
  %2797 = vmatpush1.msra.mxu0 %v66
  %2798 = vmatprep.subr.mxu0 0.0
  %2799 = vmatpush1.msra.mxu0 %v67
  %2800 = vmatprep.subr.mxu0 0.0
  %2801 = vmatpush1.msra.mxu0 %v68
  %2802 = vmatprep.subr.mxu0 0.0
  %2803 = vmatpush1.msra.mxu0 %v69
  %2804 = vmatprep.subr.mxu0 0.0
  %2805 = vmatpush1.msra.mxu0 0.0
  %2806 = vmatprep.subr.mxu0 0.0
  %2807 = vmatpush1.msra.mxu0 0.0
  %2808 = vmatprep.subr.mxu0 0.0
  %2809 = vmatpush1.msra.mxu0 0.0
  %2810 = vmatprep.subr.mxu0 0.0
  %2811 = vmatpush1.msra.mxu0 0.0
  %2812 = vmatprep.subr.mxu0 0.0
  %2813 = vmatpush1.msra.mxu0 0.0
  %2814 = vmatprep.subr.mxu0 0.0
  %2815 = vmatpush1.msra.mxu0 0.0
  %2816 = vmatprep.subr.mxu0 0.0
  %2817 = vmatpush1.msra.mxu0 0.0
  %2818 = vmatprep.subr.mxu0 0.0
  %2819 = vmatpush1.msra.mxu0 0.0
  %2820 = vmatprep.subr.mxu0 0.0
  %2821 = vmatpush1.msra.mxu0 0.0
  %2822 = vmatprep.subr.mxu0 0.0
  %2823 = vmatpush1.msra.mxu0 0.0
  %2824 = vmatprep.subr.mxu0 0.0
  %2825 = vmatpush1.msra.mxu0 0.0
  %2826 = vmatprep.subr.mxu0 0.0
  %2827 = vmatpush1.msra.mxu0 0.0
  %2828 = vmatprep.subr.mxu0 0.0
  %2829 = vmatpush1.msra.mxu0 0.0
  %2830 = vmatprep.subr.mxu0 0.0
  %2831 = vmatpush1.msra.mxu0 0.0
  %2832 = vmatprep.subr.mxu0 0.0
  %2833 = vmatpush1.msra.mxu0 0.0
  %2834 = vmatprep.subr.mxu0 0.0
  %2835 = vmatpush1.msra.mxu0 0.0
  %2836 = vmatprep.subr.mxu0 0.0
  %2837 = vmatpush1.msra.mxu0 0.0
  %2838 = vmatprep.subr.mxu0 0.0
  %2839 = vmatpush1.msra.mxu0 0.0
  %2840 = vmatprep.subr.mxu0 0.0
  %2841 = vmatpush1.msra.mxu0 0.0
  %2842 = vmatprep.subr.mxu0 0.0
  %2843 = vmatpush1.msra.mxu0 0.0
  %2844 = vmatprep.subr.mxu0 0.0
  %2845 = vmatpush1.msra.mxu0 0.0
  %2846 = vmatprep.subr.mxu0 0.0
  %2847 = vmatpush1.msra.mxu0 0.0
  %2848 = vmatprep.subr.mxu0 0.0
  %2849 = vmatpush1.msra.mxu0 0.0
  %2850 = vmatprep.subr.mxu0 0.0
  %2851 = vmatpush1.msra.mxu0 0.0
  %2852 = vmatprep.mubr.f32.mxu0 0.0
  %2853 = vmatmul.mubr.f32.gmra.mrb[0].mxu0 %v2786
  %v2854 = vpop.f32.mrb[0].mxu0
  %v2855 = vadd.f32 %v70, %v2854
  %v2856 = vpop.f32.mrb[0].mxu0
  %2857 = vdwg.mxu0
  %v2858 = vxor.u32 %v2855, 2147483648
  %v2859 = vmul.f32 %v2858, 1.442695
  %v2860 = vpow.pop %v2859
  %v2861 = vadd.f32 %v2860, 1.0
  %v2862 = vrcp.pop %v2861
  %v2863 = vmul.f32 1.0, %v2862
  %v2864 = vtanh.pop %v2855
  %v2865 = vmul.f32 %v2863, %v2525
  %2867 = vrot.lane.b32.xlu0 %v2864, 64
  %v2868 = vpop.permute.xlu0 %2867
  %v2870 = vmul.f32 %v2863, %v2868
  %2872 = vrot.lane.b32.xlu0 %v2870, 32
  %v2873 = vpop.permute.xlu0 %2872
  %v2875 = vadd.f32 %v2865, %v2873
  %v2876 = vtanh.pop %v2875
  %2878 = vrot.lane.b32.xlu0 %v2876, 64
  %v2879 = vpop.permute.xlu0 %2878
  %v2881 = vmul.f32 %v2863, %v2879
  %2883 = vrot.lane.b32.xlu0 %v2881, 64
  %v2884 = vpop.permute.xlu0 %2883
  %2886 = vst.msk [vmem:[%s12 + $0x7] sm:$0x1] %vm433, %v2884
  %2888 = vrot.lane.b32.xlu0 %v2875, 32
  %v2889 = vpop.permute.xlu0 %2888
  %2891 = vst.msk [vmem:[%s12 + $0x7] sm:$0x1] %vm439, %v2889
  %2892 = vrot.lane.b32.xlu0 %v2631, 96
  %v2893 = vpop.permute.xlu0 %2892
  %2895 = vst.msk [vmem:[%s12 + $0x7] sm:$0x1] %vm444, %v2893
  %v2896 = vld [vmem:[%s12] sm:$0xff]
  %v2897 = vld [vmem:[%s10] sm:$0xff]
  %v2898 = vld [vmem:[%s10 + $0x8] sm:$0xff]
  %v2899 = vld [vmem:[%s10 + $0x10] sm:$0xff]
  %v2900 = vld [vmem:[%s10 + $0x18] sm:$0xff]
  %v2901 = vld [vmem:[%s11] sm:$0x1]
  %v2903 = vlaneseq
  %v2904 = vshrl.u32 %v2903, 7
  %v2905 = vsub.s32 0, %v2904
  %v2906 = vrot.slane %v2901, %v2905
  %2909 = vrot.lane.b32.xlu0 %v2896, 96
  %v2910 = vpop.permute.xlu0 %2909
  %v2911 = vsel %vm82, %v2910, 0
  %2913 = vmatprep.subr.mxu0 0.0
  %2914 = vmatpush1.msra.mxu0 %v2897
  %2915 = vmatprep.subr.mxu0 0.0
  %2916 = vmatpush1.msra.mxu0 %v2898
  %2917 = vmatprep.subr.mxu0 0.0
  %2918 = vmatpush1.msra.mxu0 %v2899
  %2919 = vmatprep.subr.mxu0 0.0
  %2920 = vmatpush1.msra.mxu0 %v2900
  %2921 = vmatprep.subr.mxu0 0.0
  %2922 = vmatpush1.msra.mxu0 0.0
  %2923 = vmatprep.subr.mxu0 0.0
  %2924 = vmatpush1.msra.mxu0 0.0
  %2925 = vmatprep.subr.mxu0 0.0
  %2926 = vmatpush1.msra.mxu0 0.0
  %2927 = vmatprep.subr.mxu0 0.0
  %2928 = vmatpush1.msra.mxu0 0.0
  %2929 = vmatprep.subr.mxu0 0.0
  %2930 = vmatpush1.msra.mxu0 0.0
  %2931 = vmatprep.subr.mxu0 0.0
  %2932 = vmatpush1.msra.mxu0 0.0
  %2933 = vmatprep.subr.mxu0 0.0
  %2934 = vmatpush1.msra.mxu0 0.0
  %2935 = vmatprep.subr.mxu0 0.0
  %2936 = vmatpush1.msra.mxu0 0.0
  %2937 = vmatprep.subr.mxu0 0.0
  %2938 = vmatpush1.msra.mxu0 0.0
  %2939 = vmatprep.subr.mxu0 0.0
  %2940 = vmatpush1.msra.mxu0 0.0
  %2941 = vmatprep.subr.mxu0 0.0
  %2942 = vmatpush1.msra.mxu0 0.0
  %2943 = vmatprep.subr.mxu0 0.0
  %2944 = vmatpush1.msra.mxu0 0.0
  %2945 = vmatprep.subr.mxu0 0.0
  %2946 = vmatpush1.msra.mxu0 0.0
  %2947 = vmatprep.subr.mxu0 0.0
  %2948 = vmatpush1.msra.mxu0 0.0
  %2949 = vmatprep.subr.mxu0 0.0
  %2950 = vmatpush1.msra.mxu0 0.0
  %2951 = vmatprep.subr.mxu0 0.0
  %2952 = vmatpush1.msra.mxu0 0.0
  %2953 = vmatprep.subr.mxu0 0.0
  %2954 = vmatpush1.msra.mxu0 0.0
  %2955 = vmatprep.subr.mxu0 0.0
  %2956 = vmatpush1.msra.mxu0 0.0
  %2957 = vmatprep.subr.mxu0 0.0
  %2958 = vmatpush1.msra.mxu0 0.0
  %2959 = vmatprep.subr.mxu0 0.0
  %2960 = vmatpush1.msra.mxu0 0.0
  %2961 = vmatprep.subr.mxu0 0.0
  %2962 = vmatpush1.msra.mxu0 0.0
  %2963 = vmatprep.subr.mxu0 0.0
  %2964 = vmatpush1.msra.mxu0 0.0
  %2965 = vmatprep.subr.mxu0 0.0
  %2966 = vmatpush1.msra.mxu0 0.0
  %2967 = vmatprep.subr.mxu0 0.0
  %2968 = vmatpush1.msra.mxu0 0.0
  %2969 = vmatprep.subr.mxu0 0.0
  %2970 = vmatpush1.msra.mxu0 0.0
  %2971 = vmatprep.subr.mxu0 0.0
  %2972 = vmatpush1.msra.mxu0 0.0
  %2973 = vmatprep.subr.mxu0 0.0
  %2974 = vmatpush1.msra.mxu0 0.0
  %2975 = vmatprep.subr.mxu0 0.0
  %2976 = vmatpush1.msra.mxu0 0.0
  %2977 = vmatprep.mubr.f32.mxu0 0.0
  %2978 = vmatmul.mubr.f32.gmra.mrb[0].mxu0 %v2911
  %v2979 = vpop.f32.mrb[0].mxu0
  %v2980 = vadd.f32 %v2906, %v2979
  %v2981 = vpop.f32.mrb[0].mxu0
  %2982 = vdwg.mxu0
  %v2983 = vsel %vm82, %v2980, -inf
  %2984 = vmax.xlane.f32.xlu0 %v2983
  %v2985 = vpop.xlane.xlu0 %2984
  %v2986 = vsub.f32 %v2980, %v2985
  %v2987 = vmul.f32 %v2986, 1.442695
  %v2988 = vpow.pop %v2987
  %v2989 = vsel %vm82, %v2988, 0.0
  %2990 = vadd.xlane.f32.xlu0 %v2989
  %v2991 = vpop.xlane.xlu0 %2990
  %v2992 = vlog2.pop %v2991
  %v2993 = vmul.f32 %v2992, 0.6931472
  %v2994 = vsub.f32 %v2986, %v2993
  %2995 = vst.msk [vmem:[%s12] sm:$0xff] %vm82, %v2994
  // Predicated region
  $region50: #{attn_decoder_decode.1} parent=0 // pred_check
    _
  $region51: #{attn_decoder_decode.1} parent=0 // pred_check_branch
    %2997 = sbr.rel (0) target = $region53
  $region52: #{attn_decoder_decode.1} parent=0 // pred_region
    _
  $region53: #{attn_decoder_decode.1} parent=0 // pred_fallthru
    _
  // Predicated region
  $region54: #{attn_decoder_decode.1} parent=0 // pred_check
    _
  $region55: #{attn_decoder_decode.1} parent=0 // pred_check_branch
    %2999 = sbr.rel (0) target = $region57
  $region56: #{attn_decoder_decode.1} parent=0 // pred_region
    _
  $region57: #{attn_decoder_decode.1} parent=0 // pred_fallthru
    _

</llo_original>
